<compile_context>
chip_gen: v6e
topology: v6e:2x2x1
jax: 0.10.0
libtpu: 0.0.40
codegen_flags: <defaults>
</compile_context>

<pallas_src>
import math

import jax
import jax.numpy as jnp
from jax import lax
from jax.experimental import pallas as pl
from jax.experimental.pallas import tpu as pltpu

# ---------------- configuration (small, consistent with the module) ----------
B = 2            # batch
S = 128          # sequence length (raised so BS=256 fills the MXU M dimension)
D = 128          # model dim  (num_heads = D // 64 per the module default)
H = D // 64      # number of heads = 2
DH = D // H      # head dim = 64
HID = 4 * D      # Mlp hidden features (default 4*dim)
LN_EPS = 1e-5    # torch.nn.LayerNorm default
BS = B * S       # 256 rows folded into every matmul M dimension
ATTN_SCALE = 1.0 / math.sqrt(DH)   # 1/8, folded into Wq / b_q at prep time


def _layernorm(x, w, b):
    """LayerNorm over last axis, matching torch.nn.LayerNorm (biased var, eps=1e-5)."""
    mu = jnp.mean(x, axis=-1, keepdims=True)
    xc = x - mu
    var = jnp.mean(xc * xc, axis=-1, keepdims=True)
    inv = lax.rsqrt(var + LN_EPS)
    return xc * (inv * w) + b


def _gelu_exact(x):
    """F.gelu default (exact, erf-based). (tanh approx would be faster on v5e.)"""
    return 0.5 * x * (1.0 + lax.erf(x * (1.0 / math.sqrt(2.0))))


def block_kernel(x_ref,
                 ln1w_ref, ln1b_ref,
                 wqkv_ref, bqkv_ref,
                 wout_hbm, bout_ref,
                 ln2w_ref, ln2b_ref,
                 w1_hbm, b1_ref,
                 w2_hbm, b2_ref,
                 hidden_out_ref, resid_out_ref,
                 wout_vmem, w1_vmem, w2_vmem, dma_sems):
    # ---- kick off the out-proj / MLP weight DMAs first: they stream in while
    #      LN1 + QKV projection + attention compute (only Wqkv is prologue). ----
    wout_cp = pltpu.make_async_copy(wout_hbm, wout_vmem, dma_sems.at[0])
    w1_cp = pltpu.make_async_copy(w1_hbm, w1_vmem, dma_sems.at[1])
    w2_cp = pltpu.make_async_copy(w2_hbm, w2_vmem, dma_sems.at[2])
    wout_cp.start()
    w1_cp.start()
    w2_cp.start()

    # Fold batch into the M dimension for all dense matmuls.
    x = x_ref[...].astype(jnp.float32).reshape(BS, D)        # (BS, D)

    # dropout1 / drop_path1 are identity in eval -> residual = hidden_states
    residual = x

    # ---- LayerNorm 1 ----
    h = _layernorm(residual, ln1w_ref[...], ln1b_ref[...])   # (BS, D) f32

    # ---- MHA: qkv projection (bf16 MXU inputs, f32 accumulation).
    #      The 1/sqrt(DH) scale is already folded into the q columns. ----
    qkv = jnp.dot(h.astype(jnp.bfloat16), wqkv_ref[...],
                  preferred_element_type=jnp.float32)
    qkv = qkv + bqkv_ref[...]                                 # (BS, 3D) f32

    # ---- MHA: scaled dot-product attention (non-causal, no mask) ----
    ctx_heads = []
    for hd in range(H):                                       # H=2, static unroll
        q_sl = slice(hd * DH, (hd + 1) * DH)
        k_sl = slice(D + hd * DH, D + (hd + 1) * DH)
        v_sl = slice(2 * D + hd * DH, 2 * D + (hd + 1) * DH)
        qh = qkv[:, q_sl].reshape(B, S, DH).astype(jnp.bfloat16)
        kh = qkv[:, k_sl].reshape(B, S, DH).astype(jnp.bfloat16)
        vh = qkv[:, v_sl].reshape(B, S, DH).astype(jnp.bfloat16)

        # batched over B; contraction on DH directly (no explicit k transpose)
        scores = jnp.einsum('bqd,bkd->bqk', qh, kh,
                            preferred_element_type=jnp.float32)      # (B,S,S)
        scores = scores - jnp.max(scores, axis=-1, keepdims=True)
        p = jnp.exp(scores)
        attn = p * pl.reciprocal(jnp.sum(p, axis=-1, keepdims=True),
                                 approx=True)
        ctx = jnp.einsum('bqk,bkd->bqd', attn.astype(jnp.bfloat16), vh,
                         preferred_element_type=jnp.float32)         # (B,S,DH)
        ctx_heads.append(ctx.reshape(BS, DH))

    # Pack both head contexts into one lane-dense (BS, D) tile and do a single
    # K=128 dot against the full Wout (one MXU push instead of two K=64 dots).
    ctx_all = jnp.concatenate(ctx_heads, axis=-1)             # (BS, D)

    wout_cp.wait()
    mha = jnp.dot(ctx_all.astype(jnp.bfloat16), wout_vmem[...],
                  preferred_element_type=jnp.float32) + bout_ref[...]

    # ---- residual add + LayerNorm 2 ----
    residual2 = mha + residual                                # (BS, D)
    h2 = _layernorm(residual2, ln2w_ref[...], ln2b_ref[...])

    # ---- Mlp: fc1 -> gelu -> fc2 (weights streamed in behind attention) ----
    w1_cp.wait()
    y = jnp.dot(h2.astype(jnp.bfloat16), w1_vmem[...],
                preferred_element_type=jnp.float32) + b1_ref[...]
    y = _gelu_exact(y)
    w2_cp.wait()
    y = jnp.dot(y.astype(jnp.bfloat16), w2_vmem[...],
                preferred_element_type=jnp.float32) + b2_ref[...]

    hidden_out_ref[...] = y.reshape(B, S, D).astype(hidden_out_ref.dtype)
    resid_out_ref[...] = residual2.reshape(B, S, D).astype(resid_out_ref.dtype)


def _full_spec(shape):
    # whole (untiled) array, same block for the single grid step
    n = len(shape)
    return pl.BlockSpec(shape, lambda i, _n=n: (0,) * _n)


@jax.jit
def block_forward(x, kparams):
    (ln1w, ln1b, wqkv, bqkv, wout, bout, ln2w, ln2b, w1, b1, w2, b2) = kparams

    act_spec = pl.BlockSpec((B, S, D), lambda i: (0, 0, 0))
    hbm_spec = pl.BlockSpec(memory_space=pl.ANY)   # manual DMA inside the kernel

    in_specs = [
        act_spec,                        # x
        _full_spec((1, D)),              # ln1 weight
        _full_spec((1, D)),              # ln1 bias
        _full_spec((D, 3 * D)),          # Wqkv (in, out)  bf16 (prologue DMA)
        _full_spec((1, 3 * D)),          # b_qkv
        hbm_spec,                        # Wout  bf16 (manual DMA)
        _full_spec((1, D)),              # b_out
        _full_spec((1, D)),              # ln2 weight
        _full_spec((1, D)),              # ln2 bias
        hbm_spec,                        # fc1 W  bf16 (manual DMA)
        _full_spec((1, HID)),            # fc1 b
        hbm_spec,                        # fc2 W  bf16 (manual DMA)
        _full_spec((1, D)),              # fc2 b
    ]

    out_shape = (jax.ShapeDtypeStruct((B, S, D), jnp.float32),
                 jax.ShapeDtypeStruct((B, S, D), jnp.float32))

    return pl.pallas_call(
        block_kernel,
        out_shape=out_shape,
        grid_spec=pltpu.PrefetchScalarGridSpec(
            num_scalar_prefetch=0,
            grid=(1,),                               # single step; batch folded into M
            in_specs=in_specs,
            out_specs=[act_spec, act_spec],
            scratch_shapes=[
                pltpu.VMEM((D, D), jnp.bfloat16),        # Wout   (single-buffered)
                pltpu.VMEM((D, HID), jnp.bfloat16),      # fc1 W  (single-buffered)
                pltpu.VMEM((HID, D), jnp.bfloat16),      # fc2 W  (single-buffered)
                pltpu.SemaphoreType.DMA((3,)),
            ]),
        # grid=(1,): semantics choice is a no-op; kept single-core on purpose —
        # at this size duplicating weight DMA across v7x TCs costs more than
        # the saved compute.  For BS >= 2*256 add a leading "parallel" row axis.
        compiler_params=pltpu.CompilerParams(
            dimension_semantics=("arbitrary",)),
    )(x, ln1w, ln1b, wqkv, bqkv, wout, bout, ln2w, ln2b, w1, b1, w2, b2)


# ---------------- pure-JAX reference (for correctness check) -----------------
def block_reference(x, params):
    (ln1w, ln1b, wqkv, bqkv, wout, bout, ln2w, ln2b, w1, b1, w2, b2) = params

    def ln(z, w, b):
        mu = jnp.mean(z, axis=-1, keepdims=True)
        var = jnp.mean((z - mu) ** 2, axis=-1, keepdims=True)
        return (z - mu) / jnp.sqrt(var + LN_EPS) * w[0] + b[0]

    residual = x
    h = ln(residual, ln1w, ln1b)
    qkv = h @ wqkv + bqkv[0]
    qkv = qkv.reshape(B, S, 3, H, DH)
    q, k, v = qkv[:, :, 0], qkv[:, :, 1], qkv[:, :, 2]
    scores = jnp.einsum('bthd,bshd->bhts', q, k * ATTN_SCALE)
    attn = jax.nn.softmax(scores, axis=-1)
    ctx = jnp.einsum('bhts,bshd->bthd', attn, v).reshape(B, S, D)
    mha_out = ctx @ wout + bout[0]
    residual2 = mha_out + residual
    h2 = ln(residual2, ln2w, ln2b)
    y = h2 @ w1 + b1[0]
    y = 0.5 * y * (1.0 + lax.erf(y / math.sqrt(2.0)))
    y = y @ w2 + b2[0]
    return y, residual2


# ---------------- deterministic parameter init --------------------------------
def init_params(key):
    ks = jax.random.split(key, 8)
    s = 0.02
    ln1w = jnp.ones((1, D), jnp.float32)
    ln1b = jnp.zeros((1, D), jnp.float32)
    wqkv = s * jax.random.normal(ks[0], (D, 3 * D), jnp.float32)
    bqkv = s * jax.random.normal(ks[1], (1, 3 * D), jnp.float32)
    wout = s * jax.random.normal(ks[2], (D, D), jnp.float32)
    bout = s * jax.random.normal(ks[3], (1, D), jnp.float32)
    ln2w = jnp.ones((1, D), jnp.float32)
    ln2b = jnp.zeros((1, D), jnp.float32)
    w1 = s * jax.random.normal(ks[4], (D, HID), jnp.float32)
    b1 = s * jax.random.normal(ks[5], (1, HID), jnp.float32)
    w2 = s * jax.random.normal(ks[6], (HID, D), jnp.float32)
    b2 = s * jax.random.normal(ks[7], (1, D), jnp.float32)
    return (ln1w, ln1b, wqkv, bqkv, wout, bout, ln2w, ln2b, w1, b1, w2, b2)


def to_kernel_params(p):
    """bf16 weights for the MXU; 1/sqrt(DH)=1/8 folded into Wq / b_q (exact pow2)."""
    (ln1w, ln1b, wqkv, bqkv, wout, bout, ln2w, ln2b, w1, b1, w2, b2) = p
    wqkv_s = wqkv.at[:, 0:D].multiply(ATTN_SCALE)
    bqkv_s = bqkv.at[:, 0:D].multiply(ATTN_SCALE)
    return (ln1w, ln1b,
            wqkv_s.astype(jnp.bfloat16), bqkv_s,
            wout.astype(jnp.bfloat16), bout,
            ln2w, ln2b,
            w1.astype(jnp.bfloat16), b1,
            w2.astype(jnp.bfloat16), b2)


def to_reference_params(p):
    """Same bf16-rounded weights (cast back to f32) so the check isolates kernel numerics."""
    (ln1w, ln1b, wqkv, bqkv, wout, bout, ln2w, ln2b, w1, b1, w2, b2) = p
    r = lambda w: w.astype(jnp.bfloat16).astype(jnp.float32)
    return (ln1w, ln1b, r(wqkv), bqkv, r(wout), bout, ln2w, ln2b,
            r(w1), b1, r(w2), b2)


if __name__ == "__main__":
    key = jax.random.PRNGKey(0)
    kx, kp = jax.random.split(key)
    x = jax.random.normal(kx, (B, S, D), jnp.float32)
    params = init_params(kp)

    hidden, residual = block_forward(x, to_kernel_params(params))
    jax.block_until_ready((hidden, residual))

    h_ref, r_ref = block_reference(x, to_reference_params(params))
    assert hidden.shape == (B, S, D) and residual.shape == (B, S, D)
    assert jnp.allclose(hidden, h_ref, atol=2e-2, rtol=2e-2)
    assert jnp.allclose(residual, r_ref, atol=2e-2, rtol=2e-2)

    print("KERNEL_OK")
</pallas_src>

<mosaic_0001>
module attributes {stable_mosaic.version = 11 : i64} {
  func.func @block_kernel(%arg0: i32, %arg1: memref<2x128x128xf32, #tpu.memory_space<vmem>>, %arg2: memref<1x128xf32, #tpu.memory_space<vmem>>, %arg3: memref<1x128xf32, #tpu.memory_space<vmem>>, %arg4: memref<128x384xbf16, #tpu.memory_space<vmem>>, %arg5: memref<1x384xf32, #tpu.memory_space<vmem>>, %arg6: memref<128x128xbf16, #tpu.memory_space<any>>, %arg7: memref<1x128xf32, #tpu.memory_space<vmem>>, %arg8: memref<1x128xf32, #tpu.memory_space<vmem>>, %arg9: memref<1x128xf32, #tpu.memory_space<vmem>>, %arg10: memref<128x512xbf16, #tpu.memory_space<any>>, %arg11: memref<1x512xf32, #tpu.memory_space<vmem>>, %arg12: memref<512x128xbf16, #tpu.memory_space<any>>, %arg13: memref<1x128xf32, #tpu.memory_space<vmem>>, %arg14: memref<2x128x128xf32, #tpu.memory_space<vmem>>, %arg15: memref<2x128x128xf32, #tpu.memory_space<vmem>>, %arg16: memref<128x128xbf16, #tpu.memory_space<vmem>>, %arg17: memref<128x512xbf16, #tpu.memory_space<vmem>>, %arg18: memref<512x128xbf16, #tpu.memory_space<vmem>>, %arg19: memref<3x!tpu.dma_semaphore, #tpu.memory_space<semaphore_mem>>) attributes {dimension_semantics = [#tpu.dimension_semantics<arbitrary>], iteration_bounds = array<i64: 1>, scalar_prefetch = 0 : i64, scratch_operands = 4 : i64, tpu.core_type = #tpu.core_type<tc>, window_params = [{pipeline_mode = #tpu.pipeline_mode<synchronous>, transform_indices = @transform_0, window_bounds = array<i64: 2, 128, 128>}, {pipeline_mode = #tpu.pipeline_mode<synchronous>, transform_indices = @transform_1, window_bounds = array<i64: 1, 128>}, {pipeline_mode = #tpu.pipeline_mode<synchronous>, transform_indices = @transform_2, window_bounds = array<i64: 1, 128>}, {pipeline_mode = #tpu.pipeline_mode<synchronous>, transform_indices = @transform_3, window_bounds = array<i64: 128, 384>}, {pipeline_mode = #tpu.pipeline_mode<synchronous>, transform_indices = @transform_4, window_bounds = array<i64: 1, 384>}, {}, {pipeline_mode = #tpu.pipeline_mode<synchronous>, transform_indices = @transform_6, window_bounds = array<i64: 1, 128>}, {pipeline_mode = #tpu.pipeline_mode<synchronous>, transform_indices = @transform_7, window_bounds = array<i64: 1, 128>}, {pipeline_mode = #tpu.pipeline_mode<synchronous>, transform_indices = @transform_8, window_bounds = array<i64: 1, 128>}, {}, {pipeline_mode = #tpu.pipeline_mode<synchronous>, transform_indices = @transform_10, window_bounds = array<i64: 1, 512>}, {}, {pipeline_mode = #tpu.pipeline_mode<synchronous>, transform_indices = @transform_12, window_bounds = array<i64: 1, 128>}, {pipeline_mode = #tpu.pipeline_mode<synchronous>, transform_indices = @transform_13, window_bounds = array<i64: 2, 128, 128>}, {pipeline_mode = #tpu.pipeline_mode<synchronous>, transform_indices = @transform_14, window_bounds = array<i64: 2, 128, 128>}]} {
    %c0_i32 = arith.constant 0 : i32
    %0 = tpu.memref_slice %arg19[%c0_i32] : memref<3x!tpu.dma_semaphore, #tpu.memory_space<semaphore_mem>> -> memref<1x!tpu.dma_semaphore, #tpu.memory_space<semaphore_mem>>
    %1 = tpu.memref_squeeze %0 : memref<1x!tpu.dma_semaphore, #tpu.memory_space<semaphore_mem>> -> memref<!tpu.dma_semaphore, #tpu.memory_space<semaphore_mem>>
    tpu.enqueue_dma source(%arg6 : memref<128x128xbf16, #tpu.memory_space<any>>) target(%arg16 : memref<128x128xbf16, #tpu.memory_space<vmem>>) target_semaphore(%1 : memref<!tpu.dma_semaphore, #tpu.memory_space<semaphore_mem>>)
    %c1_i32 = arith.constant 1 : i32
    %2 = tpu.memref_slice %arg19[%c1_i32] : memref<3x!tpu.dma_semaphore, #tpu.memory_space<semaphore_mem>> -> memref<1x!tpu.dma_semaphore, #tpu.memory_space<semaphore_mem>>
    %3 = tpu.memref_squeeze %2 : memref<1x!tpu.dma_semaphore, #tpu.memory_space<semaphore_mem>> -> memref<!tpu.dma_semaphore, #tpu.memory_space<semaphore_mem>>
    tpu.enqueue_dma source(%arg10 : memref<128x512xbf16, #tpu.memory_space<any>>) target(%arg17 : memref<128x512xbf16, #tpu.memory_space<vmem>>) target_semaphore(%3 : memref<!tpu.dma_semaphore, #tpu.memory_space<semaphore_mem>>)
    %c2_i32 = arith.constant 2 : i32
    %4 = tpu.memref_slice %arg19[%c2_i32] : memref<3x!tpu.dma_semaphore, #tpu.memory_space<semaphore_mem>> -> memref<1x!tpu.dma_semaphore, #tpu.memory_space<semaphore_mem>>
    %5 = tpu.memref_squeeze %4 : memref<1x!tpu.dma_semaphore, #tpu.memory_space<semaphore_mem>> -> memref<!tpu.dma_semaphore, #tpu.memory_space<semaphore_mem>>
    tpu.enqueue_dma source(%arg12 : memref<512x128xbf16, #tpu.memory_space<any>>) target(%arg18 : memref<512x128xbf16, #tpu.memory_space<vmem>>) target_semaphore(%5 : memref<!tpu.dma_semaphore, #tpu.memory_space<semaphore_mem>>)
    %c0 = arith.constant 0 : index
    %c0_0 = arith.constant 0 : index
    %c0_1 = arith.constant 0 : index
    %6 = vector.load %arg1[%c0, %c0_0, %c0_1] : memref<2x128x128xf32, #tpu.memory_space<vmem>>, vector<2x128x128xf32>
    %7 = vector.shape_cast %6 : vector<2x128x128xf32> to vector<256x128xf32>
    %c0_2 = arith.constant 0 : index
    %c0_3 = arith.constant 0 : index
    %8 = vector.load %arg2[%c0_2, %c0_3] : memref<1x128xf32, #tpu.memory_space<vmem>>, vector<1x128xf32>
    %c0_4 = arith.constant 0 : index
    %c0_5 = arith.constant 0 : index
    %9 = vector.load %arg3[%c0_4, %c0_5] : memref<1x128xf32, #tpu.memory_space<vmem>>, vector<1x128xf32>
    %cst = arith.constant dense<0.000000e+00> : vector<256xf32>
    %10 = vector.multi_reduction <add>, %7, %cst [1] : vector<256x128xf32> to vector<256xf32>
    %11 = vector.shape_cast %10 : vector<256xf32> to vector<256x1xf32>
    %cst_6 = arith.constant 1.280000e+02 : f32
    %12 = vector.broadcast %cst_6 : f32 to vector<256x1xf32>
    %13 = arith.divf %11, %12 : vector<256x1xf32>
    %14 = vector.broadcast %13 : vector<256x1xf32> to vector<256x128xf32>
    %15 = arith.subf %7, %14 : vector<256x128xf32>
    %16 = arith.mulf %15, %15 : vector<256x128xf32>
    %cst_7 = arith.constant dense<0.000000e+00> : vector<256xf32>
    %17 = vector.multi_reduction <add>, %16, %cst_7 [1] : vector<256x128xf32> to vector<256xf32>
    %18 = vector.shape_cast %17 : vector<256xf32> to vector<256x1xf32>
    %cst_8 = arith.constant 1.280000e+02 : f32
    %19 = vector.broadcast %cst_8 : f32 to vector<256x1xf32>
    %20 = arith.divf %18, %19 : vector<256x1xf32>
    %cst_9 = arith.constant 9.99999974E-6 : f32
    %21 = vector.broadcast %cst_9 : f32 to vector<256x1xf32>
    %22 = arith.addf %20, %21 : vector<256x1xf32>
    %23 = math.rsqrt %22 : vector<256x1xf32>
    %24 = vector.broadcast %23 : vector<256x1xf32> to vector<256x128xf32>
    %25 = vector.broadcast %8 : vector<1x128xf32> to vector<256x128xf32>
    %26 = arith.mulf %24, %25 : vector<256x128xf32>
    %27 = arith.mulf %15, %26 : vector<256x128xf32>
    %28 = vector.broadcast %9 : vector<1x128xf32> to vector<256x128xf32>
    %29 = arith.addf %27, %28 : vector<256x128xf32>
    %30 = arith.truncf %29 : vector<256x128xf32> to vector<256x128xbf16>
    %c0_10 = arith.constant 0 : index
    %c0_11 = arith.constant 0 : index
    %31 = vector.load %arg4[%c0_10, %c0_11] : memref<128x384xbf16, #tpu.memory_space<vmem>>, vector<128x384xbf16>
    %cst_12 = arith.constant dense<0.000000e+00> : vector<256x384xf32>
    %32 = tpu.matmul %30, %31, %cst_12 {dimension_numbers = #tpu.dot_dimension_numbers<[1], [0], [0], [1], [0, 0, 1, 1], [], []>} : vector<256x128xbf16>, vector<128x384xbf16>, vector<256x384xf32> -> vector<256x384xf32>
    %c0_13 = arith.constant 0 : index
    %c0_14 = arith.constant 0 : index
    %33 = vector.load %arg5[%c0_13, %c0_14] : memref<1x384xf32, #tpu.memory_space<vmem>>, vector<1x384xf32>
    %34 = vector.broadcast %33 : vector<1x384xf32> to vector<256x384xf32>
    %35 = arith.addf %32, %34 : vector<256x384xf32>
    %36 = vector.extract_strided_slice %35 {offsets = [0, 0], sizes = [256, 64], strides = [1, 1]} : vector<256x384xf32> to vector<256x64xf32>
    %37 = vector.shape_cast %36 : vector<256x64xf32> to vector<2x128x64xf32>
    %38 = arith.truncf %37 : vector<2x128x64xf32> to vector<2x128x64xbf16>
    %39 = vector.extract_strided_slice %35 {offsets = [0, 128], sizes = [256, 64], strides = [1, 1]} : vector<256x384xf32> to vector<256x64xf32>
    %40 = vector.shape_cast %39 : vector<256x64xf32> to vector<2x128x64xf32>
    %41 = arith.truncf %40 : vector<2x128x64xf32> to vector<2x128x64xbf16>
    %42 = vector.extract_strided_slice %35 {offsets = [0, 256], sizes = [256, 64], strides = [1, 1]} : vector<256x384xf32> to vector<256x64xf32>
    %43 = vector.shape_cast %42 : vector<256x64xf32> to vector<2x128x64xf32>
    %44 = arith.truncf %43 : vector<2x128x64xf32> to vector<2x128x64xbf16>
    "tpu.trace_start"() <{level = 10 : i32, message = "bqd,bkd->bqk"}> : () -> ()
    %cst_15 = arith.constant dense<0.000000e+00> : vector<2x128x128xf32>
    %45 = tpu.matmul %38, %41, %cst_15 {dimension_numbers = #tpu.dot_dimension_numbers<[2], [2], [1], [1], [0, 0, 0, 1, 1, 1], [0], [0]>} : vector<2x128x64xbf16>, vector<2x128x64xbf16>, vector<2x128x128xf32> -> vector<2x128x128xf32>
    "tpu.trace_stop"() : () -> ()
    %cst_16 = arith.constant dense<0xFF800000> : vector<2x128xf32>
    %46 = vector.multi_reduction <maximumf>, %45, %cst_16 [2] : vector<2x128x128xf32> to vector<2x128xf32>
    %47 = vector.shape_cast %46 : vector<2x128xf32> to vector<2x128x1xf32>
    %48 = vector.broadcast %47 : vector<2x128x1xf32> to vector<2x128x128xf32>
    %49 = arith.subf %45, %48 : vector<2x128x128xf32>
    %50 = math.exp %49 : vector<2x128x128xf32>
    %cst_17 = arith.constant dense<0.000000e+00> : vector<2x128xf32>
    %51 = vector.multi_reduction <add>, %50, %cst_17 [2] : vector<2x128x128xf32> to vector<2x128xf32>
    %52 = vector.shape_cast %51 : vector<2x128xf32> to vector<2x128x1xf32>
    %53 = tpu.reciprocal %52 {approx = true} : vector<2x128x1xf32> -> vector<2x128x1xf32>
    %54 = vector.broadcast %53 : vector<2x128x1xf32> to vector<2x128x128xf32>
    %55 = arith.mulf %50, %54 : vector<2x128x128xf32>
    %56 = arith.truncf %55 : vector<2x128x128xf32> to vector<2x128x128xbf16>
    "tpu.trace_start"() <{level = 10 : i32, message = "bqk,bkd->bqd"}> : () -> ()
    %cst_18 = arith.constant dense<0.000000e+00> : vector<2x128x64xf32>
    %57 = tpu.matmul %56, %44, %cst_18 {dimension_numbers = #tpu.dot_dimension_numbers<[2], [1], [1], [2], [0, 0, 0, 1, 1, 2], [0], [0]>} : vector<2x128x128xbf16>, vector<2x128x64xbf16>, vector<2x128x64xf32> -> vector<2x128x64xf32>
    "tpu.trace_stop"() : () -> ()
    %58 = vector.shape_cast %57 : vector<2x128x64xf32> to vector<256x64xf32>
    %59 = vector.extract_strided_slice %35 {offsets = [0, 64], sizes = [256, 64], strides = [1, 1]} : vector<256x384xf32> to vector<256x64xf32>
    %60 = vector.shape_cast %59 : vector<256x64xf32> to vector<2x128x64xf32>
    %61 = arith.truncf %60 : vector<2x128x64xf32> to vector<2x128x64xbf16>
    %62 = vector.extract_strided_slice %35 {offsets = [0, 192], sizes = [256, 64], strides = [1, 1]} : vector<256x384xf32> to vector<256x64xf32>
    %63 = vector.shape_cast %62 : vector<256x64xf32> to vector<2x128x64xf32>
    %64 = arith.truncf %63 : vector<2x128x64xf32> to vector<2x128x64xbf16>
    %65 = vector.extract_strided_slice %35 {offsets = [0, 320], sizes = [256, 64], strides = [1, 1]} : vector<256x384xf32> to vector<256x64xf32>
    %66 = vector.shape_cast %65 : vector<256x64xf32> to vector<2x128x64xf32>
    %67 = arith.truncf %66 : vector<2x128x64xf32> to vector<2x128x64xbf16>
    "tpu.trace_start"() <{level = 10 : i32, message = "bqd,bkd->bqk"}> : () -> ()
    %cst_19 = arith.constant dense<0.000000e+00> : vector<2x128x128xf32>
    %68 = tpu.matmul %61, %64, %cst_19 {dimension_numbers = #tpu.dot_dimension_numbers<[2], [2], [1], [1], [0, 0, 0, 1, 1, 1], [0], [0]>} : vector<2x128x64xbf16>, vector<2x128x64xbf16>, vector<2x128x128xf32> -> vector<2x128x128xf32>
    "tpu.trace_stop"() : () -> ()
    %cst_20 = arith.constant dense<0xFF800000> : vector<2x128xf32>
    %69 = vector.multi_reduction <maximumf>, %68, %cst_20 [2] : vector<2x128x128xf32> to vector<2x128xf32>
    %70 = vector.shape_cast %69 : vector<2x128xf32> to vector<2x128x1xf32>
    %71 = vector.broadcast %70 : vector<2x128x1xf32> to vector<2x128x128xf32>
    %72 = arith.subf %68, %71 : vector<2x128x128xf32>
    %73 = math.exp %72 : vector<2x128x128xf32>
    %cst_21 = arith.constant dense<0.000000e+00> : vector<2x128xf32>
    %74 = vector.multi_reduction <add>, %73, %cst_21 [2] : vector<2x128x128xf32> to vector<2x128xf32>
    %75 = vector.shape_cast %74 : vector<2x128xf32> to vector<2x128x1xf32>
    %76 = tpu.reciprocal %75 {approx = true} : vector<2x128x1xf32> -> vector<2x128x1xf32>
    %77 = vector.broadcast %76 : vector<2x128x1xf32> to vector<2x128x128xf32>
    %78 = arith.mulf %73, %77 : vector<2x128x128xf32>
    %79 = arith.truncf %78 : vector<2x128x128xf32> to vector<2x128x128xbf16>
    "tpu.trace_start"() <{level = 10 : i32, message = "bqk,bkd->bqd"}> : () -> ()
    %cst_22 = arith.constant dense<0.000000e+00> : vector<2x128x64xf32>
    %80 = tpu.matmul %79, %67, %cst_22 {dimension_numbers = #tpu.dot_dimension_numbers<[2], [1], [1], [2], [0, 0, 0, 1, 1, 2], [0], [0]>} : vector<2x128x128xbf16>, vector<2x128x64xbf16>, vector<2x128x64xf32> -> vector<2x128x64xf32>
    "tpu.trace_stop"() : () -> ()
    %81 = vector.shape_cast %80 : vector<2x128x64xf32> to vector<256x64xf32>
    %82 = tpu.concatenate %58, %81 in 1 : vector<256x64xf32>, vector<256x64xf32> -> vector<256x128xf32>
    %c0_i32_23 = arith.constant 0 : i32
    %83 = tpu.memref_slice %arg19[%c0_i32_23] : memref<3x!tpu.dma_semaphore, #tpu.memory_space<semaphore_mem>> -> memref<1x!tpu.dma_semaphore, #tpu.memory_space<semaphore_mem>>
    %84 = tpu.memref_squeeze %83 : memref<1x!tpu.dma_semaphore, #tpu.memory_space<semaphore_mem>> -> memref<!tpu.dma_semaphore, #tpu.memory_space<semaphore_mem>>
    tpu.wait_dma2 semaphore(%84 : memref<!tpu.dma_semaphore, #tpu.memory_space<semaphore_mem>>) src(%arg6 : memref<128x128xbf16, #tpu.memory_space<any>>) dst(%arg16 : memref<128x128xbf16, #tpu.memory_space<vmem>>)
    %85 = arith.truncf %82 : vector<256x128xf32> to vector<256x128xbf16>
    %c0_24 = arith.constant 0 : index
    %c0_25 = arith.constant 0 : index
    %86 = vector.load %arg16[%c0_24, %c0_25] : memref<128x128xbf16, #tpu.memory_space<vmem>>, vector<128x128xbf16>
    %cst_26 = arith.constant dense<0.000000e+00> : vector<256x128xf32>
    %87 = tpu.matmul %85, %86, %cst_26 {dimension_numbers = #tpu.dot_dimension_numbers<[1], [0], [0], [1], [0, 0, 1, 1], [], []>} : vector<256x128xbf16>, vector<128x128xbf16>, vector<256x128xf32> -> vector<256x128xf32>
    %c0_27 = arith.constant 0 : index
    %c0_28 = arith.constant 0 : index
    %88 = vector.load %arg7[%c0_27, %c0_28] : memref<1x128xf32, #tpu.memory_space<vmem>>, vector<1x128xf32>
    %89 = vector.broadcast %88 : vector<1x128xf32> to vector<256x128xf32>
    %90 = arith.addf %87, %89 : vector<256x128xf32>
    %91 = arith.addf %90, %7 : vector<256x128xf32>
    %c0_29 = arith.constant 0 : index
    %c0_30 = arith.constant 0 : index
    %92 = vector.load %arg8[%c0_29, %c0_30] : memref<1x128xf32, #tpu.memory_space<vmem>>, vector<1x128xf32>
    %c0_31 = arith.constant 0 : index
    %c0_32 = arith.constant 0 : index
    %93 = vector.load %arg9[%c0_31, %c0_32] : memref<1x128xf32, #tpu.memory_space<vmem>>, vector<1x128xf32>
    %cst_33 = arith.constant dense<0.000000e+00> : vector<256xf32>
    %94 = vector.multi_reduction <add>, %91, %cst_33 [1] : vector<256x128xf32> to vector<256xf32>
    %95 = vector.shape_cast %94 : vector<256xf32> to vector<256x1xf32>
    %cst_34 = arith.constant 1.280000e+02 : f32
    %96 = vector.broadcast %cst_34 : f32 to vector<256x1xf32>
    %97 = arith.divf %95, %96 : vector<256x1xf32>
    %98 = vector.broadcast %97 : vector<256x1xf32> to vector<256x128xf32>
    %99 = arith.subf %91, %98 : vector<256x128xf32>
    %100 = arith.mulf %99, %99 : vector<256x128xf32>
    %cst_35 = arith.constant dense<0.000000e+00> : vector<256xf32>
    %101 = vector.multi_reduction <add>, %100, %cst_35 [1] : vector<256x128xf32> to vector<256xf32>
    %102 = vector.shape_cast %101 : vector<256xf32> to vector<256x1xf32>
    %cst_36 = arith.constant 1.280000e+02 : f32
    %103 = vector.broadcast %cst_36 : f32 to vector<256x1xf32>
    %104 = arith.divf %102, %103 : vector<256x1xf32>
    %cst_37 = arith.constant 9.99999974E-6 : f32
    %105 = vector.broadcast %cst_37 : f32 to vector<256x1xf32>
    %106 = arith.addf %104, %105 : vector<256x1xf32>
    %107 = math.rsqrt %106 : vector<256x1xf32>
    %108 = vector.broadcast %107 : vector<256x1xf32> to vector<256x128xf32>
    %109 = vector.broadcast %92 : vector<1x128xf32> to vector<256x128xf32>
    %110 = arith.mulf %108, %109 : vector<256x128xf32>
    %111 = arith.mulf %99, %110 : vector<256x128xf32>
    %112 = vector.broadcast %93 : vector<1x128xf32> to vector<256x128xf32>
    %113 = arith.addf %111, %112 : vector<256x128xf32>
    %c1_i32_38 = arith.constant 1 : i32
    %114 = tpu.memref_slice %arg19[%c1_i32_38] : memref<3x!tpu.dma_semaphore, #tpu.memory_space<semaphore_mem>> -> memref<1x!tpu.dma_semaphore, #tpu.memory_space<semaphore_mem>>
    %115 = tpu.memref_squeeze %114 : memref<1x!tpu.dma_semaphore, #tpu.memory_space<semaphore_mem>> -> memref<!tpu.dma_semaphore, #tpu.memory_space<semaphore_mem>>
    tpu.wait_dma2 semaphore(%115 : memref<!tpu.dma_semaphore, #tpu.memory_space<semaphore_mem>>) src(%arg10 : memref<128x512xbf16, #tpu.memory_space<any>>) dst(%arg17 : memref<128x512xbf16, #tpu.memory_space<vmem>>)
    %116 = arith.truncf %113 : vector<256x128xf32> to vector<256x128xbf16>
    %c0_39 = arith.constant 0 : index
    %c0_40 = arith.constant 0 : index
    %117 = vector.load %arg17[%c0_39, %c0_40] : memref<128x512xbf16, #tpu.memory_space<vmem>>, vector<128x512xbf16>
    %cst_41 = arith.constant dense<0.000000e+00> : vector<256x512xf32>
    %118 = tpu.matmul %116, %117, %cst_41 {dimension_numbers = #tpu.dot_dimension_numbers<[1], [0], [0], [1], [0, 0, 1, 1], [], []>} : vector<256x128xbf16>, vector<128x512xbf16>, vector<256x512xf32> -> vector<256x512xf32>
    %c0_42 = arith.constant 0 : index
    %c0_43 = arith.constant 0 : index
    %119 = vector.load %arg11[%c0_42, %c0_43] : memref<1x512xf32, #tpu.memory_space<vmem>>, vector<1x512xf32>
    %120 = vector.broadcast %119 : vector<1x512xf32> to vector<256x512xf32>
    %121 = arith.addf %118, %120 : vector<256x512xf32>
    %cst_44 = arith.constant 5.000000e-01 : f32
    %122 = vector.broadcast %cst_44 : f32 to vector<256x512xf32>
    %123 = arith.mulf %122, %121 : vector<256x512xf32>
    %cst_45 = arith.constant 0.707106769 : f32
    %124 = vector.broadcast %cst_45 : f32 to vector<256x512xf32>
    %125 = arith.mulf %121, %124 : vector<256x512xf32>
    %126 = math.erf %125 : vector<256x512xf32>
    %cst_46 = arith.constant 1.000000e+00 : f32
    %127 = vector.broadcast %cst_46 : f32 to vector<256x512xf32>
    %128 = arith.addf %127, %126 : vector<256x512xf32>
    %129 = arith.mulf %123, %128 : vector<256x512xf32>
    %c2_i32_47 = arith.constant 2 : i32
    %130 = tpu.memref_slice %arg19[%c2_i32_47] : memref<3x!tpu.dma_semaphore, #tpu.memory_space<semaphore_mem>> -> memref<1x!tpu.dma_semaphore, #tpu.memory_space<semaphore_mem>>
    %131 = tpu.memref_squeeze %130 : memref<1x!tpu.dma_semaphore, #tpu.memory_space<semaphore_mem>> -> memref<!tpu.dma_semaphore, #tpu.memory_space<semaphore_mem>>
    tpu.wait_dma2 semaphore(%131 : memref<!tpu.dma_semaphore, #tpu.memory_space<semaphore_mem>>) src(%arg12 : memref<512x128xbf16, #tpu.memory_space<any>>) dst(%arg18 : memref<512x128xbf16, #tpu.memory_space<vmem>>)
    %132 = arith.truncf %129 : vector<256x512xf32> to vector<256x512xbf16>
    %c0_48 = arith.constant 0 : index
    %c0_49 = arith.constant 0 : index
    %133 = vector.load %arg18[%c0_48, %c0_49] : memref<512x128xbf16, #tpu.memory_space<vmem>>, vector<512x128xbf16>
    %cst_50 = arith.constant dense<0.000000e+00> : vector<256x128xf32>
    %134 = tpu.matmul %132, %133, %cst_50 {dimension_numbers = #tpu.dot_dimension_numbers<[1], [0], [0], [1], [0, 0, 1, 1], [], []>} : vector<256x512xbf16>, vector<512x128xbf16>, vector<256x128xf32> -> vector<256x128xf32>
    %c0_51 = arith.constant 0 : index
    %c0_52 = arith.constant 0 : index
    %135 = vector.load %arg13[%c0_51, %c0_52] : memref<1x128xf32, #tpu.memory_space<vmem>>, vector<1x128xf32>
    %136 = vector.broadcast %135 : vector<1x128xf32> to vector<256x128xf32>
    %137 = arith.addf %134, %136 : vector<256x128xf32>
    %138 = vector.shape_cast %137 : vector<256x128xf32> to vector<2x128x128xf32>
    %c0_53 = arith.constant 0 : index
    %c0_54 = arith.constant 0 : index
    %c0_55 = arith.constant 0 : index
    %139 = vector.load %arg14[%c0_53, %c0_54, %c0_55] : memref<2x128x128xf32, #tpu.memory_space<vmem>>, vector<2x128x128xf32>
    tpu.vector_store %arg14[%c0_53, %c0_54, %c0_55], %138 {strides = array<i32>} : memref<2x128x128xf32, #tpu.memory_space<vmem>>, vector<2x128x128xf32>,
    %140 = vector.shape_cast %91 : vector<256x128xf32> to vector<2x128x128xf32>
    %c0_56 = arith.constant 0 : index
    %c0_57 = arith.constant 0 : index
    %c0_58 = arith.constant 0 : index
    %141 = vector.load %arg15[%c0_56, %c0_57, %c0_58] : memref<2x128x128xf32, #tpu.memory_space<vmem>>, vector<2x128x128xf32>
    tpu.vector_store %arg15[%c0_56, %c0_57, %c0_58], %140 {strides = array<i32>} : memref<2x128x128xf32, #tpu.memory_space<vmem>>, vector<2x128x128xf32>,
    return
  }
  func.func @transform_0(%arg0: i32) -> (i32, i32, i32) {
    %c0_i32 = arith.constant 0 : i32
    %c0_i32_0 = arith.constant 0 : i32
    %c0_i32_1 = arith.constant 0 : i32
    %c0_i32_2 = arith.constant 0 : i32
    return %c0_i32, %c0_i32_0, %c0_i32_1 : i32, i32, i32
  }
  func.func @transform_1(%arg0: i32) -> (i32, i32) {
    %c0_i32 = arith.constant 0 : i32
    %c0_i32_0 = arith.constant 0 : i32
    %c0_i32_1 = arith.constant 0 : i32
    return %c0_i32, %c0_i32_0 : i32, i32
  }
  func.func @transform_2(%arg0: i32) -> (i32, i32) {
    %c0_i32 = arith.constant 0 : i32
    %c0_i32_0 = arith.constant 0 : i32
    %c0_i32_1 = arith.constant 0 : i32
    return %c0_i32, %c0_i32_0 : i32, i32
  }
  func.func @transform_3(%arg0: i32) -> (i32, i32) {
    %c0_i32 = arith.constant 0 : i32
    %c0_i32_0 = arith.constant 0 : i32
    %c0_i32_1 = arith.constant 0 : i32
    return %c0_i32, %c0_i32_0 : i32, i32
  }
  func.func @transform_4(%arg0: i32) -> (i32, i32) {
    %c0_i32 = arith.constant 0 : i32
    %c0_i32_0 = arith.constant 0 : i32
    %c0_i32_1 = arith.constant 0 : i32
    return %c0_i32, %c0_i32_0 : i32, i32
  }
  func.func @transform_6(%arg0: i32) -> (i32, i32) {
    %c0_i32 = arith.constant 0 : i32
    %c0_i32_0 = arith.constant 0 : i32
    %c0_i32_1 = arith.constant 0 : i32
    return %c0_i32, %c0_i32_0 : i32, i32
  }
  func.func @transform_7(%arg0: i32) -> (i32, i32) {
    %c0_i32 = arith.constant 0 : i32
    %c0_i32_0 = arith.constant 0 : i32
    %c0_i32_1 = arith.constant 0 : i32
    return %c0_i32, %c0_i32_0 : i32, i32
  }
  func.func @transform_8(%arg0: i32) -> (i32, i32) {
    %c0_i32 = arith.constant 0 : i32
    %c0_i32_0 = arith.constant 0 : i32
    %c0_i32_1 = arith.constant 0 : i32
    return %c0_i32, %c0_i32_0 : i32, i32
  }
  func.func @transform_10(%arg0: i32) -> (i32, i32) {
    %c0_i32 = arith.constant 0 : i32
    %c0_i32_0 = arith.constant 0 : i32
    %c0_i32_1 = arith.constant 0 : i32
    return %c0_i32, %c0_i32_0 : i32, i32
  }
  func.func @transform_12(%arg0: i32) -> (i32, i32) {
    %c0_i32 = arith.constant 0 : i32
    %c0_i32_0 = arith.constant 0 : i32
    %c0_i32_1 = arith.constant 0 : i32
    return %c0_i32, %c0_i32_0 : i32, i32
  }
  func.func @transform_13(%arg0: i32) -> (i32, i32, i32) {
    %c0_i32 = arith.constant 0 : i32
    %c0_i32_0 = arith.constant 0 : i32
    %c0_i32_1 = arith.constant 0 : i32
    %c0_i32_2 = arith.constant 0 : i32
    return %c0_i32, %c0_i32_0, %c0_i32_1 : i32, i32, i32
  }
  func.func @transform_14(%arg0: i32) -> (i32, i32, i32) {
    %c0_i32 = arith.constant 0 : i32
    %c0_i32_0 = arith.constant 0 : i32
    %c0_i32_1 = arith.constant 0 : i32
    %c0_i32_2 = arith.constant 0 : i32
    return %c0_i32, %c0_i32_0, %c0_i32_1 : i32, i32, i32
  }
}

</mosaic_0001>

<llo_original>
// kernel: block_forward.1
$region0: #{block_forward.1}
  #allocation0 [shape = 'u32[]', space=smem, size = 0x4, offset = 0x4, fixed_abs, tag = 'smem constant byte address 0x4 - core index']
  #allocation1 [shape = 'u32[144,128]{1,0:T(1,128)}', space=vmem, size = 0x12000, scoped, tag = 'internal scratch']
  #allocation2 [shape = 'bf16[128,128]{1,0:T(8,128)(2,1)}', space=vmem, size = 0x8000, scoped, tag = 'scratch operand']
  #allocation3 [shape = 'bf16[128,512]{1,0:T(8,128)(2,1)}', space=vmem, size = 0x20000, scoped, tag = 'scratch operand']
  #allocation4 [shape = 'bf16[512,128]{1,0:T(8,128)(2,1)}', space=vmem, size = 0x20000, scoped, tag = 'scratch operand']
  #allocation5 [shape = 's32[3]{0}', space=sflag, size = 0xc, scoped, tag = 'scratch operand']
  #allocation17 [shape = 's32[]', space=sflag, size = 0x4, offset = 0, fixed_abs, tag = 'sflag constant byte address 0x0 - dummy sync flag']
  #allocation18 [shape = 's32[]', space=sflag, size = 0x4, offset = 0, fixed_abs, tag = 'sflag constant byte address 0x0 - dummy sync flag']
  #allocation19 [shape = 'u32[]', space=smem, size = 0x4, offset = 0x44, fixed_abs, tag = 'smem constant byte address 0x44 - assertion arg 0']
  #allocation20 [shape = 'u32[]', space=smem, size = 0x4, offset = 0x48, fixed_abs, tag = 'smem constant byte address 0x48 - assertion arg 1']
  #allocation21 [shape = 's32[]', space=sflag, size = 0x4, offset = 0, fixed_abs, tag = 'sflag constant byte address 0x0 - dummy sync flag']
  #allocation22 [shape = 's32[]', space=sflag, size = 0x4, offset = 0, fixed_abs, tag = 'sflag constant byte address 0x0 - dummy sync flag']
  #allocation23 [shape = 's32[]', space=sflag, size = 0x4, offset = 0, fixed_abs, tag = 'sflag constant byte address 0x0 - dummy sync flag']
  #allocation24 [shape = 's32[]', space=sflag, size = 0x4, offset = 0, fixed_abs, tag = 'sflag constant byte address 0x0 - dummy sync flag']
  %s0 = inlined_call_operand.hbm [shape: f32[2,128,128], index: 0, kind: input, shape index: {}]
  %s1 = inlined_call_operand.hbm [shape: f32[1,128], index: 1, kind: input, shape index: {}]
  %s2 = inlined_call_operand.hbm [shape: f32[1,128], index: 2, kind: input, shape index: {}]
  %s3 = inlined_call_operand.hbm [shape: bf16[128,384], index: 3, kind: input, shape index: {}]
  %s4 = inlined_call_operand.vmem [shape: f32[1,384], index: 4, kind: input, shape index: {}]
  %s5 = inlined_call_operand.hbm [shape: bf16[128,128], index: 5, kind: input, shape index: {}]
  %s6 = inlined_call_operand.vmem [shape: f32[1,128], index: 6, kind: input, shape index: {}]
  %s7 = inlined_call_operand.vmem [shape: f32[1,128], index: 7, kind: input, shape index: {}]
  %s8 = inlined_call_operand.vmem [shape: f32[1,128], index: 8, kind: input, shape index: {}]
  %s9 = inlined_call_operand.hbm [shape: bf16[128,512], index: 9, kind: input, shape index: {}]
  %s10 = inlined_call_operand.vmem [shape: f32[1,512], index: 10, kind: input, shape index: {}]
  %s11 = inlined_call_operand.hbm [shape: bf16[512,128], index: 11, kind: input, shape index: {}]
  %s12 = inlined_call_operand.vmem [shape: f32[1,128], index: 12, kind: input, shape index: {}]
  %s13 = inlined_call_operand.hbm [shape: f32[2,128,128], index: 13, kind: output, shape index: {0}]
  %s14 = inlined_call_operand.hbm [shape: f32[2,128,128], index: 14, kind: output, shape index: {1}]
  %15 = xla_tuple %s13, %s14
  %s16 = sld [smem:[#allocation0]]
  $region86: #{block_forward.1} parent=0
    _
  %s18 = ssub.s32 1, %s16
  %s19 = scalar_select 0, %s18, %s16
  $region1: #{block_forward.1} parent=0
    #allocation6 [shape = 'u8[131072]{0}', space=vmem, size = 0x20000, scoped, tag = 'input window, operand 0, single buffered']
    #allocation7 [shape = 's32[1]{0}', space=sflag, size = 0x4, scoped, tag = 'scoped memory for block_forward.1']
    #allocation8 [shape = 's32[1]{0}', space=sflag, size = 0x4, scoped, tag = 'scoped memory for block_forward.1']
    #allocation9 [shape = 'u8[512]{0}', space=vmem, size = 0x400, scoped, tag = 'input window, operand 1, single buffered']
    #allocation10 [shape = 's32[1]{0}', space=sflag, size = 0x4, scoped, tag = 'scoped memory for block_forward.1']
    #allocation11 [shape = 'u8[512]{0}', space=vmem, size = 0x400, scoped, tag = 'input window, operand 2, single buffered']
    #allocation12 [shape = 'u8[98304]{0}', space=vmem, size = 0x18000, scoped, tag = 'input window, operand 3, single buffered']
    #allocation13 [shape = 's32[1]{0}', space=sflag, size = 0x4, scoped, tag = 'scoped memory for block_forward.1']
    #allocation14 [shape = 'u8[131072]{0}', space=vmem, size = 0x20000, scoped, tag = 'output window, operand 0, single buffered']
    #allocation15 [shape = 'u8[131072]{0}', space=vmem, size = 0x20000, scoped, tag = 'output window, operand 1, single buffered']
    #allocation16 [shape = 's32[1]{0}', space=sflag, size = 0x4, scoped, tag = 'scoped memory for block_forward.1']
    %20 = vsyncpa [#allocation7], 0
    %21 = vsyncpa [#allocation10], 0
    %22 = vsyncpa [#allocation13], 0
    %23 = vsyncpa [#allocation8], 0
    %24 = vsyncpa [#allocation16], 0
    // Predicated region
    $region2: #{block_forward.1} parent=1 // pred_check
      _
    $region3: #{block_forward.1} parent=1 // pred_check_branch
      %26 = sbr.rel (0) target = $region5
    $region4: #{block_forward.1} parent=1 // pred_region
      %s28 = ssub.s32 4096, 4096
      %29 = vsyncadd [#allocation7], %s28
      %s30 = sshll.u32 [#allocation6], 4
      %s31 = int_to_ptr.vmem [resolvable:$true] %s30
      %36 = dma.hbm_to_vmem [thread:$0]  %s0, 4096, %s31, [#allocation7], 128, 128, 8
    $region5: #{block_forward.1} parent=1 // pred_fallthru
      _
    // Predicated region
    $region6: #{block_forward.1} parent=1 // pred_check
      _
    $region7: #{block_forward.1} parent=1 // pred_check_branch
      %38 = sbr.rel (0) target = $region9
    $region8: #{block_forward.1} parent=1 // pred_region
      %s40 = ssub.s32 16, 16
      %41 = vsyncadd [#allocation10], %s40
      %s43 = sshll.u32 [#allocation9], 4
      %s44 = int_to_ptr.vmem [resolvable:$true] %s43
      %46 = dma.hbm_to_vmem [thread:$0]  %s1, 16, %s44, [#allocation10]
    $region9: #{block_forward.1} parent=1 // pred_fallthru
      _
    // Predicated region
    $region10: #{block_forward.1} parent=1 // pred_check
      _
    $region11: #{block_forward.1} parent=1 // pred_check_branch
      %48 = sbr.rel (0) target = $region13
    $region12: #{block_forward.1} parent=1 // pred_region
      %s50 = ssub.s32 16, 16
      %51 = vsyncadd [#allocation10], %s50
      %s53 = sshll.u32 [#allocation11], 4
      %s54 = int_to_ptr.vmem [resolvable:$true] %s53
      %56 = dma.hbm_to_vmem [thread:$0]  %s2, 16, %s54, [#allocation10]
    $region13: #{block_forward.1} parent=1 // pred_fallthru
      _
    // Predicated region
    $region14: #{block_forward.1} parent=1 // pred_check
      _
    $region15: #{block_forward.1} parent=1 // pred_check_branch
      %58 = sbr.rel (0) target = $region17
    $region16: #{block_forward.1} parent=1 // pred_region
      %s60 = ssub.s32 3072, 3072
      %61 = vsyncadd [#allocation13], %s60
      %s62 = sshll.u32 [#allocation12], 4
      %s63 = int_to_ptr.vmem [resolvable:$true] %s62
      %68 = dma.hbm_to_vmem [thread:$0]  %s3, 3072, %s63, [#allocation13], 192, 192, 12
    $region17: #{block_forward.1} parent=1 // pred_fallthru
      _
    // Predicated region
    $region18: #{block_forward.1} parent=1 // pred_check
      _
    $region19: #{block_forward.1} parent=1 // pred_check_branch
      %70 = sbr.rel (0) target = $region21
    $region20: #{block_forward.1} parent=1 // pred_region
      _
    $region21: #{block_forward.1} parent=1 // pred_fallthru
      _
    // Predicated region
    $region22: #{block_forward.1} parent=1 // pred_check
      _
    $region23: #{block_forward.1} parent=1 // pred_check_branch
      %72 = sbr.rel (0) target = $region25
    $region24: #{block_forward.1} parent=1 // pred_region
      _
    $region25: #{block_forward.1} parent=1 // pred_fallthru
      _
    // Predicated region
    $region26: #{block_forward.1} parent=1 // pred_check
      _
    $region27: #{block_forward.1} parent=1 // pred_check_branch
      %74 = sbr.rel (0) target = $region29
    $region28: #{block_forward.1} parent=1 // pred_region
      _
    $region29: #{block_forward.1} parent=1 // pred_fallthru
      _
    // Predicated region
    $region30: #{block_forward.1} parent=1 // pred_check
      _
    $region31: #{block_forward.1} parent=1 // pred_check_branch
      %76 = sbr.rel (0) target = $region33
    $region32: #{block_forward.1} parent=1 // pred_region
      _
    $region33: #{block_forward.1} parent=1 // pred_fallthru
      _
    // Predicated region
    $region34: #{block_forward.1} parent=1 // pred_check
      _
    $region35: #{block_forward.1} parent=1 // pred_check_branch
      %78 = sbr.rel (0) target = $region37
    $region36: #{block_forward.1} parent=1 // pred_region
      _
    $region37: #{block_forward.1} parent=1 // pred_fallthru
      _
    // Predicated region
    $region38: #{block_forward.1} parent=1 // pred_check
      _
    $region39: #{block_forward.1} parent=1 // pred_check_branch
      %80 = sbr.rel (0) target = $region41
    $region40: #{block_forward.1} parent=1 // pred_region
      _
    $region41: #{block_forward.1} parent=1 // pred_fallthru
      _
    // Predicated region
    $region42: #{block_forward.1} parent=1 // pred_check
      _
    $region43: #{block_forward.1} parent=1 // pred_check_branch
      %82 = sbr.rel (0) target = $region45
    $region44: #{block_forward.1} parent=1 // pred_region
      %83 = dma.done [#allocation7], 4096
    $region45: #{block_forward.1} parent=1 // pred_fallthru
      _
    // Predicated region
    $region46: #{block_forward.1} parent=1 // pred_check
      _
    $region47: #{block_forward.1} parent=1 // pred_check_branch
      %85 = sbr.rel (0) target = $region49
    $region48: #{block_forward.1} parent=1 // pred_region
      %86 = dma.done [#allocation10], 16
    $region49: #{block_forward.1} parent=1 // pred_fallthru
      _
    // Predicated region
    $region50: #{block_forward.1} parent=1 // pred_check
      _
    $region51: #{block_forward.1} parent=1 // pred_check_branch
      %88 = sbr.rel (0) target = $region53
    $region52: #{block_forward.1} parent=1 // pred_region
      %89 = dma.done [#allocation10], 16
    $region53: #{block_forward.1} parent=1 // pred_fallthru
      _
    // Predicated region
    $region54: #{block_forward.1} parent=1 // pred_check
      _
    $region55: #{block_forward.1} parent=1 // pred_check_branch
      %91 = sbr.rel (0) target = $region57
    $region56: #{block_forward.1} parent=1 // pred_region
      %92 = dma.done [#allocation13], 3072
    $region57: #{block_forward.1} parent=1 // pred_fallthru
      _
    // Predicated region
    $region58: #{block_forward.1} parent=1 // pred_check
      _
    $region59: #{block_forward.1} parent=1 // pred_check_branch
      %95 = sbr.rel target = $region61
    $region60: #{block_forward.1} parent=1 // pred_region
      %96 = sst [smem:[#allocation19]] [#allocation18]
      %97 = sst [smem:[#allocation20]] [#allocation17]
    $region61: #{block_forward.1} parent=1 // pred_fallthru
      _
    %99 = shalt.err (0)
    %s101 = sshll.u32 [#allocation2], 4
    %s102 = int_to_ptr.vmem [resolvable:$true] %s101
    %104 = dma.hbm_to_vmem [thread:$0]  %s5, 1024, %s102, [#allocation5]
    %s105 = scalar_lea.sflag [#allocation5], 1
    // Predicated region
    $region62: #{block_forward.1} parent=1 // pred_check
      _
    $region63: #{block_forward.1} parent=1 // pred_check_branch
      %107 = sbr.rel target = $region65
    $region64: #{block_forward.1} parent=1 // pred_region
      %108 = sst [smem:[#allocation19]] [#allocation22]
      %109 = sst [smem:[#allocation20]] [#allocation21]
    $region65: #{block_forward.1} parent=1 // pred_fallthru
      _
    %111 = shalt.err (0)
    %s113 = sshll.u32 [#allocation3], 4
    %s114 = int_to_ptr.vmem [resolvable:$true] %s113
    %116 = dma.hbm_to_vmem [thread:$0]  %s9, 4096, %s114, %s105
    %s117 = scalar_lea.sflag [#allocation5], 2
    // Predicated region
    $region66: #{block_forward.1} parent=1 // pred_check
      _
    $region67: #{block_forward.1} parent=1 // pred_check_branch
      %119 = sbr.rel target = $region69
    $region68: #{block_forward.1} parent=1 // pred_region
      %120 = sst [smem:[#allocation19]] [#allocation24]
      %121 = sst [smem:[#allocation20]] [#allocation23]
    $region69: #{block_forward.1} parent=1 // pred_fallthru
      _
    %123 = shalt.err (0)
    %s125 = sshll.u32 [#allocation4], 4
    %s126 = int_to_ptr.vmem [resolvable:$true] %s125
    %128 = dma.hbm_to_vmem [thread:$0]  %s11, 4096, %s126, %s117
    %v129 = vld [vmem:[#allocation6] sm:$0xff]
    %v130 = vld [vmem:[#allocation6 + $0x8] sm:$0xff]
    %v131 = vld [vmem:[#allocation6 + $0x10] sm:$0xff]
    %v132 = vld [vmem:[#allocation6 + $0x18] sm:$0xff]
    %v133 = vld [vmem:[#allocation6 + $0x20] sm:$0xff]
    %v134 = vld [vmem:[#allocation6 + $0x28] sm:$0xff]
    %v135 = vld [vmem:[#allocation6 + $0x30] sm:$0xff]
    %v136 = vld [vmem:[#allocation6 + $0x38] sm:$0xff]
    %v137 = vld [vmem:[#allocation6 + $0x40] sm:$0xff]
    %v138 = vld [vmem:[#allocation6 + $0x48] sm:$0xff]
    %v139 = vld [vmem:[#allocation6 + $0x50] sm:$0xff]
    %v140 = vld [vmem:[#allocation6 + $0x58] sm:$0xff]
    %v141 = vld [vmem:[#allocation6 + $0x60] sm:$0xff]
    %v142 = vld [vmem:[#allocation6 + $0x68] sm:$0xff]
    %v143 = vld [vmem:[#allocation6 + $0x70] sm:$0xff]
    %v144 = vld [vmem:[#allocation6 + $0x78] sm:$0xff]
    %v145 = vld [vmem:[#allocation6 + $0x80] sm:$0xff]
    %v146 = vld [vmem:[#allocation6 + $0x88] sm:$0xff]
    %v147 = vld [vmem:[#allocation6 + $0x90] sm:$0xff]
    %v148 = vld [vmem:[#allocation6 + $0x98] sm:$0xff]
    %v149 = vld [vmem:[#allocation6 + $0xa0] sm:$0xff]
    %v150 = vld [vmem:[#allocation6 + $0xa8] sm:$0xff]
    %v151 = vld [vmem:[#allocation6 + $0xb0] sm:$0xff]
    %v152 = vld [vmem:[#allocation6 + $0xb8] sm:$0xff]
    %v153 = vld [vmem:[#allocation6 + $0xc0] sm:$0xff]
    %v154 = vld [vmem:[#allocation6 + $0xc8] sm:$0xff]
    %v155 = vld [vmem:[#allocation6 + $0xd0] sm:$0xff]
    %v156 = vld [vmem:[#allocation6 + $0xd8] sm:$0xff]
    %v157 = vld [vmem:[#allocation6 + $0xe0] sm:$0xff]
    %v158 = vld [vmem:[#allocation6 + $0xe8] sm:$0xff]
    %v159 = vld [vmem:[#allocation6 + $0xf0] sm:$0xff]
    %v160 = vld [vmem:[#allocation6 + $0xf8] sm:$0xff]
    %v161 = vld [vmem:[#allocation9] sm:$0x1]
    %v162 = vld [vmem:[#allocation11] sm:$0x1]
    %163 = vadd.xlane.f32.xlu0 %v129
    %v164 = vpop.xlane.xlu0 %163
    %165 = vadd.xlane.f32.xlu0 %v130
    %v166 = vpop.xlane.xlu0 %165
    %167 = vadd.xlane.f32.xlu0 %v131
    %v168 = vpop.xlane.xlu0 %167
    %169 = vadd.xlane.f32.xlu0 %v132
    %v170 = vpop.xlane.xlu0 %169
    %171 = vadd.xlane.f32.xlu0 %v133
    %v172 = vpop.xlane.xlu0 %171
    %173 = vadd.xlane.f32.xlu0 %v134
    %v174 = vpop.xlane.xlu0 %173
    %175 = vadd.xlane.f32.xlu0 %v135
    %v176 = vpop.xlane.xlu0 %175
    %177 = vadd.xlane.f32.xlu0 %v136
    %v178 = vpop.xlane.xlu0 %177
    %179 = vadd.xlane.f32.xlu0 %v137
    %v180 = vpop.xlane.xlu0 %179
    %181 = vadd.xlane.f32.xlu0 %v138
    %v182 = vpop.xlane.xlu0 %181
    %183 = vadd.xlane.f32.xlu0 %v139
    %v184 = vpop.xlane.xlu0 %183
    %185 = vadd.xlane.f32.xlu0 %v140
    %v186 = vpop.xlane.xlu0 %185
    %187 = vadd.xlane.f32.xlu0 %v141
    %v188 = vpop.xlane.xlu0 %187
    %189 = vadd.xlane.f32.xlu0 %v142
    %v190 = vpop.xlane.xlu0 %189
    %191 = vadd.xlane.f32.xlu0 %v143
    %v192 = vpop.xlane.xlu0 %191
    %193 = vadd.xlane.f32.xlu0 %v144
    %v194 = vpop.xlane.xlu0 %193
    %195 = vadd.xlane.f32.xlu0 %v145
    %v196 = vpop.xlane.xlu0 %195
    %197 = vadd.xlane.f32.xlu0 %v146
    %v198 = vpop.xlane.xlu0 %197
    %199 = vadd.xlane.f32.xlu0 %v147
    %v200 = vpop.xlane.xlu0 %199
    %201 = vadd.xlane.f32.xlu0 %v148
    %v202 = vpop.xlane.xlu0 %201
    %203 = vadd.xlane.f32.xlu0 %v149
    %v204 = vpop.xlane.xlu0 %203
    %205 = vadd.xlane.f32.xlu0 %v150
    %v206 = vpop.xlane.xlu0 %205
    %207 = vadd.xlane.f32.xlu0 %v151
    %v208 = vpop.xlane.xlu0 %207
    %209 = vadd.xlane.f32.xlu0 %v152
    %v210 = vpop.xlane.xlu0 %209
    %211 = vadd.xlane.f32.xlu0 %v153
    %v212 = vpop.xlane.xlu0 %211
    %213 = vadd.xlane.f32.xlu0 %v154
    %v214 = vpop.xlane.xlu0 %213
    %215 = vadd.xlane.f32.xlu0 %v155
    %v216 = vpop.xlane.xlu0 %215
    %217 = vadd.xlane.f32.xlu0 %v156
    %v218 = vpop.xlane.xlu0 %217
    %219 = vadd.xlane.f32.xlu0 %v157
    %v220 = vpop.xlane.xlu0 %219
    %221 = vadd.xlane.f32.xlu0 %v158
    %v222 = vpop.xlane.xlu0 %221
    %223 = vadd.xlane.f32.xlu0 %v159
    %v224 = vpop.xlane.xlu0 %223
    %225 = vadd.xlane.f32.xlu0 %v160
    %v226 = vpop.xlane.xlu0 %225
    %v227 = vrcp.pop 128.0
    %v228 = vmul.f32 %v164, %v227
    %v229 = vmul.f32 %v166, %v227
    %v230 = vmul.f32 %v168, %v227
    %v231 = vmul.f32 %v170, %v227
    %v232 = vmul.f32 %v172, %v227
    %v233 = vmul.f32 %v174, %v227
    %v234 = vmul.f32 %v176, %v227
    %v235 = vmul.f32 %v178, %v227
    %v236 = vmul.f32 %v180, %v227
    %v237 = vmul.f32 %v182, %v227
    %v238 = vmul.f32 %v184, %v227
    %v239 = vmul.f32 %v186, %v227
    %v240 = vmul.f32 %v188, %v227
    %v241 = vmul.f32 %v190, %v227
    %v242 = vmul.f32 %v192, %v227
    %v243 = vmul.f32 %v194, %v227
    %v244 = vmul.f32 %v196, %v227
    %v245 = vmul.f32 %v198, %v227
    %v246 = vmul.f32 %v200, %v227
    %v247 = vmul.f32 %v202, %v227
    %v248 = vmul.f32 %v204, %v227
    %v249 = vmul.f32 %v206, %v227
    %v250 = vmul.f32 %v208, %v227
    %v251 = vmul.f32 %v210, %v227
    %v252 = vmul.f32 %v212, %v227
    %v253 = vmul.f32 %v214, %v227
    %v254 = vmul.f32 %v216, %v227
    %v255 = vmul.f32 %v218, %v227
    %v256 = vmul.f32 %v220, %v227
    %v257 = vmul.f32 %v222, %v227
    %v258 = vmul.f32 %v224, %v227
    %v259 = vmul.f32 %v226, %v227
    %v260 = vsub.f32 %v129, %v228
    %v261 = vsub.f32 %v130, %v229
    %v262 = vsub.f32 %v131, %v230
    %v263 = vsub.f32 %v132, %v231
    %v264 = vsub.f32 %v133, %v232
    %v265 = vsub.f32 %v134, %v233
    %v266 = vsub.f32 %v135, %v234
    %v267 = vsub.f32 %v136, %v235
    %v268 = vsub.f32 %v137, %v236
    %v269 = vsub.f32 %v138, %v237
    %v270 = vsub.f32 %v139, %v238
    %v271 = vsub.f32 %v140, %v239
    %v272 = vsub.f32 %v141, %v240
    %v273 = vsub.f32 %v142, %v241
    %v274 = vsub.f32 %v143, %v242
    %v275 = vsub.f32 %v144, %v243
    %v276 = vsub.f32 %v145, %v244
    %v277 = vsub.f32 %v146, %v245
    %v278 = vsub.f32 %v147, %v246
    %v279 = vsub.f32 %v148, %v247
    %v280 = vsub.f32 %v149, %v248
    %v281 = vsub.f32 %v150, %v249
    %v282 = vsub.f32 %v151, %v250
    %v283 = vsub.f32 %v152, %v251
    %v284 = vsub.f32 %v153, %v252
    %v285 = vsub.f32 %v154, %v253
    %v286 = vsub.f32 %v155, %v254
    %v287 = vsub.f32 %v156, %v255
    %v288 = vsub.f32 %v157, %v256
    %v289 = vsub.f32 %v158, %v257
    %v290 = vsub.f32 %v159, %v258
    %v291 = vsub.f32 %v160, %v259
    %v292 = vmul.f32 %v260, %v260
    %v293 = vmul.f32 %v261, %v261
    %v294 = vmul.f32 %v262, %v262
    %v295 = vmul.f32 %v263, %v263
    %v296 = vmul.f32 %v264, %v264
    %v297 = vmul.f32 %v265, %v265
    %v298 = vmul.f32 %v266, %v266
    %v299 = vmul.f32 %v267, %v267
    %v300 = vmul.f32 %v268, %v268
    %v301 = vmul.f32 %v269, %v269
    %v302 = vmul.f32 %v270, %v270
    %v303 = vmul.f32 %v271, %v271
    %v304 = vmul.f32 %v272, %v272
    %v305 = vmul.f32 %v273, %v273
    %v306 = vmul.f32 %v274, %v274
    %v307 = vmul.f32 %v275, %v275
    %v308 = vmul.f32 %v276, %v276
    %v309 = vmul.f32 %v277, %v277
    %v310 = vmul.f32 %v278, %v278
    %v311 = vmul.f32 %v279, %v279
    %v312 = vmul.f32 %v280, %v280
    %v313 = vmul.f32 %v281, %v281
    %v314 = vmul.f32 %v282, %v282
    %v315 = vmul.f32 %v283, %v283
    %v316 = vmul.f32 %v284, %v284
    %v317 = vmul.f32 %v285, %v285
    %v318 = vmul.f32 %v286, %v286
    %v319 = vmul.f32 %v287, %v287
    %v320 = vmul.f32 %v288, %v288
    %v321 = vmul.f32 %v289, %v289
    %v322 = vmul.f32 %v290, %v290
    %v323 = vmul.f32 %v291, %v291
    %324 = vadd.xlane.f32.xlu0 %v292
    %v325 = vpop.xlane.xlu0 %324
    %326 = vadd.xlane.f32.xlu0 %v293
    %v327 = vpop.xlane.xlu0 %326
    %328 = vadd.xlane.f32.xlu0 %v294
    %v329 = vpop.xlane.xlu0 %328
    %330 = vadd.xlane.f32.xlu0 %v295
    %v331 = vpop.xlane.xlu0 %330
    %332 = vadd.xlane.f32.xlu0 %v296
    %v333 = vpop.xlane.xlu0 %332
    %334 = vadd.xlane.f32.xlu0 %v297
    %v335 = vpop.xlane.xlu0 %334
    %336 = vadd.xlane.f32.xlu0 %v298
    %v337 = vpop.xlane.xlu0 %336
    %338 = vadd.xlane.f32.xlu0 %v299
    %v339 = vpop.xlane.xlu0 %338
    %340 = vadd.xlane.f32.xlu0 %v300
    %v341 = vpop.xlane.xlu0 %340
    %342 = vadd.xlane.f32.xlu0 %v301
    %v343 = vpop.xlane.xlu0 %342
    %344 = vadd.xlane.f32.xlu0 %v302
    %v345 = vpop.xlane.xlu0 %344
    %346 = vadd.xlane.f32.xlu0 %v303
    %v347 = vpop.xlane.xlu0 %346
    %348 = vadd.xlane.f32.xlu0 %v304
    %v349 = vpop.xlane.xlu0 %348
    %350 = vadd.xlane.f32.xlu0 %v305
    %v351 = vpop.xlane.xlu0 %350
    %352 = vadd.xlane.f32.xlu0 %v306
    %v353 = vpop.xlane.xlu0 %352
    %354 = vadd.xlane.f32.xlu0 %v307
    %v355 = vpop.xlane.xlu0 %354
    %356 = vadd.xlane.f32.xlu0 %v308
    %v357 = vpop.xlane.xlu0 %356
    %358 = vadd.xlane.f32.xlu0 %v309
    %v359 = vpop.xlane.xlu0 %358
    %360 = vadd.xlane.f32.xlu0 %v310
    %v361 = vpop.xlane.xlu0 %360
    %362 = vadd.xlane.f32.xlu0 %v311
    %v363 = vpop.xlane.xlu0 %362
    %364 = vadd.xlane.f32.xlu0 %v312
    %v365 = vpop.xlane.xlu0 %364
    %366 = vadd.xlane.f32.xlu0 %v313
    %v367 = vpop.xlane.xlu0 %366
    %368 = vadd.xlane.f32.xlu0 %v314
    %v369 = vpop.xlane.xlu0 %368
    %370 = vadd.xlane.f32.xlu0 %v315
    %v371 = vpop.xlane.xlu0 %370
    %372 = vadd.xlane.f32.xlu0 %v316
    %v373 = vpop.xlane.xlu0 %372
    %374 = vadd.xlane.f32.xlu0 %v317
    %v375 = vpop.xlane.xlu0 %374
    %376 = vadd.xlane.f32.xlu0 %v318
    %v377 = vpop.xlane.xlu0 %376
    %378 = vadd.xlane.f32.xlu0 %v319
    %v379 = vpop.xlane.xlu0 %378
    %380 = vadd.xlane.f32.xlu0 %v320
    %v381 = vpop.xlane.xlu0 %380
    %382 = vadd.xlane.f32.xlu0 %v321
    %v383 = vpop.xlane.xlu0 %382
    %384 = vadd.xlane.f32.xlu0 %v322
    %v385 = vpop.xlane.xlu0 %384
    %386 = vadd.xlane.f32.xlu0 %v323
    %v387 = vpop.xlane.xlu0 %386
    %v388 = vmul.f32 %v325, %v227
    %v389 = vmul.f32 %v327, %v227
    %v390 = vmul.f32 %v329, %v227
    %v391 = vmul.f32 %v331, %v227
    %v392 = vmul.f32 %v333, %v227
    %v393 = vmul.f32 %v335, %v227
    %v394 = vmul.f32 %v337, %v227
    %v395 = vmul.f32 %v339, %v227
    %v396 = vmul.f32 %v341, %v227
    %v397 = vmul.f32 %v343, %v227
    %v398 = vmul.f32 %v345, %v227
    %v399 = vmul.f32 %v347, %v227
    %v400 = vmul.f32 %v349, %v227
    %v401 = vmul.f32 %v351, %v227
    %v402 = vmul.f32 %v353, %v227
    %v403 = vmul.f32 %v355, %v227
    %v404 = vmul.f32 %v357, %v227
    %v405 = vmul.f32 %v359, %v227
    %v406 = vmul.f32 %v361, %v227
    %v407 = vmul.f32 %v363, %v227
    %v408 = vmul.f32 %v365, %v227
    %v409 = vmul.f32 %v367, %v227
    %v410 = vmul.f32 %v369, %v227
    %v411 = vmul.f32 %v371, %v227
    %v412 = vmul.f32 %v373, %v227
    %v413 = vmul.f32 %v375, %v227
    %v414 = vmul.f32 %v377, %v227
    %v415 = vmul.f32 %v379, %v227
    %v416 = vmul.f32 %v381, %v227
    %v417 = vmul.f32 %v383, %v227
    %v418 = vmul.f32 %v385, %v227
    %v419 = vmul.f32 %v387, %v227
    %v420 = vadd.f32 %v388, 1e-05
    %v421 = vadd.f32 %v389, 1e-05
    %v422 = vadd.f32 %v390, 1e-05
    %v423 = vadd.f32 %v391, 1e-05
    %v424 = vadd.f32 %v392, 1e-05
    %v425 = vadd.f32 %v393, 1e-05
    %v426 = vadd.f32 %v394, 1e-05
    %v427 = vadd.f32 %v395, 1e-05
    %v428 = vadd.f32 %v396, 1e-05
    %v429 = vadd.f32 %v397, 1e-05
    %v430 = vadd.f32 %v398, 1e-05
    %v431 = vadd.f32 %v399, 1e-05
    %v432 = vadd.f32 %v400, 1e-05
    %v433 = vadd.f32 %v401, 1e-05
    %v434 = vadd.f32 %v402, 1e-05
    %v435 = vadd.f32 %v403, 1e-05
    %v436 = vadd.f32 %v404, 1e-05
    %v437 = vadd.f32 %v405, 1e-05
    %v438 = vadd.f32 %v406, 1e-05
    %v439 = vadd.f32 %v407, 1e-05
    %v440 = vadd.f32 %v408, 1e-05
    %v441 = vadd.f32 %v409, 1e-05
    %v442 = vadd.f32 %v410, 1e-05
    %v443 = vadd.f32 %v411, 1e-05
    %v444 = vadd.f32 %v412, 1e-05
    %v445 = vadd.f32 %v413, 1e-05
    %v446 = vadd.f32 %v414, 1e-05
    %v447 = vadd.f32 %v415, 1e-05
    %v448 = vadd.f32 %v416, 1e-05
    %v449 = vadd.f32 %v417, 1e-05
    %v450 = vadd.f32 %v418, 1e-05
    %v451 = vadd.f32 %v419, 1e-05
    %v452 = vrsqrt.pop %v420
    %v453 = vrsqrt.pop %v421
    %v454 = vrsqrt.pop %v422
    %v455 = vrsqrt.pop %v423
    %v456 = vrsqrt.pop %v424
    %v457 = vrsqrt.pop %v425
    %v458 = vrsqrt.pop %v426
    %v459 = vrsqrt.pop %v427
    %v460 = vrsqrt.pop %v428
    %v461 = vrsqrt.pop %v429
    %v462 = vrsqrt.pop %v430
    %v463 = vrsqrt.pop %v431
    %v464 = vrsqrt.pop %v432
    %v465 = vrsqrt.pop %v433
    %v466 = vrsqrt.pop %v434
    %v467 = vrsqrt.pop %v435
    %v468 = vrsqrt.pop %v436
    %v469 = vrsqrt.pop %v437
    %v470 = vrsqrt.pop %v438
    %v471 = vrsqrt.pop %v439
    %v472 = vrsqrt.pop %v440
    %v473 = vrsqrt.pop %v441
    %v474 = vrsqrt.pop %v442
    %v475 = vrsqrt.pop %v443
    %v476 = vrsqrt.pop %v444
    %v477 = vrsqrt.pop %v445
    %v478 = vrsqrt.pop %v446
    %v479 = vrsqrt.pop %v447
    %v480 = vrsqrt.pop %v448
    %v481 = vrsqrt.pop %v449
    %v482 = vrsqrt.pop %v450
    %v483 = vrsqrt.pop %v451
    %v485 = vlaneseq
    %v486 = vshrl.u32 %v485, 7
    %v487 = vsub.s32 0, %v486
    %v488 = vrot.slane %v161, %v487
    %v490 = vmul.f32 %v452, %v488
    %v491 = vmul.f32 %v453, %v488
    %v492 = vmul.f32 %v454, %v488
    %v493 = vmul.f32 %v455, %v488
    %v494 = vmul.f32 %v456, %v488
    %v495 = vmul.f32 %v457, %v488
    %v496 = vmul.f32 %v458, %v488
    %v497 = vmul.f32 %v459, %v488
    %v498 = vmul.f32 %v460, %v488
    %v499 = vmul.f32 %v461, %v488
    %v500 = vmul.f32 %v462, %v488
    %v501 = vmul.f32 %v463, %v488
    %v502 = vmul.f32 %v464, %v488
    %v503 = vmul.f32 %v465, %v488
    %v504 = vmul.f32 %v466, %v488
    %v505 = vmul.f32 %v467, %v488
    %v506 = vmul.f32 %v468, %v488
    %v507 = vmul.f32 %v469, %v488
    %v508 = vmul.f32 %v470, %v488
    %v509 = vmul.f32 %v471, %v488
    %v510 = vmul.f32 %v472, %v488
    %v511 = vmul.f32 %v473, %v488
    %v512 = vmul.f32 %v474, %v488
    %v513 = vmul.f32 %v475, %v488
    %v514 = vmul.f32 %v476, %v488
    %v515 = vmul.f32 %v477, %v488
    %v516 = vmul.f32 %v478, %v488
    %v517 = vmul.f32 %v479, %v488
    %v518 = vmul.f32 %v480, %v488
    %v519 = vmul.f32 %v481, %v488
    %v520 = vmul.f32 %v482, %v488
    %v521 = vmul.f32 %v483, %v488
    %v522 = vmul.f32 %v260, %v490
    %v523 = vmul.f32 %v261, %v491
    %v524 = vmul.f32 %v262, %v492
    %v525 = vmul.f32 %v263, %v493
    %v526 = vmul.f32 %v264, %v494
    %v527 = vmul.f32 %v265, %v495
    %v528 = vmul.f32 %v266, %v496
    %v529 = vmul.f32 %v267, %v497
    %v530 = vmul.f32 %v268, %v498
    %v531 = vmul.f32 %v269, %v499
    %v532 = vmul.f32 %v270, %v500
    %v533 = vmul.f32 %v271, %v501
    %v534 = vmul.f32 %v272, %v502
    %v535 = vmul.f32 %v273, %v503
    %v536 = vmul.f32 %v274, %v504
    %v537 = vmul.f32 %v275, %v505
    %v538 = vmul.f32 %v276, %v506
    %v539 = vmul.f32 %v277, %v507
    %v540 = vmul.f32 %v278, %v508
    %v541 = vmul.f32 %v279, %v509
    %v542 = vmul.f32 %v280, %v510
    %v543 = vmul.f32 %v281, %v511
    %v544 = vmul.f32 %v282, %v512
    %v545 = vmul.f32 %v283, %v513
    %v546 = vmul.f32 %v284, %v514
    %v547 = vmul.f32 %v285, %v515
    %v548 = vmul.f32 %v286, %v516
    %v549 = vmul.f32 %v287, %v517
    %v550 = vmul.f32 %v288, %v518
    %v551 = vmul.f32 %v289, %v519
    %v552 = vmul.f32 %v290, %v520
    %v553 = vmul.f32 %v291, %v521
    %v555 = vlaneseq
    %v556 = vshrl.u32 %v555, 7
    %v557 = vsub.s32 0, %v556
    %v558 = vrot.slane %v162, %v557
    %v560 = vadd.f32 %v522, %v558
    %v561 = vadd.f32 %v523, %v558
    %v562 = vadd.f32 %v524, %v558
    %v563 = vadd.f32 %v525, %v558
    %v564 = vadd.f32 %v526, %v558
    %v565 = vadd.f32 %v527, %v558
    %v566 = vadd.f32 %v528, %v558
    %v567 = vadd.f32 %v529, %v558
    %v568 = vadd.f32 %v530, %v558
    %v569 = vadd.f32 %v531, %v558
    %v570 = vadd.f32 %v532, %v558
    %v571 = vadd.f32 %v533, %v558
    %v572 = vadd.f32 %v534, %v558
    %v573 = vadd.f32 %v535, %v558
    %v574 = vadd.f32 %v536, %v558
    %v575 = vadd.f32 %v537, %v558
    %v576 = vadd.f32 %v538, %v558
    %v577 = vadd.f32 %v539, %v558
    %v578 = vadd.f32 %v540, %v558
    %v579 = vadd.f32 %v541, %v558
    %v580 = vadd.f32 %v542, %v558
    %v581 = vadd.f32 %v543, %v558
    %v582 = vadd.f32 %v544, %v558
    %v583 = vadd.f32 %v545, %v558
    %v584 = vadd.f32 %v546, %v558
    %v585 = vadd.f32 %v547, %v558
    %v586 = vadd.f32 %v548, %v558
    %v587 = vadd.f32 %v549, %v558
    %v588 = vadd.f32 %v550, %v558
    %v589 = vadd.f32 %v551, %v558
    %v590 = vadd.f32 %v552, %v558
    %v591 = vadd.f32 %v553, %v558
    %v592 = vpack.c.bf16 %v561, %v560
    %v593 = vpack.c.bf16 %v563, %v562
    %v594 = vpack.c.bf16 %v565, %v564
    %v595 = vpack.c.bf16 %v567, %v566
    %v596 = vpack.c.bf16 %v569, %v568
    %v597 = vpack.c.bf16 %v571, %v570
    %v598 = vpack.c.bf16 %v573, %v572
    %v599 = vpack.c.bf16 %v575, %v574
    %v600 = vpack.c.bf16 %v577, %v576
    %v601 = vpack.c.bf16 %v579, %v578
    %v602 = vpack.c.bf16 %v581, %v580
    %v603 = vpack.c.bf16 %v583, %v582
    %v604 = vpack.c.bf16 %v585, %v584
    %v605 = vpack.c.bf16 %v587, %v586
    %v606 = vpack.c.bf16 %v589, %v588
    %v607 = vpack.c.bf16 %v591, %v590
    %v608 = vld [vmem:[#allocation12] sm:$0xff]
    %v609 = vld [vmem:[#allocation12 + $0x8] sm:$0xf]
    %v610 = vld [vmem:[#allocation12 + $0xc] sm:$0xff]
    %v611 = vld [vmem:[#allocation12 + $0x14] sm:$0xf]
    %v612 = vld [vmem:[#allocation12 + $0x18] sm:$0xff]
    %v613 = vld [vmem:[#allocation12 + $0x20] sm:$0xf]
    %v614 = vld [vmem:[#allocation12 + $0x24] sm:$0xff]
    %v615 = vld [vmem:[#allocation12 + $0x2c] sm:$0xf]
    %v616 = vld [vmem:[#allocation12 + $0x30] sm:$0xff]
    %v617 = vld [vmem:[#allocation12 + $0x38] sm:$0xf]
    %v618 = vld [vmem:[#allocation12 + $0x3c] sm:$0xff]
    %v619 = vld [vmem:[#allocation12 + $0x44] sm:$0xf]
    %v620 = vld [vmem:[#allocation12 + $0x48] sm:$0xff]
    %v621 = vld [vmem:[#allocation12 + $0x50] sm:$0xf]
    %v622 = vld [vmem:[#allocation12 + $0x54] sm:$0xff]
    %v623 = vld [vmem:[#allocation12 + $0x5c] sm:$0xf]
    %v624 = vld [vmem:[#allocation12 + $0x60] sm:$0xff]
    %v625 = vld [vmem:[#allocation12 + $0x68] sm:$0xf]
    %v626 = vld [vmem:[#allocation12 + $0x6c] sm:$0xff]
    %v627 = vld [vmem:[#allocation12 + $0x74] sm:$0xf]
    %v628 = vld [vmem:[#allocation12 + $0x78] sm:$0xff]
    %v629 = vld [vmem:[#allocation12 + $0x80] sm:$0xf]
    %v630 = vld [vmem:[#allocation12 + $0x84] sm:$0xff]
    %v631 = vld [vmem:[#allocation12 + $0x8c] sm:$0xf]
    %v632 = vld [vmem:[#allocation12 + $0x90] sm:$0xff]
    %v633 = vld [vmem:[#allocation12 + $0x98] sm:$0xf]
    %v634 = vld [vmem:[#allocation12 + $0x9c] sm:$0xff]
    %v635 = vld [vmem:[#allocation12 + $0xa4] sm:$0xf]
    %v636 = vld [vmem:[#allocation12 + $0xa8] sm:$0xff]
    %v637 = vld [vmem:[#allocation12 + $0xb0] sm:$0xf]
    %v638 = vld [vmem:[#allocation12 + $0xb4] sm:$0xff]
    %v639 = vld [vmem:[#allocation12 + $0xbc] sm:$0xf]
    %v640 = vld [vmem:[%s4] sm:$0x7]
    %v642 = vlaneseq
    %v643 = vshrl.u32 %v642, 7
    %v644 = vsub.s32 0, %v643
    %v645 = vrot.slane %v640, %v644
    %v646 = vlaneseq
    %v647 = vshrl.u32 %v646, 7
    %v648 = vsub.s32 1, %v647
    %v649 = vrot.slane %v640, %v648
    %v650 = vlaneseq
    %v651 = vshrl.u32 %v650, 7
    %v652 = vsub.s32 2, %v651
    %v653 = vrot.slane %v640, %v652
    %v689 = vunpack.c.l.b16 %v608
    %v690 = vunpack.c.h.b16 %v608
    %v691 = vunpack.c.l.b16 %v609
    %v692 = vunpack.c.l.b16 %v610
    %v693 = vunpack.c.h.b16 %v610
    %v694 = vunpack.c.l.b16 %v611
    %v695 = vunpack.c.l.b16 %v612
    %v696 = vunpack.c.h.b16 %v612
    %v697 = vunpack.c.l.b16 %v613
    %v698 = vunpack.c.l.b16 %v614
    %v699 = vunpack.c.h.b16 %v614
    %v700 = vunpack.c.l.b16 %v615
    %v701 = vunpack.c.l.b16 %v616
    %v702 = vunpack.c.h.b16 %v616
    %v703 = vunpack.c.l.b16 %v617
    %v704 = vunpack.c.l.b16 %v618
    %v705 = vunpack.c.h.b16 %v618
    %v706 = vunpack.c.l.b16 %v619
    %v707 = vunpack.c.l.b16 %v620
    %v708 = vunpack.c.h.b16 %v620
    %v709 = vunpack.c.l.b16 %v621
    %v710 = vunpack.c.l.b16 %v622
    %v711 = vunpack.c.h.b16 %v622
    %v712 = vunpack.c.l.b16 %v623
    %v713 = vunpack.c.l.b16 %v624
    %v714 = vunpack.c.h.b16 %v624
    %v715 = vunpack.c.l.b16 %v625
    %v716 = vunpack.c.l.b16 %v626
    %v717 = vunpack.c.h.b16 %v626
    %v718 = vunpack.c.l.b16 %v627
    %v719 = vunpack.c.l.b16 %v628
    %v720 = vunpack.c.h.b16 %v628
    %v721 = vunpack.c.l.b16 %v629
    %v722 = vunpack.c.l.b16 %v630
    %v723 = vunpack.c.h.b16 %v630
    %v724 = vunpack.c.l.b16 %v631
    %v725 = vunpack.c.l.b16 %v632
    %v726 = vunpack.c.h.b16 %v632
    %v727 = vunpack.c.l.b16 %v633
    %v728 = vunpack.c.l.b16 %v634
    %v729 = vunpack.c.h.b16 %v634
    %v730 = vunpack.c.l.b16 %v635
    %v731 = vunpack.c.l.b16 %v636
    %v732 = vunpack.c.h.b16 %v636
    %v733 = vunpack.c.l.b16 %v637
    %v734 = vunpack.c.l.b16 %v638
    %v735 = vunpack.c.h.b16 %v638
    %v736 = vunpack.c.l.b16 %v639
    %v737 = vpack.c.b16 %v692, %v689
    %v738 = vpack.c.b16 %v693, %v690
    %v739 = vpack.c.b16 %v694, %v691
    %v740 = vpack.c.b16 %v698, %v695
    %v741 = vpack.c.b16 %v699, %v696
    %v742 = vpack.c.b16 %v700, %v697
    %v743 = vpack.c.b16 %v704, %v701
    %v744 = vpack.c.b16 %v705, %v702
    %v745 = vpack.c.b16 %v706, %v703
    %v746 = vpack.c.b16 %v710, %v707
    %v747 = vpack.c.b16 %v711, %v708
    %v748 = vpack.c.b16 %v712, %v709
    %v749 = vpack.c.b16 %v716, %v713
    %v750 = vpack.c.b16 %v717, %v714
    %v751 = vpack.c.b16 %v718, %v715
    %v752 = vpack.c.b16 %v722, %v719
    %v753 = vpack.c.b16 %v723, %v720
    %v754 = vpack.c.b16 %v724, %v721
    %v755 = vpack.c.b16 %v728, %v725
    %v756 = vpack.c.b16 %v729, %v726
    %v757 = vpack.c.b16 %v730, %v727
    %v758 = vpack.c.b16 %v734, %v731
    %v759 = vpack.c.b16 %v735, %v732
    %v760 = vpack.c.b16 %v736, %v733
    %785 = vmatprep.subr.bf16.mxu0 %v759
    %786 = vmatpush1.bf16.msra.mxu0 %v758
    %787 = vmatprep.subr.bf16.mxu0 %v756
    %788 = vmatpush1.bf16.msra.mxu0 %v755
    %789 = vmatprep.subr.bf16.mxu0 %v753
    %790 = vmatpush1.bf16.msra.mxu0 %v752
    %791 = vmatprep.subr.bf16.mxu0 %v750
    %792 = vmatpush1.bf16.msra.mxu0 %v749
    %793 = vmatprep.subr.bf16.mxu0 %v747
    %794 = vmatpush1.bf16.msra.mxu0 %v746
    %795 = vmatprep.subr.bf16.mxu0 %v744
    %796 = vmatpush1.bf16.msra.mxu0 %v743
    %797 = vmatprep.subr.bf16.mxu0 %v741
    %798 = vmatpush1.bf16.msra.mxu0 %v740
    %799 = vmatprep.subr.bf16.mxu0 %v738
    %800 = vmatpush1.bf16.msra.mxu0 %v737
    %801 = vmatprep.subr.bf16.mxu0 0
    %802 = vmatpush2.bf16.msra.mxu0 0
    %803 = vmatprep.subr.bf16.mxu0 0
    %804 = vmatpush2.bf16.msra.mxu0 0
    %805 = vmatprep.subr.bf16.mxu0 0
    %806 = vmatpush2.bf16.msra.mxu0 0
    %807 = vmatprep.subr.bf16.mxu0 0
    %808 = vmatpush2.bf16.msra.mxu0 0
    %809 = vmatprep.subr.bf16.mxu0 0
    %810 = vmatpush2.bf16.msra.mxu0 0
    %811 = vmatprep.subr.bf16.mxu0 0
    %812 = vmatpush2.bf16.msra.mxu0 0
    %813 = vmatprep.subr.bf16.mxu0 0
    %814 = vmatpush2.bf16.msra.mxu0 0
    %815 = vmatprep.subr.bf16.mxu0 0
    %816 = vmatpush2.bf16.msra.mxu0 0
    %817 = vmatprep.mubr.bf16.mxu0 0
    %818 = vmatmul.mubr.bf16.gmra.mxu0 %v592
    %v819 = vpop.f32.mrf.mxu0
    %v820 = vadd.f32 %v645, %v819
    %v821 = vpop.f32.mrf.mxu0
    %v822 = vadd.f32 %v649, %v821
    %v823 = vpop.f32.mrf.mxu0
    %v824 = vadd.f32 %v645, %v823
    %v825 = vpop.f32.mrf.mxu0
    %v826 = vadd.f32 %v649, %v825
    %827 = vmatprep.mubr.bf16.mxu0 0
    %828 = vmatmul.mubr.bf16.gmra.mxu0 %v593
    %v829 = vpop.f32.mrf.mxu0
    %v830 = vadd.f32 %v645, %v829
    %v831 = vpop.f32.mrf.mxu0
    %v832 = vadd.f32 %v649, %v831
    %v833 = vpop.f32.mrf.mxu0
    %v834 = vadd.f32 %v645, %v833
    %v835 = vpop.f32.mrf.mxu0
    %v836 = vadd.f32 %v649, %v835
    %837 = vmatprep.mubr.bf16.mxu0 0
    %838 = vmatmul.mubr.bf16.gmra.mxu0 %v594
    %v839 = vpop.f32.mrf.mxu0
    %v840 = vadd.f32 %v645, %v839
    %v841 = vpop.f32.mrf.mxu0
    %v842 = vadd.f32 %v649, %v841
    %v843 = vpop.f32.mrf.mxu0
    %v844 = vadd.f32 %v645, %v843
    %v845 = vpop.f32.mrf.mxu0
    %v846 = vadd.f32 %v649, %v845
    %847 = vmatprep.mubr.bf16.mxu0 0
    %848 = vmatmul.mubr.bf16.gmra.mxu0 %v595
    %v849 = vpop.f32.mrf.mxu0
    %v850 = vadd.f32 %v645, %v849
    %v851 = vpop.f32.mrf.mxu0
    %v852 = vadd.f32 %v649, %v851
    %v853 = vpop.f32.mrf.mxu0
    %v854 = vadd.f32 %v645, %v853
    %v855 = vpop.f32.mrf.mxu0
    %v856 = vadd.f32 %v649, %v855
    %857 = vmatprep.mubr.bf16.mxu0 0
    %858 = vmatmul.mubr.bf16.gmra.mxu0 %v596
    %v859 = vpop.f32.mrf.mxu0
    %v860 = vadd.f32 %v645, %v859
    %v861 = vpop.f32.mrf.mxu0
    %v862 = vadd.f32 %v649, %v861
    %v863 = vpop.f32.mrf.mxu0
    %v864 = vadd.f32 %v645, %v863
    %v865 = vpop.f32.mrf.mxu0
    %v866 = vadd.f32 %v649, %v865
    %867 = vmatprep.mubr.bf16.mxu0 0
    %868 = vmatmul.mubr.bf16.gmra.mxu0 %v597
    %v869 = vpop.f32.mrf.mxu0
    %v870 = vadd.f32 %v645, %v869
    %v871 = vpop.f32.mrf.mxu0
    %v872 = vadd.f32 %v649, %v871
    %v873 = vpop.f32.mrf.mxu0
    %v874 = vadd.f32 %v645, %v873
    %v875 = vpop.f32.mrf.mxu0
    %v876 = vadd.f32 %v649, %v875
    %877 = vmatprep.mubr.bf16.mxu0 0
    %878 = vmatmul.mubr.bf16.gmra.mxu0 %v598
    %v879 = vpop.f32.mrf.mxu0
    %v880 = vadd.f32 %v645, %v879
    %v881 = vpop.f32.mrf.mxu0
    %v882 = vadd.f32 %v649, %v881
    %v883 = vpop.f32.mrf.mxu0
    %v884 = vadd.f32 %v645, %v883
    %v885 = vpop.f32.mrf.mxu0
    %v886 = vadd.f32 %v649, %v885
    %887 = vmatprep.mubr.bf16.mxu0 0
    %888 = vmatmul.mubr.bf16.gmra.mxu0 %v599
    %v889 = vpop.f32.mrf.mxu0
    %v890 = vadd.f32 %v645, %v889
    %v891 = vpop.f32.mrf.mxu0
    %v892 = vadd.f32 %v649, %v891
    %v893 = vpop.f32.mrf.mxu0
    %v894 = vadd.f32 %v645, %v893
    %v895 = vpop.f32.mrf.mxu0
    %v896 = vadd.f32 %v649, %v895
    %897 = vmatprep.mubr.bf16.mxu0 0
    %898 = vmatmul.mubr.bf16.gmra.mxu0 %v600
    %v899 = vpop.f32.mrf.mxu0
    %v900 = vadd.f32 %v645, %v899
    %v901 = vpop.f32.mrf.mxu0
    %v902 = vadd.f32 %v649, %v901
    %v903 = vpop.f32.mrf.mxu0
    %v904 = vadd.f32 %v645, %v903
    %v905 = vpop.f32.mrf.mxu0
    %v906 = vadd.f32 %v649, %v905
    %907 = vmatprep.mubr.bf16.mxu0 0
    %908 = vmatmul.mubr.bf16.gmra.mxu0 %v601
    %v909 = vpop.f32.mrf.mxu0
    %v910 = vadd.f32 %v645, %v909
    %v911 = vpop.f32.mrf.mxu0
    %v912 = vadd.f32 %v649, %v911
    %v913 = vpop.f32.mrf.mxu0
    %v914 = vadd.f32 %v645, %v913
    %v915 = vpop.f32.mrf.mxu0
    %v916 = vadd.f32 %v649, %v915
    %917 = vmatprep.mubr.bf16.mxu0 0
    %918 = vmatmul.mubr.bf16.gmra.mxu0 %v602
    %v919 = vpop.f32.mrf.mxu0
    %v920 = vadd.f32 %v645, %v919
    %v921 = vpop.f32.mrf.mxu0
    %v922 = vadd.f32 %v649, %v921
    %v923 = vpop.f32.mrf.mxu0
    %v924 = vadd.f32 %v645, %v923
    %v925 = vpop.f32.mrf.mxu0
    %v926 = vadd.f32 %v649, %v925
    %927 = vmatprep.mubr.bf16.mxu0 0
    %928 = vmatmul.mubr.bf16.gmra.mxu0 %v603
    %v929 = vpop.f32.mrf.mxu0
    %v930 = vadd.f32 %v645, %v929
    %v931 = vpop.f32.mrf.mxu0
    %v932 = vadd.f32 %v649, %v931
    %v933 = vpop.f32.mrf.mxu0
    %v934 = vadd.f32 %v645, %v933
    %v935 = vpop.f32.mrf.mxu0
    %v936 = vadd.f32 %v649, %v935
    %937 = vmatprep.mubr.bf16.mxu0 0
    %938 = vmatmul.mubr.bf16.gmra.mxu0 %v604
    %v939 = vpop.f32.mrf.mxu0
    %v940 = vadd.f32 %v645, %v939
    %v941 = vpop.f32.mrf.mxu0
    %v942 = vadd.f32 %v649, %v941
    %v943 = vpop.f32.mrf.mxu0
    %v944 = vadd.f32 %v645, %v943
    %v945 = vpop.f32.mrf.mxu0
    %v946 = vadd.f32 %v649, %v945
    %947 = vmatprep.mubr.bf16.mxu0 0
    %948 = vmatmul.mubr.bf16.gmra.mxu0 %v605
    %v949 = vpop.f32.mrf.mxu0
    %v950 = vadd.f32 %v645, %v949
    %v951 = vpop.f32.mrf.mxu0
    %v952 = vadd.f32 %v649, %v951
    %v953 = vpop.f32.mrf.mxu0
    %v954 = vadd.f32 %v645, %v953
    %v955 = vpop.f32.mrf.mxu0
    %v956 = vadd.f32 %v649, %v955
    %957 = vmatprep.mubr.bf16.mxu0 0
    %958 = vmatmul.mubr.bf16.gmra.mxu0 %v606
    %v959 = vpop.f32.mrf.mxu0
    %v960 = vadd.f32 %v645, %v959
    %v961 = vpop.f32.mrf.mxu0
    %v962 = vadd.f32 %v649, %v961
    %v963 = vpop.f32.mrf.mxu0
    %v964 = vadd.f32 %v645, %v963
    %v965 = vpop.f32.mrf.mxu0
    %v966 = vadd.f32 %v649, %v965
    %967 = vmatprep.mubr.bf16.mxu0 0
    %968 = vmatmul.mubr.bf16.gmra.mxu0 %v607
    %v969 = vpop.f32.mrf.mxu0
    %v970 = vadd.f32 %v645, %v969
    %v971 = vpop.f32.mrf.mxu0
    %v972 = vadd.f32 %v649, %v971
    %v973 = vpop.f32.mrf.mxu0
    %v974 = vadd.f32 %v645, %v973
    %v975 = vpop.f32.mrf.mxu0
    %v976 = vadd.f32 %v649, %v975
    %977 = vdwg.mxu0
    %978 = vmatprep.subr.bf16.mxu0 0
    %979 = vmatpush1.bf16.msra.mxu0 %v760
    %980 = vmatprep.subr.bf16.mxu0 0
    %981 = vmatpush1.bf16.msra.mxu0 %v757
    %982 = vmatprep.subr.bf16.mxu0 0
    %983 = vmatpush1.bf16.msra.mxu0 %v754
    %984 = vmatprep.subr.bf16.mxu0 0
    %985 = vmatpush1.bf16.msra.mxu0 %v751
    %986 = vmatprep.subr.bf16.mxu0 0
    %987 = vmatpush1.bf16.msra.mxu0 %v748
    %988 = vmatprep.subr.bf16.mxu0 0
    %989 = vmatpush1.bf16.msra.mxu0 %v745
    %990 = vmatprep.subr.bf16.mxu0 0
    %991 = vmatpush1.bf16.msra.mxu0 %v742
    %992 = vmatprep.subr.bf16.mxu0 0
    %993 = vmatpush1.bf16.msra.mxu0 %v739
    %994 = vmatprep.subr.bf16.mxu0 0
    %995 = vmatpush2.bf16.msra.mxu0 0
    %996 = vmatprep.subr.bf16.mxu0 0
    %997 = vmatpush2.bf16.msra.mxu0 0
    %998 = vmatprep.subr.bf16.mxu0 0
    %999 = vmatpush2.bf16.msra.mxu0 0
    %1000 = vmatprep.subr.bf16.mxu0 0
    %1001 = vmatpush2.bf16.msra.mxu0 0
    %1002 = vmatprep.subr.bf16.mxu0 0
    %1003 = vmatpush2.bf16.msra.mxu0 0
    %1004 = vmatprep.subr.bf16.mxu0 0
    %1005 = vmatpush2.bf16.msra.mxu0 0
    %1006 = vmatprep.subr.bf16.mxu0 0
    %1007 = vmatpush2.bf16.msra.mxu0 0
    %1008 = vmatprep.subr.bf16.mxu0 0
    %1009 = vmatpush2.bf16.msra.mxu0 0
    %1010 = vmatprep.mubr.bf16.mxu0 0
    %1011 = vmatmul.mubr.bf16.gmra.mxu0 %v592
    %v1012 = vpop.f32.mrf.mxu0
    %v1013 = vadd.f32 %v653, %v1012
    %v1014 = vpop.f32.mrf.mxu0
    %v1015 = vpop.f32.mrf.mxu0
    %v1016 = vadd.f32 %v653, %v1015
    %v1017 = vpop.f32.mrf.mxu0
    %1018 = vmatprep.mubr.bf16.mxu0 0
    %1019 = vmatmul.mubr.bf16.gmra.mxu0 %v593
    %v1020 = vpop.f32.mrf.mxu0
    %v1021 = vadd.f32 %v653, %v1020
    %v1022 = vpop.f32.mrf.mxu0
    %v1023 = vpop.f32.mrf.mxu0
    %v1024 = vadd.f32 %v653, %v1023
    %v1025 = vpop.f32.mrf.mxu0
    %1026 = vmatprep.mubr.bf16.mxu0 0
    %1027 = vmatmul.mubr.bf16.gmra.mxu0 %v594
    %v1028 = vpop.f32.mrf.mxu0
    %v1029 = vadd.f32 %v653, %v1028
    %v1030 = vpop.f32.mrf.mxu0
    %v1031 = vpop.f32.mrf.mxu0
    %v1032 = vadd.f32 %v653, %v1031
    %v1033 = vpop.f32.mrf.mxu0
    %1034 = vmatprep.mubr.bf16.mxu0 0
    %1035 = vmatmul.mubr.bf16.gmra.mxu0 %v595
    %v1036 = vpop.f32.mrf.mxu0
    %v1037 = vadd.f32 %v653, %v1036
    %v1038 = vpop.f32.mrf.mxu0
    %v1039 = vpop.f32.mrf.mxu0
    %v1040 = vadd.f32 %v653, %v1039
    %v1041 = vpop.f32.mrf.mxu0
    %1042 = vmatprep.mubr.bf16.mxu0 0
    %1043 = vmatmul.mubr.bf16.gmra.mxu0 %v596
    %v1044 = vpop.f32.mrf.mxu0
    %v1045 = vadd.f32 %v653, %v1044
    %v1046 = vpop.f32.mrf.mxu0
    %v1047 = vpop.f32.mrf.mxu0
    %v1048 = vadd.f32 %v653, %v1047
    %v1049 = vpop.f32.mrf.mxu0
    %1050 = vmatprep.mubr.bf16.mxu0 0
    %1051 = vmatmul.mubr.bf16.gmra.mxu0 %v597
    %v1052 = vpop.f32.mrf.mxu0
    %v1053 = vadd.f32 %v653, %v1052
    %v1054 = vpop.f32.mrf.mxu0
    %v1055 = vpop.f32.mrf.mxu0
    %v1056 = vadd.f32 %v653, %v1055
    %v1057 = vpop.f32.mrf.mxu0
    %1058 = vmatprep.mubr.bf16.mxu0 0
    %1059 = vmatmul.mubr.bf16.gmra.mxu0 %v598
    %v1060 = vpop.f32.mrf.mxu0
    %v1061 = vadd.f32 %v653, %v1060
    %v1062 = vpop.f32.mrf.mxu0
    %v1063 = vpop.f32.mrf.mxu0
    %v1064 = vadd.f32 %v653, %v1063
    %v1065 = vpop.f32.mrf.mxu0
    %1066 = vmatprep.mubr.bf16.mxu0 0
    %1067 = vmatmul.mubr.bf16.gmra.mxu0 %v599
    %v1068 = vpop.f32.mrf.mxu0
    %v1069 = vadd.f32 %v653, %v1068
    %v1070 = vpop.f32.mrf.mxu0
    %v1071 = vpop.f32.mrf.mxu0
    %v1072 = vadd.f32 %v653, %v1071
    %v1073 = vpop.f32.mrf.mxu0
    %1074 = vmatprep.mubr.bf16.mxu0 0
    %1075 = vmatmul.mubr.bf16.gmra.mxu0 %v600
    %v1076 = vpop.f32.mrf.mxu0
    %v1077 = vadd.f32 %v653, %v1076
    %v1078 = vpop.f32.mrf.mxu0
    %v1079 = vpop.f32.mrf.mxu0
    %v1080 = vadd.f32 %v653, %v1079
    %v1081 = vpop.f32.mrf.mxu0
    %1082 = vmatprep.mubr.bf16.mxu0 0
    %1083 = vmatmul.mubr.bf16.gmra.mxu0 %v601
    %v1084 = vpop.f32.mrf.mxu0
    %v1085 = vadd.f32 %v653, %v1084
    %v1086 = vpop.f32.mrf.mxu0
    %v1087 = vpop.f32.mrf.mxu0
    %v1088 = vadd.f32 %v653, %v1087
    %v1089 = vpop.f32.mrf.mxu0
    %1090 = vmatprep.mubr.bf16.mxu0 0
    %1091 = vmatmul.mubr.bf16.gmra.mxu0 %v602
    %v1092 = vpop.f32.mrf.mxu0
    %v1093 = vadd.f32 %v653, %v1092
    %v1094 = vpop.f32.mrf.mxu0
    %v1095 = vpop.f32.mrf.mxu0
    %v1096 = vadd.f32 %v653, %v1095
    %v1097 = vpop.f32.mrf.mxu0
    %1098 = vmatprep.mubr.bf16.mxu0 0
    %1099 = vmatmul.mubr.bf16.gmra.mxu0 %v603
    %v1100 = vpop.f32.mrf.mxu0
    %v1101 = vadd.f32 %v653, %v1100
    %v1102 = vpop.f32.mrf.mxu0
    %v1103 = vpop.f32.mrf.mxu0
    %v1104 = vadd.f32 %v653, %v1103
    %v1105 = vpop.f32.mrf.mxu0
    %1106 = vmatprep.mubr.bf16.mxu0 0
    %1107 = vmatmul.mubr.bf16.gmra.mxu0 %v604
    %v1108 = vpop.f32.mrf.mxu0
    %v1109 = vadd.f32 %v653, %v1108
    %v1110 = vpop.f32.mrf.mxu0
    %v1111 = vpop.f32.mrf.mxu0
    %v1112 = vadd.f32 %v653, %v1111
    %v1113 = vpop.f32.mrf.mxu0
    %1114 = vmatprep.mubr.bf16.mxu0 0
    %1115 = vmatmul.mubr.bf16.gmra.mxu0 %v605
    %v1116 = vpop.f32.mrf.mxu0
    %v1117 = vadd.f32 %v653, %v1116
    %v1118 = vpop.f32.mrf.mxu0
    %v1119 = vpop.f32.mrf.mxu0
    %v1120 = vadd.f32 %v653, %v1119
    %v1121 = vpop.f32.mrf.mxu0
    %1122 = vmatprep.mubr.bf16.mxu0 0
    %1123 = vmatmul.mubr.bf16.gmra.mxu0 %v606
    %v1124 = vpop.f32.mrf.mxu0
    %v1125 = vadd.f32 %v653, %v1124
    %v1126 = vpop.f32.mrf.mxu0
    %v1127 = vpop.f32.mrf.mxu0
    %v1128 = vadd.f32 %v653, %v1127
    %v1129 = vpop.f32.mrf.mxu0
    %1130 = vmatprep.mubr.bf16.mxu0 0
    %1131 = vmatmul.mubr.bf16.gmra.mxu0 %v607
    %v1132 = vpop.f32.mrf.mxu0
    %v1133 = vadd.f32 %v653, %v1132
    %v1134 = vpop.f32.mrf.mxu0
    %v1135 = vpop.f32.mrf.mxu0
    %v1136 = vadd.f32 %v653, %v1135
    %v1137 = vpop.f32.mrf.mxu0
    %1138 = vdwg.mxu0
    %v1139 = vpack.c.bf16 %v824, %v820
    %v1140 = vpack.c.bf16 %v834, %v830
    %v1141 = vpack.c.bf16 %v844, %v840
    %v1142 = vpack.c.bf16 %v854, %v850
    %v1143 = vpack.c.bf16 %v864, %v860
    %v1144 = vpack.c.bf16 %v874, %v870
    %v1145 = vpack.c.bf16 %v884, %v880
    %v1146 = vpack.c.bf16 %v894, %v890
    %v1147 = vpack.c.bf16 %v904, %v900
    %v1148 = vpack.c.bf16 %v914, %v910
    %v1149 = vpack.c.bf16 %v924, %v920
    %v1150 = vpack.c.bf16 %v934, %v930
    %v1151 = vpack.c.bf16 %v944, %v940
    %v1152 = vpack.c.bf16 %v954, %v950
    %v1153 = vpack.c.bf16 %v964, %v960
    %v1154 = vpack.c.bf16 %v974, %v970
    %v1155 = vpack.c.bf16 %v826, %v822
    %v1156 = vpack.c.bf16 %v836, %v832
    %v1157 = vpack.c.bf16 %v846, %v842
    %v1158 = vpack.c.bf16 %v856, %v852
    %v1159 = vpack.c.bf16 %v866, %v862
    %v1160 = vpack.c.bf16 %v876, %v872
    %v1161 = vpack.c.bf16 %v886, %v882
    %v1162 = vpack.c.bf16 %v896, %v892
    %v1163 = vpack.c.bf16 %v906, %v902
    %v1164 = vpack.c.bf16 %v916, %v912
    %v1165 = vpack.c.bf16 %v926, %v922
    %v1166 = vpack.c.bf16 %v936, %v932
    %v1167 = vpack.c.bf16 %v946, %v942
    %v1168 = vpack.c.bf16 %v956, %v952
    %v1169 = vpack.c.bf16 %v966, %v962
    %v1170 = vpack.c.bf16 %v976, %v972
    %v1171 = vpack.c.bf16 %v1016, %v1013
    %v1172 = vpack.c.bf16 %v1024, %v1021
    %v1173 = vpack.c.bf16 %v1032, %v1029
    %v1174 = vpack.c.bf16 %v1040, %v1037
    %v1175 = vpack.c.bf16 %v1048, %v1045
    %v1176 = vpack.c.bf16 %v1056, %v1053
    %v1177 = vpack.c.bf16 %v1064, %v1061
    %v1178 = vpack.c.bf16 %v1072, %v1069
    %v1179 = vpack.c.bf16 %v1080, %v1077
    %v1180 = vpack.c.bf16 %v1088, %v1085
    %v1181 = vpack.c.bf16 %v1096, %v1093
    %v1182 = vpack.c.bf16 %v1104, %v1101
    %v1183 = vpack.c.bf16 %v1112, %v1109
    %v1184 = vpack.c.bf16 %v1120, %v1117
    %v1185 = vpack.c.bf16 %v1128, %v1125
    %v1186 = vpack.c.bf16 %v1136, %v1133
    %vm1187 = vcmask 523264
    %v1189 = vsel %vm1187, %v1139, 0
    %v1192 = vsel %vm1187, %v1140, 0
    %v1195 = vsel %vm1187, %v1141, 0
    %v1198 = vsel %vm1187, %v1142, 0
    %v1201 = vsel %vm1187, %v1143, 0
    %v1204 = vsel %vm1187, %v1144, 0
    %v1207 = vsel %vm1187, %v1145, 0
    %v1210 = vsel %vm1187, %v1146, 0
    %v1213 = vsel %vm1187, %v1155, 0
    %v1216 = vsel %vm1187, %v1156, 0
    %v1219 = vsel %vm1187, %v1157, 0
    %v1222 = vsel %vm1187, %v1158, 0
    %v1225 = vsel %vm1187, %v1159, 0
    %v1228 = vsel %vm1187, %v1160, 0
    %v1231 = vsel %vm1187, %v1161, 0
    %v1234 = vsel %vm1187, %v1162, 0
    %1236 = vmatprep.subr.bf16.mxu0 0
    %1237 = vmatpush1.bf16.xpose.msra.mxu0 %v1234
    %1238 = vmatprep.subr.bf16.mxu0 0
    %1239 = vmatpush1.bf16.xpose.msra.mxu0 %v1231
    %1240 = vmatprep.subr.bf16.mxu0 0
    %1241 = vmatpush1.bf16.xpose.msra.mxu0 %v1228
    %1242 = vmatprep.subr.bf16.mxu0 0
    %1243 = vmatpush1.bf16.xpose.msra.mxu0 %v1225
    %1244 = vmatprep.subr.bf16.mxu0 0
    %1245 = vmatpush1.bf16.xpose.msra.mxu0 %v1222
    %1246 = vmatprep.subr.bf16.mxu0 0
    %1247 = vmatpush1.bf16.xpose.msra.mxu0 %v1219
    %1248 = vmatprep.subr.bf16.mxu0 0
    %1249 = vmatpush1.bf16.xpose.msra.mxu0 %v1216
    %1250 = vmatprep.subr.bf16.mxu0 0
    %1251 = vmatpush1.bf16.xpose.msra.mxu0 %v1213
    %1252 = vmatprep.subr.bf16.mxu0 0
    %1253 = vmatpush2.bf16.xpose.msra.mxu0 0
    %1254 = vmatprep.subr.bf16.mxu0 0
    %1255 = vmatpush2.bf16.xpose.msra.mxu0 0
    %1256 = vmatprep.subr.bf16.mxu0 0
    %1257 = vmatpush2.bf16.xpose.msra.mxu0 0
    %1258 = vmatprep.subr.bf16.mxu0 0
    %1259 = vmatpush2.bf16.xpose.msra.mxu0 0
    %1260 = vmatprep.subr.bf16.mxu0 0
    %1261 = vmatpush2.bf16.xpose.msra.mxu0 0
    %1262 = vmatprep.subr.bf16.mxu0 0
    %1263 = vmatpush2.bf16.xpose.msra.mxu0 0
    %1264 = vmatprep.subr.bf16.mxu0 0
    %1265 = vmatpush2.bf16.xpose.msra.mxu0 0
    %1266 = vmatprep.subr.bf16.mxu0 0
    %1267 = vmatpush2.bf16.xpose.msra.mxu0 0
    %1268 = vmatprep.mubr.bf16.mxu0 0
    %1269 = vmatmul.mubr.bf16.gmra.mxu0 %v1189
    %v1270 = vpop.f32.mrf.mxu0
    %v1271 = vadd.f32 0.0, %v1270
    %v1272 = vpop.f32.mrf.mxu0
    %v1273 = vpop.f32.mrf.mxu0
    %v1274 = vadd.f32 0.0, %v1273
    %v1275 = vpop.f32.mrf.mxu0
    %1276 = vmatprep.mubr.bf16.mxu0 0
    %1277 = vmatmul.mubr.bf16.gmra.mxu0 %v1192
    %v1278 = vpop.f32.mrf.mxu0
    %v1279 = vadd.f32 0.0, %v1278
    %v1280 = vpop.f32.mrf.mxu0
    %v1281 = vpop.f32.mrf.mxu0
    %v1282 = vadd.f32 0.0, %v1281
    %v1283 = vpop.f32.mrf.mxu0
    %1284 = vmatprep.mubr.bf16.mxu0 0
    %1285 = vmatmul.mubr.bf16.gmra.mxu0 %v1195
    %v1286 = vpop.f32.mrf.mxu0
    %v1287 = vadd.f32 0.0, %v1286
    %v1288 = vpop.f32.mrf.mxu0
    %v1289 = vpop.f32.mrf.mxu0
    %v1290 = vadd.f32 0.0, %v1289
    %v1291 = vpop.f32.mrf.mxu0
    %1292 = vmatprep.mubr.bf16.mxu0 0
    %1293 = vmatmul.mubr.bf16.gmra.mxu0 %v1198
    %v1294 = vpop.f32.mrf.mxu0
    %v1295 = vadd.f32 0.0, %v1294
    %v1296 = vpop.f32.mrf.mxu0
    %v1297 = vpop.f32.mrf.mxu0
    %v1298 = vadd.f32 0.0, %v1297
    %v1299 = vpop.f32.mrf.mxu0
    %1300 = vmatprep.mubr.bf16.mxu0 0
    %1301 = vmatmul.mubr.bf16.gmra.mxu0 %v1201
    %v1302 = vpop.f32.mrf.mxu0
    %v1303 = vadd.f32 0.0, %v1302
    %v1304 = vpop.f32.mrf.mxu0
    %v1305 = vpop.f32.mrf.mxu0
    %v1306 = vadd.f32 0.0, %v1305
    %v1307 = vpop.f32.mrf.mxu0
    %1308 = vmatprep.mubr.bf16.mxu0 0
    %1309 = vmatmul.mubr.bf16.gmra.mxu0 %v1204
    %v1310 = vpop.f32.mrf.mxu0
    %v1311 = vadd.f32 0.0, %v1310
    %v1312 = vpop.f32.mrf.mxu0
    %v1313 = vpop.f32.mrf.mxu0
    %v1314 = vadd.f32 0.0, %v1313
    %v1315 = vpop.f32.mrf.mxu0
    %1316 = vmatprep.mubr.bf16.mxu0 0
    %1317 = vmatmul.mubr.bf16.gmra.mxu0 %v1207
    %v1318 = vpop.f32.mrf.mxu0
    %v1319 = vadd.f32 0.0, %v1318
    %v1320 = vpop.f32.mrf.mxu0
    %v1321 = vpop.f32.mrf.mxu0
    %v1322 = vadd.f32 0.0, %v1321
    %v1323 = vpop.f32.mrf.mxu0
    %1324 = vmatprep.mubr.bf16.mxu0 0
    %1325 = vmatmul.mubr.bf16.gmra.mxu0 %v1210
    %v1326 = vpop.f32.mrf.mxu0
    %v1327 = vadd.f32 0.0, %v1326
    %v1328 = vpop.f32.mrf.mxu0
    %v1329 = vpop.f32.mrf.mxu0
    %v1330 = vadd.f32 0.0, %v1329
    %v1331 = vpop.f32.mrf.mxu0
    %1332 = vdwg.mxu0
    %v1334 = vsel %vm1187, %v1147, 0
    %v1337 = vsel %vm1187, %v1148, 0
    %v1340 = vsel %vm1187, %v1149, 0
    %v1343 = vsel %vm1187, %v1150, 0
    %v1346 = vsel %vm1187, %v1151, 0
    %v1349 = vsel %vm1187, %v1152, 0
    %v1352 = vsel %vm1187, %v1153, 0
    %v1355 = vsel %vm1187, %v1154, 0
    %v1358 = vsel %vm1187, %v1163, 0
    %v1361 = vsel %vm1187, %v1164, 0
    %v1364 = vsel %vm1187, %v1165, 0
    %v1367 = vsel %vm1187, %v1166, 0
    %v1370 = vsel %vm1187, %v1167, 0
    %v1373 = vsel %vm1187, %v1168, 0
    %v1376 = vsel %vm1187, %v1169, 0
    %v1379 = vsel %vm1187, %v1170, 0
    %1381 = vmatprep.subr.bf16.mxu0 0
    %1382 = vmatpush1.bf16.xpose.msra.mxu0 %v1379
    %1383 = vmatprep.subr.bf16.mxu0 0
    %1384 = vmatpush1.bf16.xpose.msra.mxu0 %v1376
    %1385 = vmatprep.subr.bf16.mxu0 0
    %1386 = vmatpush1.bf16.xpose.msra.mxu0 %v1373
    %1387 = vmatprep.subr.bf16.mxu0 0
    %1388 = vmatpush1.bf16.xpose.msra.mxu0 %v1370
    %1389 = vmatprep.subr.bf16.mxu0 0
    %1390 = vmatpush1.bf16.xpose.msra.mxu0 %v1367
    %1391 = vmatprep.subr.bf16.mxu0 0
    %1392 = vmatpush1.bf16.xpose.msra.mxu0 %v1364
    %1393 = vmatprep.subr.bf16.mxu0 0
    %1394 = vmatpush1.bf16.xpose.msra.mxu0 %v1361
    %1395 = vmatprep.subr.bf16.mxu0 0
    %1396 = vmatpush1.bf16.xpose.msra.mxu0 %v1358
    %1397 = vmatprep.subr.bf16.mxu0 0
    %1398 = vmatpush2.bf16.xpose.msra.mxu0 0
    %1399 = vmatprep.subr.bf16.mxu0 0
    %1400 = vmatpush2.bf16.xpose.msra.mxu0 0
    %1401 = vmatprep.subr.bf16.mxu0 0
    %1402 = vmatpush2.bf16.xpose.msra.mxu0 0
    %1403 = vmatprep.subr.bf16.mxu0 0
    %1404 = vmatpush2.bf16.xpose.msra.mxu0 0
    %1405 = vmatprep.subr.bf16.mxu0 0
    %1406 = vmatpush2.bf16.xpose.msra.mxu0 0
    %1407 = vmatprep.subr.bf16.mxu0 0
    %1408 = vmatpush2.bf16.xpose.msra.mxu0 0
    %1409 = vmatprep.subr.bf16.mxu0 0
    %1410 = vmatpush2.bf16.xpose.msra.mxu0 0
    %1411 = vmatprep.subr.bf16.mxu0 0
    %1412 = vmatpush2.bf16.xpose.msra.mxu0 0
    %1413 = vmatprep.mubr.bf16.mxu0 0
    %1414 = vmatmul.mubr.bf16.gmra.mxu0 %v1334
    %v1415 = vpop.f32.mrf.mxu0
    %v1416 = vadd.f32 0.0, %v1415
    %v1417 = vpop.f32.mrf.mxu0
    %v1418 = vpop.f32.mrf.mxu0
    %v1419 = vadd.f32 0.0, %v1418
    %v1420 = vpop.f32.mrf.mxu0
    %1421 = vmatprep.mubr.bf16.mxu0 0
    %1422 = vmatmul.mubr.bf16.gmra.mxu0 %v1337
    %v1423 = vpop.f32.mrf.mxu0
    %v1424 = vadd.f32 0.0, %v1423
    %v1425 = vpop.f32.mrf.mxu0
    %v1426 = vpop.f32.mrf.mxu0
    %v1427 = vadd.f32 0.0, %v1426
    %v1428 = vpop.f32.mrf.mxu0
    %1429 = vmatprep.mubr.bf16.mxu0 0
    %1430 = vmatmul.mubr.bf16.gmra.mxu0 %v1340
    %v1431 = vpop.f32.mrf.mxu0
    %v1432 = vadd.f32 0.0, %v1431
    %v1433 = vpop.f32.mrf.mxu0
    %v1434 = vpop.f32.mrf.mxu0
    %v1435 = vadd.f32 0.0, %v1434
    %v1436 = vpop.f32.mrf.mxu0
    %1437 = vmatprep.mubr.bf16.mxu0 0
    %1438 = vmatmul.mubr.bf16.gmra.mxu0 %v1343
    %v1439 = vpop.f32.mrf.mxu0
    %v1440 = vadd.f32 0.0, %v1439
    %v1441 = vpop.f32.mrf.mxu0
    %v1442 = vpop.f32.mrf.mxu0
    %v1443 = vadd.f32 0.0, %v1442
    %v1444 = vpop.f32.mrf.mxu0
    %1445 = vmatprep.mubr.bf16.mxu0 0
    %1446 = vmatmul.mubr.bf16.gmra.mxu0 %v1346
    %v1447 = vpop.f32.mrf.mxu0
    %v1448 = vadd.f32 0.0, %v1447
    %v1449 = vpop.f32.mrf.mxu0
    %v1450 = vpop.f32.mrf.mxu0
    %v1451 = vadd.f32 0.0, %v1450
    %v1452 = vpop.f32.mrf.mxu0
    %1453 = vmatprep.mubr.bf16.mxu0 0
    %1454 = vmatmul.mubr.bf16.gmra.mxu0 %v1349
    %v1455 = vpop.f32.mrf.mxu0
    %v1456 = vadd.f32 0.0, %v1455
    %v1457 = vpop.f32.mrf.mxu0
    %v1458 = vpop.f32.mrf.mxu0
    %v1459 = vadd.f32 0.0, %v1458
    %v1460 = vpop.f32.mrf.mxu0
    %1461 = vmatprep.mubr.bf16.mxu0 0
    %1462 = vmatmul.mubr.bf16.gmra.mxu0 %v1352
    %v1463 = vpop.f32.mrf.mxu0
    %v1464 = vadd.f32 0.0, %v1463
    %v1465 = vpop.f32.mrf.mxu0
    %v1466 = vpop.f32.mrf.mxu0
    %v1467 = vadd.f32 0.0, %v1466
    %v1468 = vpop.f32.mrf.mxu0
    %1469 = vmatprep.mubr.bf16.mxu0 0
    %1470 = vmatmul.mubr.bf16.gmra.mxu0 %v1355
    %v1471 = vpop.f32.mrf.mxu0
    %v1472 = vadd.f32 0.0, %v1471
    %v1473 = vpop.f32.mrf.mxu0
    %v1474 = vpop.f32.mrf.mxu0
    %v1475 = vadd.f32 0.0, %v1474
    %v1476 = vpop.f32.mrf.mxu0
    %1477 = vdwg.mxu0
    %1478 = vmax.xlane.f32.xlu0 %v1271
    %v1479 = vpop.xlane.xlu0 %1478
    %1480 = vmax.xlane.f32.xlu0 %v1274
    %v1481 = vpop.xlane.xlu0 %1480
    %1482 = vmax.xlane.f32.xlu0 %v1279
    %v1483 = vpop.xlane.xlu0 %1482
    %1484 = vmax.xlane.f32.xlu0 %v1282
    %v1485 = vpop.xlane.xlu0 %1484
    %1486 = vmax.xlane.f32.xlu0 %v1287
    %v1487 = vpop.xlane.xlu0 %1486
    %1488 = vmax.xlane.f32.xlu0 %v1290
    %v1489 = vpop.xlane.xlu0 %1488
    %1490 = vmax.xlane.f32.xlu0 %v1295
    %v1491 = vpop.xlane.xlu0 %1490
    %1492 = vmax.xlane.f32.xlu0 %v1298
    %v1493 = vpop.xlane.xlu0 %1492
    %1494 = vmax.xlane.f32.xlu0 %v1303
    %v1495 = vpop.xlane.xlu0 %1494
    %1496 = vmax.xlane.f32.xlu0 %v1306
    %v1497 = vpop.xlane.xlu0 %1496
    %1498 = vmax.xlane.f32.xlu0 %v1311
    %v1499 = vpop.xlane.xlu0 %1498
    %1500 = vmax.xlane.f32.xlu0 %v1314
    %v1501 = vpop.xlane.xlu0 %1500
    %1502 = vmax.xlane.f32.xlu0 %v1319
    %v1503 = vpop.xlane.xlu0 %1502
    %1504 = vmax.xlane.f32.xlu0 %v1322
    %v1505 = vpop.xlane.xlu0 %1504
    %1506 = vmax.xlane.f32.xlu0 %v1327
    %v1507 = vpop.xlane.xlu0 %1506
    %1508 = vmax.xlane.f32.xlu0 %v1330
    %v1509 = vpop.xlane.xlu0 %1508
    %1510 = vmax.xlane.f32.xlu0 %v1416
    %v1511 = vpop.xlane.xlu0 %1510
    %1512 = vmax.xlane.f32.xlu0 %v1419
    %v1513 = vpop.xlane.xlu0 %1512
    %1514 = vmax.xlane.f32.xlu0 %v1424
    %v1515 = vpop.xlane.xlu0 %1514
    %1516 = vmax.xlane.f32.xlu0 %v1427
    %v1517 = vpop.xlane.xlu0 %1516
    %1518 = vmax.xlane.f32.xlu0 %v1432
    %v1519 = vpop.xlane.xlu0 %1518
    %1520 = vmax.xlane.f32.xlu0 %v1435
    %v1521 = vpop.xlane.xlu0 %1520
    %1522 = vmax.xlane.f32.xlu0 %v1440
    %v1523 = vpop.xlane.xlu0 %1522
    %1524 = vmax.xlane.f32.xlu0 %v1443
    %v1525 = vpop.xlane.xlu0 %1524
    %1526 = vmax.xlane.f32.xlu0 %v1448
    %v1527 = vpop.xlane.xlu0 %1526
    %1528 = vmax.xlane.f32.xlu0 %v1451
    %v1529 = vpop.xlane.xlu0 %1528
    %1530 = vmax.xlane.f32.xlu0 %v1456
    %v1531 = vpop.xlane.xlu0 %1530
    %1532 = vmax.xlane.f32.xlu0 %v1459
    %v1533 = vpop.xlane.xlu0 %1532
    %1534 = vmax.xlane.f32.xlu0 %v1464
    %v1535 = vpop.xlane.xlu0 %1534
    %1536 = vmax.xlane.f32.xlu0 %v1467
    %v1537 = vpop.xlane.xlu0 %1536
    %1538 = vmax.xlane.f32.xlu0 %v1472
    %v1539 = vpop.xlane.xlu0 %1538
    %1540 = vmax.xlane.f32.xlu0 %v1475
    %v1541 = vpop.xlane.xlu0 %1540
    %v1542 = vsub.f32 %v1271, %v1479
    %v1543 = vsub.f32 %v1274, %v1481
    %v1544 = vsub.f32 %v1279, %v1483
    %v1545 = vsub.f32 %v1282, %v1485
    %v1546 = vsub.f32 %v1287, %v1487
    %v1547 = vsub.f32 %v1290, %v1489
    %v1548 = vsub.f32 %v1295, %v1491
    %v1549 = vsub.f32 %v1298, %v1493
    %v1550 = vsub.f32 %v1303, %v1495
    %v1551 = vsub.f32 %v1306, %v1497
    %v1552 = vsub.f32 %v1311, %v1499
    %v1553 = vsub.f32 %v1314, %v1501
    %v1554 = vsub.f32 %v1319, %v1503
    %v1555 = vsub.f32 %v1322, %v1505
    %v1556 = vsub.f32 %v1327, %v1507
    %v1557 = vsub.f32 %v1330, %v1509
    %v1558 = vsub.f32 %v1416, %v1511
    %v1559 = vsub.f32 %v1419, %v1513
    %v1560 = vsub.f32 %v1424, %v1515
    %v1561 = vsub.f32 %v1427, %v1517
    %v1562 = vsub.f32 %v1432, %v1519
    %v1563 = vsub.f32 %v1435, %v1521
    %v1564 = vsub.f32 %v1440, %v1523
    %v1565 = vsub.f32 %v1443, %v1525
    %v1566 = vsub.f32 %v1448, %v1527
    %v1567 = vsub.f32 %v1451, %v1529
    %v1568 = vsub.f32 %v1456, %v1531
    %v1569 = vsub.f32 %v1459, %v1533
    %v1570 = vsub.f32 %v1464, %v1535
    %v1571 = vsub.f32 %v1467, %v1537
    %v1572 = vsub.f32 %v1472, %v1539
    %v1573 = vsub.f32 %v1475, %v1541
    %v1574 = vmul.f32 %v1542, 1.442695
    %v1575 = vpow.pop %v1574
    %v1576 = vmul.f32 %v1543, 1.442695
    %v1577 = vpow.pop %v1576
    %v1578 = vmul.f32 %v1544, 1.442695
    %v1579 = vpow.pop %v1578
    %v1580 = vmul.f32 %v1545, 1.442695
    %v1581 = vpow.pop %v1580
    %v1582 = vmul.f32 %v1546, 1.442695
    %v1583 = vpow.pop %v1582
    %v1584 = vmul.f32 %v1547, 1.442695
    %v1585 = vpow.pop %v1584
    %v1586 = vmul.f32 %v1548, 1.442695
    %v1587 = vpow.pop %v1586
    %v1588 = vmul.f32 %v1549, 1.442695
    %v1589 = vpow.pop %v1588
    %v1590 = vmul.f32 %v1550, 1.442695
    %v1591 = vpow.pop %v1590
    %v1592 = vmul.f32 %v1551, 1.442695
    %v1593 = vpow.pop %v1592
    %v1594 = vmul.f32 %v1552, 1.442695
    %v1595 = vpow.pop %v1594
    %v1596 = vmul.f32 %v1553, 1.442695
    %v1597 = vpow.pop %v1596
    %v1598 = vmul.f32 %v1554, 1.442695
    %v1599 = vpow.pop %v1598
    %v1600 = vmul.f32 %v1555, 1.442695
    %v1601 = vpow.pop %v1600
    %v1602 = vmul.f32 %v1556, 1.442695
    %v1603 = vpow.pop %v1602
    %v1604 = vmul.f32 %v1557, 1.442695
    %v1605 = vpow.pop %v1604
    %v1606 = vmul.f32 %v1558, 1.442695
    %v1607 = vpow.pop %v1606
    %v1608 = vmul.f32 %v1559, 1.442695
    %v1609 = vpow.pop %v1608
    %v1610 = vmul.f32 %v1560, 1.442695
    %v1611 = vpow.pop %v1610
    %v1612 = vmul.f32 %v1561, 1.442695
    %v1613 = vpow.pop %v1612
    %v1614 = vmul.f32 %v1562, 1.442695
    %v1615 = vpow.pop %v1614
    %v1616 = vmul.f32 %v1563, 1.442695
    %v1617 = vpow.pop %v1616
    %v1618 = vmul.f32 %v1564, 1.442695
    %v1619 = vpow.pop %v1618
    %v1620 = vmul.f32 %v1565, 1.442695
    %v1621 = vpow.pop %v1620
    %v1622 = vmul.f32 %v1566, 1.442695
    %v1623 = vpow.pop %v1622
    %v1624 = vmul.f32 %v1567, 1.442695
    %v1625 = vpow.pop %v1624
    %v1626 = vmul.f32 %v1568, 1.442695
    %v1627 = vpow.pop %v1626
    %v1628 = vmul.f32 %v1569, 1.442695
    %v1629 = vpow.pop %v1628
    %v1630 = vmul.f32 %v1570, 1.442695
    %v1631 = vpow.pop %v1630
    %v1632 = vmul.f32 %v1571, 1.442695
    %v1633 = vpow.pop %v1632
    %v1634 = vmul.f32 %v1572, 1.442695
    %v1635 = vpow.pop %v1634
    %v1636 = vmul.f32 %v1573, 1.442695
    %v1637 = vpow.pop %v1636
    %1638 = vadd.xlane.f32.xlu0 %v1575
    %v1639 = vpop.xlane.xlu0 %1638
    %1640 = vadd.xlane.f32.xlu0 %v1577
    %v1641 = vpop.xlane.xlu0 %1640
    %1642 = vadd.xlane.f32.xlu0 %v1579
    %v1643 = vpop.xlane.xlu0 %1642
    %1644 = vadd.xlane.f32.xlu0 %v1581
    %v1645 = vpop.xlane.xlu0 %1644
    %1646 = vadd.xlane.f32.xlu0 %v1583
    %v1647 = vpop.xlane.xlu0 %1646
    %1648 = vadd.xlane.f32.xlu0 %v1585
    %v1649 = vpop.xlane.xlu0 %1648
    %1650 = vadd.xlane.f32.xlu0 %v1587
    %v1651 = vpop.xlane.xlu0 %1650
    %1652 = vadd.xlane.f32.xlu0 %v1589
    %v1653 = vpop.xlane.xlu0 %1652
    %1654 = vadd.xlane.f32.xlu0 %v1591
    %v1655 = vpop.xlane.xlu0 %1654
    %1656 = vadd.xlane.f32.xlu0 %v1593
    %v1657 = vpop.xlane.xlu0 %1656
    %1658 = vadd.xlane.f32.xlu0 %v1595
    %v1659 = vpop.xlane.xlu0 %1658
    %1660 = vadd.xlane.f32.xlu0 %v1597
    %v1661 = vpop.xlane.xlu0 %1660
    %1662 = vadd.xlane.f32.xlu0 %v1599
    %v1663 = vpop.xlane.xlu0 %1662
    %1664 = vadd.xlane.f32.xlu0 %v1601
    %v1665 = vpop.xlane.xlu0 %1664
    %1666 = vadd.xlane.f32.xlu0 %v1603
    %v1667 = vpop.xlane.xlu0 %1666
    %1668 = vadd.xlane.f32.xlu0 %v1605
    %v1669 = vpop.xlane.xlu0 %1668
    %1670 = vadd.xlane.f32.xlu0 %v1607
    %v1671 = vpop.xlane.xlu0 %1670
    %1672 = vadd.xlane.f32.xlu0 %v1609
    %v1673 = vpop.xlane.xlu0 %1672
    %1674 = vadd.xlane.f32.xlu0 %v1611
    %v1675 = vpop.xlane.xlu0 %1674
    %1676 = vadd.xlane.f32.xlu0 %v1613
    %v1677 = vpop.xlane.xlu0 %1676
    %1678 = vadd.xlane.f32.xlu0 %v1615
    %v1679 = vpop.xlane.xlu0 %1678
    %1680 = vadd.xlane.f32.xlu0 %v1617
    %v1681 = vpop.xlane.xlu0 %1680
    %1682 = vadd.xlane.f32.xlu0 %v1619
    %v1683 = vpop.xlane.xlu0 %1682
    %1684 = vadd.xlane.f32.xlu0 %v1621
    %v1685 = vpop.xlane.xlu0 %1684
    %1686 = vadd.xlane.f32.xlu0 %v1623
    %v1687 = vpop.xlane.xlu0 %1686
    %1688 = vadd.xlane.f32.xlu0 %v1625
    %v1689 = vpop.xlane.xlu0 %1688
    %1690 = vadd.xlane.f32.xlu0 %v1627
    %v1691 = vpop.xlane.xlu0 %1690
    %1692 = vadd.xlane.f32.xlu0 %v1629
    %v1693 = vpop.xlane.xlu0 %1692
    %1694 = vadd.xlane.f32.xlu0 %v1631
    %v1695 = vpop.xlane.xlu0 %1694
    %1696 = vadd.xlane.f32.xlu0 %v1633
    %v1697 = vpop.xlane.xlu0 %1696
    %1698 = vadd.xlane.f32.xlu0 %v1635
    %v1699 = vpop.xlane.xlu0 %1698
    %1700 = vadd.xlane.f32.xlu0 %v1637
    %v1701 = vpop.xlane.xlu0 %1700
    %v1702 = vrcp.pop %v1639
    %v1703 = vrcp.pop %v1641
    %v1704 = vrcp.pop %v1643
    %v1705 = vrcp.pop %v1645
    %v1706 = vrcp.pop %v1647
    %v1707 = vrcp.pop %v1649
    %v1708 = vrcp.pop %v1651
    %v1709 = vrcp.pop %v1653
    %v1710 = vrcp.pop %v1655
    %v1711 = vrcp.pop %v1657
    %v1712 = vrcp.pop %v1659
    %v1713 = vrcp.pop %v1661
    %v1714 = vrcp.pop %v1663
    %v1715 = vrcp.pop %v1665
    %v1716 = vrcp.pop %v1667
    %v1717 = vrcp.pop %v1669
    %v1718 = vrcp.pop %v1671
    %v1719 = vrcp.pop %v1673
    %v1720 = vrcp.pop %v1675
    %v1721 = vrcp.pop %v1677
    %v1722 = vrcp.pop %v1679
    %v1723 = vrcp.pop %v1681
    %v1724 = vrcp.pop %v1683
    %v1725 = vrcp.pop %v1685
    %v1726 = vrcp.pop %v1687
    %v1727 = vrcp.pop %v1689
    %v1728 = vrcp.pop %v1691
    %v1729 = vrcp.pop %v1693
    %v1730 = vrcp.pop %v1695
    %v1731 = vrcp.pop %v1697
    %v1732 = vrcp.pop %v1699
    %v1733 = vrcp.pop %v1701
    %v1734 = vmul.f32 %v1575, %v1702
    %v1735 = vmul.f32 %v1577, %v1703
    %v1736 = vmul.f32 %v1579, %v1704
    %v1737 = vmul.f32 %v1581, %v1705
    %v1738 = vmul.f32 %v1583, %v1706
    %v1739 = vmul.f32 %v1585, %v1707
    %v1740 = vmul.f32 %v1587, %v1708
    %v1741 = vmul.f32 %v1589, %v1709
    %v1742 = vmul.f32 %v1591, %v1710
    %v1743 = vmul.f32 %v1593, %v1711
    %v1744 = vmul.f32 %v1595, %v1712
    %v1745 = vmul.f32 %v1597, %v1713
    %v1746 = vmul.f32 %v1599, %v1714
    %v1747 = vmul.f32 %v1601, %v1715
    %v1748 = vmul.f32 %v1603, %v1716
    %v1749 = vmul.f32 %v1605, %v1717
    %v1750 = vmul.f32 %v1607, %v1718
    %v1751 = vmul.f32 %v1609, %v1719
    %v1752 = vmul.f32 %v1611, %v1720
    %v1753 = vmul.f32 %v1613, %v1721
    %v1754 = vmul.f32 %v1615, %v1722
    %v1755 = vmul.f32 %v1617, %v1723
    %v1756 = vmul.f32 %v1619, %v1724
    %v1757 = vmul.f32 %v1621, %v1725
    %v1758 = vmul.f32 %v1623, %v1726
    %v1759 = vmul.f32 %v1625, %v1727
    %v1760 = vmul.f32 %v1627, %v1728
    %v1761 = vmul.f32 %v1629, %v1729
    %v1762 = vmul.f32 %v1631, %v1730
    %v1763 = vmul.f32 %v1633, %v1731
    %v1764 = vmul.f32 %v1635, %v1732
    %v1765 = vmul.f32 %v1637, %v1733
    %v1766 = vpack.c.bf16 %v1735, %v1734
    %v1767 = vpack.c.bf16 %v1737, %v1736
    %v1768 = vpack.c.bf16 %v1739, %v1738
    %v1769 = vpack.c.bf16 %v1741, %v1740
    %v1770 = vpack.c.bf16 %v1743, %v1742
    %v1771 = vpack.c.bf16 %v1745, %v1744
    %v1772 = vpack.c.bf16 %v1747, %v1746
    %v1773 = vpack.c.bf16 %v1749, %v1748
    %v1774 = vpack.c.bf16 %v1751, %v1750
    %v1775 = vpack.c.bf16 %v1753, %v1752
    %v1776 = vpack.c.bf16 %v1755, %v1754
    %v1777 = vpack.c.bf16 %v1757, %v1756
    %v1778 = vpack.c.bf16 %v1759, %v1758
    %v1779 = vpack.c.bf16 %v1761, %v1760
    %v1780 = vpack.c.bf16 %v1763, %v1762
    %v1781 = vpack.c.bf16 %v1765, %v1764
    %1782 = vmatprep.subr.bf16.mxu0 0
    %1783 = vmatpush1.bf16.msra.mxu0 %v1178
    %1784 = vmatprep.subr.bf16.mxu0 0
    %1785 = vmatpush1.bf16.msra.mxu0 %v1177
    %1786 = vmatprep.subr.bf16.mxu0 0
    %1787 = vmatpush1.bf16.msra.mxu0 %v1176
    %1788 = vmatprep.subr.bf16.mxu0 0
    %1789 = vmatpush1.bf16.msra.mxu0 %v1175
    %1790 = vmatprep.subr.bf16.mxu0 0
    %1791 = vmatpush1.bf16.msra.mxu0 %v1174
    %1792 = vmatprep.subr.bf16.mxu0 0
    %1793 = vmatpush1.bf16.msra.mxu0 %v1173
    %1794 = vmatprep.subr.bf16.mxu0 0
    %1795 = vmatpush1.bf16.msra.mxu0 %v1172
    %1796 = vmatprep.subr.bf16.mxu0 0
    %1797 = vmatpush1.bf16.msra.mxu0 %v1171
    %1798 = vmatprep.subr.bf16.mxu0 0
    %1799 = vmatpush2.bf16.msra.mxu0 0
    %1800 = vmatprep.subr.bf16.mxu0 0
    %1801 = vmatpush2.bf16.msra.mxu0 0
    %1802 = vmatprep.subr.bf16.mxu0 0
    %1803 = vmatpush2.bf16.msra.mxu0 0
    %1804 = vmatprep.subr.bf16.mxu0 0
    %1805 = vmatpush2.bf16.msra.mxu0 0
    %1806 = vmatprep.subr.bf16.mxu0 0
    %1807 = vmatpush2.bf16.msra.mxu0 0
    %1808 = vmatprep.subr.bf16.mxu0 0
    %1809 = vmatpush2.bf16.msra.mxu0 0
    %1810 = vmatprep.subr.bf16.mxu0 0
    %1811 = vmatpush2.bf16.msra.mxu0 0
    %1812 = vmatprep.subr.bf16.mxu0 0
    %1813 = vmatpush2.bf16.msra.mxu0 0
    %1814 = vmatprep.mubr.bf16.mxu0 0
    %1815 = vmatmul.mubr.bf16.gmra.mxu0 %v1766
    %v1816 = vpop.f32.mrf.mxu0
    %v1817 = vadd.f32 0.0, %v1816
    %v1818 = vpop.f32.mrf.mxu0
    %v1819 = vpop.f32.mrf.mxu0
    %v1820 = vadd.f32 0.0, %v1819
    %v1821 = vpop.f32.mrf.mxu0
    %1822 = vmatprep.mubr.bf16.mxu0 0
    %1823 = vmatmul.mubr.bf16.gmra.mxu0 %v1767
    %v1824 = vpop.f32.mrf.mxu0
    %v1825 = vadd.f32 0.0, %v1824
    %v1826 = vpop.f32.mrf.mxu0
    %v1827 = vpop.f32.mrf.mxu0
    %v1828 = vadd.f32 0.0, %v1827
    %v1829 = vpop.f32.mrf.mxu0
    %1830 = vmatprep.mubr.bf16.mxu0 0
    %1831 = vmatmul.mubr.bf16.gmra.mxu0 %v1768
    %v1832 = vpop.f32.mrf.mxu0
    %v1833 = vadd.f32 0.0, %v1832
    %v1834 = vpop.f32.mrf.mxu0
    %v1835 = vpop.f32.mrf.mxu0
    %v1836 = vadd.f32 0.0, %v1835
    %v1837 = vpop.f32.mrf.mxu0
    %1838 = vmatprep.mubr.bf16.mxu0 0
    %1839 = vmatmul.mubr.bf16.gmra.mxu0 %v1769
    %v1840 = vpop.f32.mrf.mxu0
    %v1841 = vadd.f32 0.0, %v1840
    %v1842 = vpop.f32.mrf.mxu0
    %v1843 = vpop.f32.mrf.mxu0
    %v1844 = vadd.f32 0.0, %v1843
    %v1845 = vpop.f32.mrf.mxu0
    %1846 = vmatprep.mubr.bf16.mxu0 0
    %1847 = vmatmul.mubr.bf16.gmra.mxu0 %v1770
    %v1848 = vpop.f32.mrf.mxu0
    %v1849 = vadd.f32 0.0, %v1848
    %v1850 = vpop.f32.mrf.mxu0
    %v1851 = vpop.f32.mrf.mxu0
    %v1852 = vadd.f32 0.0, %v1851
    %v1853 = vpop.f32.mrf.mxu0
    %1854 = vmatprep.mubr.bf16.mxu0 0
    %1855 = vmatmul.mubr.bf16.gmra.mxu0 %v1771
    %v1856 = vpop.f32.mrf.mxu0
    %v1857 = vadd.f32 0.0, %v1856
    %v1858 = vpop.f32.mrf.mxu0
    %v1859 = vpop.f32.mrf.mxu0
    %v1860 = vadd.f32 0.0, %v1859
    %v1861 = vpop.f32.mrf.mxu0
    %1862 = vmatprep.mubr.bf16.mxu0 0
    %1863 = vmatmul.mubr.bf16.gmra.mxu0 %v1772
    %v1864 = vpop.f32.mrf.mxu0
    %v1865 = vadd.f32 0.0, %v1864
    %v1866 = vpop.f32.mrf.mxu0
    %v1867 = vpop.f32.mrf.mxu0
    %v1868 = vadd.f32 0.0, %v1867
    %v1869 = vpop.f32.mrf.mxu0
    %1870 = vmatprep.mubr.bf16.mxu0 0
    %1871 = vmatmul.mubr.bf16.gmra.mxu0 %v1773
    %v1872 = vpop.f32.mrf.mxu0
    %v1873 = vadd.f32 0.0, %v1872
    %v1874 = vpop.f32.mrf.mxu0
    %v1875 = vpop.f32.mrf.mxu0
    %v1876 = vadd.f32 0.0, %v1875
    %v1877 = vpop.f32.mrf.mxu0
    %1878 = vdwg.mxu0
    %1879 = vmatprep.subr.bf16.mxu0 0
    %1880 = vmatpush1.bf16.msra.mxu0 %v1186
    %1881 = vmatprep.subr.bf16.mxu0 0
    %1882 = vmatpush1.bf16.msra.mxu0 %v1185
    %1883 = vmatprep.subr.bf16.mxu0 0
    %1884 = vmatpush1.bf16.msra.mxu0 %v1184
    %1885 = vmatprep.subr.bf16.mxu0 0
    %1886 = vmatpush1.bf16.msra.mxu0 %v1183
    %1887 = vmatprep.subr.bf16.mxu0 0
    %1888 = vmatpush1.bf16.msra.mxu0 %v1182
    %1889 = vmatprep.subr.bf16.mxu0 0
    %1890 = vmatpush1.bf16.msra.mxu0 %v1181
    %1891 = vmatprep.subr.bf16.mxu0 0
    %1892 = vmatpush1.bf16.msra.mxu0 %v1180
    %1893 = vmatprep.subr.bf16.mxu0 0
    %1894 = vmatpush1.bf16.msra.mxu0 %v1179
    %1895 = vmatprep.subr.bf16.mxu0 0
    %1896 = vmatpush2.bf16.msra.mxu0 0
    %1897 = vmatprep.subr.bf16.mxu0 0
    %1898 = vmatpush2.bf16.msra.mxu0 0
    %1899 = vmatprep.subr.bf16.mxu0 0
    %1900 = vmatpush2.bf16.msra.mxu0 0
    %1901 = vmatprep.subr.bf16.mxu0 0
    %1902 = vmatpush2.bf16.msra.mxu0 0
    %1903 = vmatprep.subr.bf16.mxu0 0
    %1904 = vmatpush2.bf16.msra.mxu0 0
    %1905 = vmatprep.subr.bf16.mxu0 0
    %1906 = vmatpush2.bf16.msra.mxu0 0
    %1907 = vmatprep.subr.bf16.mxu0 0
    %1908 = vmatpush2.bf16.msra.mxu0 0
    %1909 = vmatprep.subr.bf16.mxu0 0
    %1910 = vmatpush2.bf16.msra.mxu0 0
    %1911 = vmatprep.mubr.bf16.mxu0 0
    %1912 = vmatmul.mubr.bf16.gmra.mxu0 %v1774
    %v1913 = vpop.f32.mrf.mxu0
    %v1914 = vadd.f32 0.0, %v1913
    %v1915 = vpop.f32.mrf.mxu0
    %v1916 = vpop.f32.mrf.mxu0
    %v1917 = vadd.f32 0.0, %v1916
    %v1918 = vpop.f32.mrf.mxu0
    %1919 = vmatprep.mubr.bf16.mxu0 0
    %1920 = vmatmul.mubr.bf16.gmra.mxu0 %v1775
    %v1921 = vpop.f32.mrf.mxu0
    %v1922 = vadd.f32 0.0, %v1921
    %v1923 = vpop.f32.mrf.mxu0
    %v1924 = vpop.f32.mrf.mxu0
    %v1925 = vadd.f32 0.0, %v1924
    %v1926 = vpop.f32.mrf.mxu0
    %1927 = vmatprep.mubr.bf16.mxu0 0
    %1928 = vmatmul.mubr.bf16.gmra.mxu0 %v1776
    %v1929 = vpop.f32.mrf.mxu0
    %v1930 = vadd.f32 0.0, %v1929
    %v1931 = vpop.f32.mrf.mxu0
    %v1932 = vpop.f32.mrf.mxu0
    %v1933 = vadd.f32 0.0, %v1932
    %v1934 = vpop.f32.mrf.mxu0
    %1935 = vmatprep.mubr.bf16.mxu0 0
    %1936 = vmatmul.mubr.bf16.gmra.mxu0 %v1777
    %v1937 = vpop.f32.mrf.mxu0
    %v1938 = vadd.f32 0.0, %v1937
    %v1939 = vpop.f32.mrf.mxu0
    %v1940 = vpop.f32.mrf.mxu0
    %v1941 = vadd.f32 0.0, %v1940
    %v1942 = vpop.f32.mrf.mxu0
    %1943 = vmatprep.mubr.bf16.mxu0 0
    %1944 = vmatmul.mubr.bf16.gmra.mxu0 %v1778
    %v1945 = vpop.f32.mrf.mxu0
    %v1946 = vadd.f32 0.0, %v1945
    %v1947 = vpop.f32.mrf.mxu0
    %v1948 = vpop.f32.mrf.mxu0
    %v1949 = vadd.f32 0.0, %v1948
    %v1950 = vpop.f32.mrf.mxu0
    %1951 = vmatprep.mubr.bf16.mxu0 0
    %1952 = vmatmul.mubr.bf16.gmra.mxu0 %v1779
    %v1953 = vpop.f32.mrf.mxu0
    %v1954 = vadd.f32 0.0, %v1953
    %v1955 = vpop.f32.mrf.mxu0
    %v1956 = vpop.f32.mrf.mxu0
    %v1957 = vadd.f32 0.0, %v1956
    %v1958 = vpop.f32.mrf.mxu0
    %1959 = vmatprep.mubr.bf16.mxu0 0
    %1960 = vmatmul.mubr.bf16.gmra.mxu0 %v1780
    %v1961 = vpop.f32.mrf.mxu0
    %v1962 = vadd.f32 0.0, %v1961
    %v1963 = vpop.f32.mrf.mxu0
    %v1964 = vpop.f32.mrf.mxu0
    %v1965 = vadd.f32 0.0, %v1964
    %v1966 = vpop.f32.mrf.mxu0
    %1967 = vmatprep.mubr.bf16.mxu0 0
    %1968 = vmatmul.mubr.bf16.gmra.mxu0 %v1781
    %v1969 = vpop.f32.mrf.mxu0
    %v1970 = vadd.f32 0.0, %v1969
    %v1971 = vpop.f32.mrf.mxu0
    %v1972 = vpop.f32.mrf.mxu0
    %v1973 = vadd.f32 0.0, %v1972
    %v1974 = vpop.f32.mrf.mxu0
    %1975 = vdwg.mxu0
    %1984 = vrot.lane.b32.xlu0 %v1139, 64
    %v1985 = vpop.permute.xlu0 %1984
    %1986 = vrot.lane.b32.xlu0 %v1140, 64
    %v1987 = vpop.permute.xlu0 %1986
    %1988 = vrot.lane.b32.xlu0 %v1141, 64
    %v1989 = vpop.permute.xlu0 %1988
    %1990 = vrot.lane.b32.xlu0 %v1142, 64
    %v1991 = vpop.permute.xlu0 %1990
    %1992 = vrot.lane.b32.xlu0 %v1143, 64
    %v1993 = vpop.permute.xlu0 %1992
    %1994 = vrot.lane.b32.xlu0 %v1144, 64
    %v1995 = vpop.permute.xlu0 %1994
    %1996 = vrot.lane.b32.xlu0 %v1145, 64
    %v1997 = vpop.permute.xlu0 %1996
    %1998 = vrot.lane.b32.xlu0 %v1146, 64
    %v1999 = vpop.permute.xlu0 %1998
    %2008 = vrot.lane.b32.xlu0 %v1155, 64
    %v2009 = vpop.permute.xlu0 %2008
    %2010 = vrot.lane.b32.xlu0 %v1156, 64
    %v2011 = vpop.permute.xlu0 %2010
    %2012 = vrot.lane.b32.xlu0 %v1157, 64
    %v2013 = vpop.permute.xlu0 %2012
    %2014 = vrot.lane.b32.xlu0 %v1158, 64
    %v2015 = vpop.permute.xlu0 %2014
    %2016 = vrot.lane.b32.xlu0 %v1159, 64
    %v2017 = vpop.permute.xlu0 %2016
    %2018 = vrot.lane.b32.xlu0 %v1160, 64
    %v2019 = vpop.permute.xlu0 %2018
    %2020 = vrot.lane.b32.xlu0 %v1161, 64
    %v2021 = vpop.permute.xlu0 %2020
    %2022 = vrot.lane.b32.xlu0 %v1162, 64
    %v2023 = vpop.permute.xlu0 %2022
    %v2025 = vsel %vm1187, %v1985, 0
    %v2028 = vsel %vm1187, %v1987, 0
    %v2031 = vsel %vm1187, %v1989, 0
    %v2034 = vsel %vm1187, %v1991, 0
    %v2037 = vsel %vm1187, %v1993, 0
    %v2040 = vsel %vm1187, %v1995, 0
    %v2043 = vsel %vm1187, %v1997, 0
    %v2046 = vsel %vm1187, %v1999, 0
    %v2049 = vsel %vm1187, %v2009, 0
    %v2052 = vsel %vm1187, %v2011, 0
    %v2055 = vsel %vm1187, %v2013, 0
    %v2058 = vsel %vm1187, %v2015, 0
    %v2061 = vsel %vm1187, %v2017, 0
    %v2064 = vsel %vm1187, %v2019, 0
    %v2067 = vsel %vm1187, %v2021, 0
    %v2070 = vsel %vm1187, %v2023, 0
    %2072 = vmatprep.subr.bf16.mxu0 0
    %2073 = vmatpush1.bf16.xpose.msra.mxu0 %v2070
    %2074 = vmatprep.subr.bf16.mxu0 0
    %2075 = vmatpush1.bf16.xpose.msra.mxu0 %v2067
    %2076 = vmatprep.subr.bf16.mxu0 0
    %2077 = vmatpush1.bf16.xpose.msra.mxu0 %v2064
    %2078 = vmatprep.subr.bf16.mxu0 0
    %2079 = vmatpush1.bf16.xpose.msra.mxu0 %v2061
    %2080 = vmatprep.subr.bf16.mxu0 0
    %2081 = vmatpush1.bf16.xpose.msra.mxu0 %v2058
    %2082 = vmatprep.subr.bf16.mxu0 0
    %2083 = vmatpush1.bf16.xpose.msra.mxu0 %v2055
    %2084 = vmatprep.subr.bf16.mxu0 0
    %2085 = vmatpush1.bf16.xpose.msra.mxu0 %v2052
    %2086 = vmatprep.subr.bf16.mxu0 0
    %2087 = vmatpush1.bf16.xpose.msra.mxu0 %v2049
    %2088 = vmatprep.subr.bf16.mxu0 0
    %2089 = vmatpush2.bf16.xpose.msra.mxu0 0
    %2090 = vmatprep.subr.bf16.mxu0 0
    %2091 = vmatpush2.bf16.xpose.msra.mxu0 0
    %2092 = vmatprep.subr.bf16.mxu0 0
    %2093 = vmatpush2.bf16.xpose.msra.mxu0 0
    %2094 = vmatprep.subr.bf16.mxu0 0
    %2095 = vmatpush2.bf16.xpose.msra.mxu0 0
    %2096 = vmatprep.subr.bf16.mxu0 0
    %2097 = vmatpush2.bf16.xpose.msra.mxu0 0
    %2098 = vmatprep.subr.bf16.mxu0 0
    %2099 = vmatpush2.bf16.xpose.msra.mxu0 0
    %2100 = vmatprep.subr.bf16.mxu0 0
    %2101 = vmatpush2.bf16.xpose.msra.mxu0 0
    %2102 = vmatprep.subr.bf16.mxu0 0
    %2103 = vmatpush2.bf16.xpose.msra.mxu0 0
    %2104 = vmatprep.mubr.bf16.mxu0 0
    %2105 = vmatmul.mubr.bf16.gmra.mxu0 %v2025
    %v2106 = vpop.f32.mrf.mxu0
    %v2107 = vadd.f32 0.0, %v2106
    %v2108 = vpop.f32.mrf.mxu0
    %v2109 = vpop.f32.mrf.mxu0
    %v2110 = vadd.f32 0.0, %v2109
    %v2111 = vpop.f32.mrf.mxu0
    %2112 = vmatprep.mubr.bf16.mxu0 0
    %2113 = vmatmul.mubr.bf16.gmra.mxu0 %v2028
    %v2114 = vpop.f32.mrf.mxu0
    %v2115 = vadd.f32 0.0, %v2114
    %v2116 = vpop.f32.mrf.mxu0
    %v2117 = vpop.f32.mrf.mxu0
    %v2118 = vadd.f32 0.0, %v2117
    %v2119 = vpop.f32.mrf.mxu0
    %2120 = vmatprep.mubr.bf16.mxu0 0
    %2121 = vmatmul.mubr.bf16.gmra.mxu0 %v2031
    %v2122 = vpop.f32.mrf.mxu0
    %v2123 = vadd.f32 0.0, %v2122
    %v2124 = vpop.f32.mrf.mxu0
    %v2125 = vpop.f32.mrf.mxu0
    %v2126 = vadd.f32 0.0, %v2125
    %v2127 = vpop.f32.mrf.mxu0
    %2128 = vmatprep.mubr.bf16.mxu0 0
    %2129 = vmatmul.mubr.bf16.gmra.mxu0 %v2034
    %v2130 = vpop.f32.mrf.mxu0
    %v2131 = vadd.f32 0.0, %v2130
    %v2132 = vpop.f32.mrf.mxu0
    %v2133 = vpop.f32.mrf.mxu0
    %v2134 = vadd.f32 0.0, %v2133
    %v2135 = vpop.f32.mrf.mxu0
    %2136 = vmatprep.mubr.bf16.mxu0 0
    %2137 = vmatmul.mubr.bf16.gmra.mxu0 %v2037
    %v2138 = vpop.f32.mrf.mxu0
    %v2139 = vadd.f32 0.0, %v2138
    %v2140 = vpop.f32.mrf.mxu0
    %v2141 = vpop.f32.mrf.mxu0
    %v2142 = vadd.f32 0.0, %v2141
    %v2143 = vpop.f32.mrf.mxu0
    %2144 = vmatprep.mubr.bf16.mxu0 0
    %2145 = vmatmul.mubr.bf16.gmra.mxu0 %v2040
    %v2146 = vpop.f32.mrf.mxu0
    %v2147 = vadd.f32 0.0, %v2146
    %v2148 = vpop.f32.mrf.mxu0
    %v2149 = vpop.f32.mrf.mxu0
    %v2150 = vadd.f32 0.0, %v2149
    %v2151 = vpop.f32.mrf.mxu0
    %2152 = vmatprep.mubr.bf16.mxu0 0
    %2153 = vmatmul.mubr.bf16.gmra.mxu0 %v2043
    %v2154 = vpop.f32.mrf.mxu0
    %v2155 = vadd.f32 0.0, %v2154
    %v2156 = vpop.f32.mrf.mxu0
    %v2157 = vpop.f32.mrf.mxu0
    %v2158 = vadd.f32 0.0, %v2157
    %v2159 = vpop.f32.mrf.mxu0
    %2160 = vmatprep.mubr.bf16.mxu0 0
    %2161 = vmatmul.mubr.bf16.gmra.mxu0 %v2046
    %v2162 = vpop.f32.mrf.mxu0
    %v2163 = vadd.f32 0.0, %v2162
    %v2164 = vpop.f32.mrf.mxu0
    %v2165 = vpop.f32.mrf.mxu0
    %v2166 = vadd.f32 0.0, %v2165
    %v2167 = vpop.f32.mrf.mxu0
    %2168 = vdwg.mxu0
    %2177 = vrot.lane.b32.xlu0 %v1147, 64
    %v2178 = vpop.permute.xlu0 %2177
    %2179 = vrot.lane.b32.xlu0 %v1148, 64
    %v2180 = vpop.permute.xlu0 %2179
    %2181 = vrot.lane.b32.xlu0 %v1149, 64
    %v2182 = vpop.permute.xlu0 %2181
    %2183 = vrot.lane.b32.xlu0 %v1150, 64
    %v2184 = vpop.permute.xlu0 %2183
    %2185 = vrot.lane.b32.xlu0 %v1151, 64
    %v2186 = vpop.permute.xlu0 %2185
    %2187 = vrot.lane.b32.xlu0 %v1152, 64
    %v2188 = vpop.permute.xlu0 %2187
    %2189 = vrot.lane.b32.xlu0 %v1153, 64
    %v2190 = vpop.permute.xlu0 %2189
    %2191 = vrot.lane.b32.xlu0 %v1154, 64
    %v2192 = vpop.permute.xlu0 %2191
    %2201 = vrot.lane.b32.xlu0 %v1163, 64
    %v2202 = vpop.permute.xlu0 %2201
    %2203 = vrot.lane.b32.xlu0 %v1164, 64
    %v2204 = vpop.permute.xlu0 %2203
    %2205 = vrot.lane.b32.xlu0 %v1165, 64
    %v2206 = vpop.permute.xlu0 %2205
    %2207 = vrot.lane.b32.xlu0 %v1166, 64
    %v2208 = vpop.permute.xlu0 %2207
    %2209 = vrot.lane.b32.xlu0 %v1167, 64
    %v2210 = vpop.permute.xlu0 %2209
    %2211 = vrot.lane.b32.xlu0 %v1168, 64
    %v2212 = vpop.permute.xlu0 %2211
    %2213 = vrot.lane.b32.xlu0 %v1169, 64
    %v2214 = vpop.permute.xlu0 %2213
    %2215 = vrot.lane.b32.xlu0 %v1170, 64
    %v2216 = vpop.permute.xlu0 %2215
    %v2218 = vsel %vm1187, %v2178, 0
    %v2221 = vsel %vm1187, %v2180, 0
    %v2224 = vsel %vm1187, %v2182, 0
    %v2227 = vsel %vm1187, %v2184, 0
    %v2230 = vsel %vm1187, %v2186, 0
    %v2233 = vsel %vm1187, %v2188, 0
    %v2236 = vsel %vm1187, %v2190, 0
    %v2239 = vsel %vm1187, %v2192, 0
    %v2242 = vsel %vm1187, %v2202, 0
    %v2245 = vsel %vm1187, %v2204, 0
    %v2248 = vsel %vm1187, %v2206, 0
    %v2251 = vsel %vm1187, %v2208, 0
    %v2254 = vsel %vm1187, %v2210, 0
    %v2257 = vsel %vm1187, %v2212, 0
    %v2260 = vsel %vm1187, %v2214, 0
    %v2263 = vsel %vm1187, %v2216, 0
    %2265 = vmatprep.subr.bf16.mxu0 0
    %2266 = vmatpush1.bf16.xpose.msra.mxu0 %v2263
    %2267 = vmatprep.subr.bf16.mxu0 0
    %2268 = vmatpush1.bf16.xpose.msra.mxu0 %v2260
    %2269 = vmatprep.subr.bf16.mxu0 0
    %2270 = vmatpush1.bf16.xpose.msra.mxu0 %v2257
    %2271 = vmatprep.subr.bf16.mxu0 0
    %2272 = vmatpush1.bf16.xpose.msra.mxu0 %v2254
    %2273 = vmatprep.subr.bf16.mxu0 0
    %2274 = vmatpush1.bf16.xpose.msra.mxu0 %v2251
    %2275 = vmatprep.subr.bf16.mxu0 0
    %2276 = vmatpush1.bf16.xpose.msra.mxu0 %v2248
    %2277 = vmatprep.subr.bf16.mxu0 0
    %2278 = vmatpush1.bf16.xpose.msra.mxu0 %v2245
    %2279 = vmatprep.subr.bf16.mxu0 0
    %2280 = vmatpush1.bf16.xpose.msra.mxu0 %v2242
    %2281 = vmatprep.subr.bf16.mxu0 0
    %2282 = vmatpush2.bf16.xpose.msra.mxu0 0
    %2283 = vmatprep.subr.bf16.mxu0 0
    %2284 = vmatpush2.bf16.xpose.msra.mxu0 0
    %2285 = vmatprep.subr.bf16.mxu0 0
    %2286 = vmatpush2.bf16.xpose.msra.mxu0 0
    %2287 = vmatprep.subr.bf16.mxu0 0
    %2288 = vmatpush2.bf16.xpose.msra.mxu0 0
    %2289 = vmatprep.subr.bf16.mxu0 0
    %2290 = vmatpush2.bf16.xpose.msra.mxu0 0
    %2291 = vmatprep.subr.bf16.mxu0 0
    %2292 = vmatpush2.bf16.xpose.msra.mxu0 0
    %2293 = vmatprep.subr.bf16.mxu0 0
    %2294 = vmatpush2.bf16.xpose.msra.mxu0 0
    %2295 = vmatprep.subr.bf16.mxu0 0
    %2296 = vmatpush2.bf16.xpose.msra.mxu0 0
    %2297 = vmatprep.mubr.bf16.mxu0 0
    %2298 = vmatmul.mubr.bf16.gmra.mxu0 %v2218
    %v2299 = vpop.f32.mrf.mxu0
    %v2300 = vadd.f32 0.0, %v2299
    %v2301 = vpop.f32.mrf.mxu0
    %v2302 = vpop.f32.mrf.mxu0
    %v2303 = vadd.f32 0.0, %v2302
    %v2304 = vpop.f32.mrf.mxu0
    %2305 = vmatprep.mubr.bf16.mxu0 0
    %2306 = vmatmul.mubr.bf16.gmra.mxu0 %v2221
    %v2307 = vpop.f32.mrf.mxu0
    %v2308 = vadd.f32 0.0, %v2307
    %v2309 = vpop.f32.mrf.mxu0
    %v2310 = vpop.f32.mrf.mxu0
    %v2311 = vadd.f32 0.0, %v2310
    %v2312 = vpop.f32.mrf.mxu0
    %2313 = vmatprep.mubr.bf16.mxu0 0
    %2314 = vmatmul.mubr.bf16.gmra.mxu0 %v2224
    %v2315 = vpop.f32.mrf.mxu0
    %v2316 = vadd.f32 0.0, %v2315
    %v2317 = vpop.f32.mrf.mxu0
    %v2318 = vpop.f32.mrf.mxu0
    %v2319 = vadd.f32 0.0, %v2318
    %v2320 = vpop.f32.mrf.mxu0
    %2321 = vmatprep.mubr.bf16.mxu0 0
    %2322 = vmatmul.mubr.bf16.gmra.mxu0 %v2227
    %v2323 = vpop.f32.mrf.mxu0
    %v2324 = vadd.f32 0.0, %v2323
    %v2325 = vpop.f32.mrf.mxu0
    %v2326 = vpop.f32.mrf.mxu0
    %v2327 = vadd.f32 0.0, %v2326
    %v2328 = vpop.f32.mrf.mxu0
    %2329 = vmatprep.mubr.bf16.mxu0 0
    %2330 = vmatmul.mubr.bf16.gmra.mxu0 %v2230
    %v2331 = vpop.f32.mrf.mxu0
    %v2332 = vadd.f32 0.0, %v2331
    %v2333 = vpop.f32.mrf.mxu0
    %v2334 = vpop.f32.mrf.mxu0
    %v2335 = vadd.f32 0.0, %v2334
    %v2336 = vpop.f32.mrf.mxu0
    %2337 = vmatprep.mubr.bf16.mxu0 0
    %2338 = vmatmul.mubr.bf16.gmra.mxu0 %v2233
    %v2339 = vpop.f32.mrf.mxu0
    %v2340 = vadd.f32 0.0, %v2339
    %v2341 = vpop.f32.mrf.mxu0
    %v2342 = vpop.f32.mrf.mxu0
    %v2343 = vadd.f32 0.0, %v2342
    %v2344 = vpop.f32.mrf.mxu0
    %2345 = vmatprep.mubr.bf16.mxu0 0
    %2346 = vmatmul.mubr.bf16.gmra.mxu0 %v2236
    %v2347 = vpop.f32.mrf.mxu0
    %v2348 = vadd.f32 0.0, %v2347
    %v2349 = vpop.f32.mrf.mxu0
    %v2350 = vpop.f32.mrf.mxu0
    %v2351 = vadd.f32 0.0, %v2350
    %v2352 = vpop.f32.mrf.mxu0
    %2353 = vmatprep.mubr.bf16.mxu0 0
    %2354 = vmatmul.mubr.bf16.gmra.mxu0 %v2239
    %v2355 = vpop.f32.mrf.mxu0
    %v2356 = vadd.f32 0.0, %v2355
    %v2357 = vpop.f32.mrf.mxu0
    %v2358 = vpop.f32.mrf.mxu0
    %v2359 = vadd.f32 0.0, %v2358
    %v2360 = vpop.f32.mrf.mxu0
    %2361 = vdwg.mxu0
    %2362 = vmax.xlane.f32.xlu0 %v2107
    %v2363 = vpop.xlane.xlu0 %2362
    %2364 = vmax.xlane.f32.xlu0 %v2110
    %v2365 = vpop.xlane.xlu0 %2364
    %2366 = vmax.xlane.f32.xlu0 %v2115
    %v2367 = vpop.xlane.xlu0 %2366
    %2368 = vmax.xlane.f32.xlu0 %v2118
    %v2369 = vpop.xlane.xlu0 %2368
    %2370 = vmax.xlane.f32.xlu0 %v2123
    %v2371 = vpop.xlane.xlu0 %2370
    %2372 = vmax.xlane.f32.xlu0 %v2126
    %v2373 = vpop.xlane.xlu0 %2372
    %2374 = vmax.xlane.f32.xlu0 %v2131
    %v2375 = vpop.xlane.xlu0 %2374
    %2376 = vmax.xlane.f32.xlu0 %v2134
    %v2377 = vpop.xlane.xlu0 %2376
    %2378 = vmax.xlane.f32.xlu0 %v2139
    %v2379 = vpop.xlane.xlu0 %2378
    %2380 = vmax.xlane.f32.xlu0 %v2142
    %v2381 = vpop.xlane.xlu0 %2380
    %2382 = vmax.xlane.f32.xlu0 %v2147
    %v2383 = vpop.xlane.xlu0 %2382
    %2384 = vmax.xlane.f32.xlu0 %v2150
    %v2385 = vpop.xlane.xlu0 %2384
    %2386 = vmax.xlane.f32.xlu0 %v2155
    %v2387 = vpop.xlane.xlu0 %2386
    %2388 = vmax.xlane.f32.xlu0 %v2158
    %v2389 = vpop.xlane.xlu0 %2388
    %2390 = vmax.xlane.f32.xlu0 %v2163
    %v2391 = vpop.xlane.xlu0 %2390
    %2392 = vmax.xlane.f32.xlu0 %v2166
    %v2393 = vpop.xlane.xlu0 %2392
    %2394 = vmax.xlane.f32.xlu0 %v2300
    %v2395 = vpop.xlane.xlu0 %2394
    %2396 = vmax.xlane.f32.xlu0 %v2303
    %v2397 = vpop.xlane.xlu0 %2396
    %2398 = vmax.xlane.f32.xlu0 %v2308
    %v2399 = vpop.xlane.xlu0 %2398
    %2400 = vmax.xlane.f32.xlu0 %v2311
    %v2401 = vpop.xlane.xlu0 %2400
    %2402 = vmax.xlane.f32.xlu0 %v2316
    %v2403 = vpop.xlane.xlu0 %2402
    %2404 = vmax.xlane.f32.xlu0 %v2319
    %v2405 = vpop.xlane.xlu0 %2404
    %2406 = vmax.xlane.f32.xlu0 %v2324
    %v2407 = vpop.xlane.xlu0 %2406
    %2408 = vmax.xlane.f32.xlu0 %v2327
    %v2409 = vpop.xlane.xlu0 %2408
    %2410 = vmax.xlane.f32.xlu0 %v2332
    %v2411 = vpop.xlane.xlu0 %2410
    %2412 = vmax.xlane.f32.xlu0 %v2335
    %v2413 = vpop.xlane.xlu0 %2412
    %2414 = vmax.xlane.f32.xlu0 %v2340
    %v2415 = vpop.xlane.xlu0 %2414
    %2416 = vmax.xlane.f32.xlu0 %v2343
    %v2417 = vpop.xlane.xlu0 %2416
    %2418 = vmax.xlane.f32.xlu0 %v2348
    %v2419 = vpop.xlane.xlu0 %2418
    %2420 = vmax.xlane.f32.xlu0 %v2351
    %v2421 = vpop.xlane.xlu0 %2420
    %2422 = vmax.xlane.f32.xlu0 %v2356
    %v2423 = vpop.xlane.xlu0 %2422
    %2424 = vmax.xlane.f32.xlu0 %v2359
    %v2425 = vpop.xlane.xlu0 %2424
    %v2426 = vsub.f32 %v2107, %v2363
    %v2427 = vsub.f32 %v2110, %v2365
    %v2428 = vsub.f32 %v2115, %v2367
    %v2429 = vsub.f32 %v2118, %v2369
    %v2430 = vsub.f32 %v2123, %v2371
    %v2431 = vsub.f32 %v2126, %v2373
    %v2432 = vsub.f32 %v2131, %v2375
    %v2433 = vsub.f32 %v2134, %v2377
    %v2434 = vsub.f32 %v2139, %v2379
    %v2435 = vsub.f32 %v2142, %v2381
    %v2436 = vsub.f32 %v2147, %v2383
    %v2437 = vsub.f32 %v2150, %v2385
    %v2438 = vsub.f32 %v2155, %v2387
    %v2439 = vsub.f32 %v2158, %v2389
    %v2440 = vsub.f32 %v2163, %v2391
    %v2441 = vsub.f32 %v2166, %v2393
    %v2442 = vsub.f32 %v2300, %v2395
    %v2443 = vsub.f32 %v2303, %v2397
    %v2444 = vsub.f32 %v2308, %v2399
    %v2445 = vsub.f32 %v2311, %v2401
    %v2446 = vsub.f32 %v2316, %v2403
    %v2447 = vsub.f32 %v2319, %v2405
    %v2448 = vsub.f32 %v2324, %v2407
    %v2449 = vsub.f32 %v2327, %v2409
    %v2450 = vsub.f32 %v2332, %v2411
    %v2451 = vsub.f32 %v2335, %v2413
    %v2452 = vsub.f32 %v2340, %v2415
    %v2453 = vsub.f32 %v2343, %v2417
    %v2454 = vsub.f32 %v2348, %v2419
    %v2455 = vsub.f32 %v2351, %v2421
    %v2456 = vsub.f32 %v2356, %v2423
    %v2457 = vsub.f32 %v2359, %v2425
    %v2458 = vmul.f32 %v2426, 1.442695
    %v2459 = vpow.pop %v2458
    %v2460 = vmul.f32 %v2427, 1.442695
    %v2461 = vpow.pop %v2460
    %v2462 = vmul.f32 %v2428, 1.442695
    %v2463 = vpow.pop %v2462
    %v2464 = vmul.f32 %v2429, 1.442695
    %v2465 = vpow.pop %v2464
    %v2466 = vmul.f32 %v2430, 1.442695
    %v2467 = vpow.pop %v2466
    %v2468 = vmul.f32 %v2431, 1.442695
    %v2469 = vpow.pop %v2468
    %v2470 = vmul.f32 %v2432, 1.442695
    %v2471 = vpow.pop %v2470
    %v2472 = vmul.f32 %v2433, 1.442695
    %v2473 = vpow.pop %v2472
    %v2474 = vmul.f32 %v2434, 1.442695
    %v2475 = vpow.pop %v2474
    %v2476 = vmul.f32 %v2435, 1.442695
    %v2477 = vpow.pop %v2476
    %v2478 = vmul.f32 %v2436, 1.442695
    %v2479 = vpow.pop %v2478
    %v2480 = vmul.f32 %v2437, 1.442695
    %v2481 = vpow.pop %v2480
    %v2482 = vmul.f32 %v2438, 1.442695
    %v2483 = vpow.pop %v2482
    %v2484 = vmul.f32 %v2439, 1.442695
    %v2485 = vpow.pop %v2484
    %v2486 = vmul.f32 %v2440, 1.442695
    %v2487 = vpow.pop %v2486
    %v2488 = vmul.f32 %v2441, 1.442695
    %v2489 = vpow.pop %v2488
    %v2490 = vmul.f32 %v2442, 1.442695
    %v2491 = vpow.pop %v2490
    %v2492 = vmul.f32 %v2443, 1.442695
    %v2493 = vpow.pop %v2492
    %v2494 = vmul.f32 %v2444, 1.442695
    %v2495 = vpow.pop %v2494
    %v2496 = vmul.f32 %v2445, 1.442695
    %v2497 = vpow.pop %v2496
    %v2498 = vmul.f32 %v2446, 1.442695
    %v2499 = vpow.pop %v2498
    %v2500 = vmul.f32 %v2447, 1.442695
    %v2501 = vpow.pop %v2500
    %v2502 = vmul.f32 %v2448, 1.442695
    %v2503 = vpow.pop %v2502
    %v2504 = vmul.f32 %v2449, 1.442695
    %v2505 = vpow.pop %v2504
    %v2506 = vmul.f32 %v2450, 1.442695
    %v2507 = vpow.pop %v2506
    %v2508 = vmul.f32 %v2451, 1.442695
    %v2509 = vpow.pop %v2508
    %v2510 = vmul.f32 %v2452, 1.442695
    %v2511 = vpow.pop %v2510
    %v2512 = vmul.f32 %v2453, 1.442695
    %v2513 = vpow.pop %v2512
    %v2514 = vmul.f32 %v2454, 1.442695
    %v2515 = vpow.pop %v2514
    %v2516 = vmul.f32 %v2455, 1.442695
    %v2517 = vpow.pop %v2516
    %v2518 = vmul.f32 %v2456, 1.442695
    %v2519 = vpow.pop %v2518
    %v2520 = vmul.f32 %v2457, 1.442695
    %v2521 = vpow.pop %v2520
    %2522 = vadd.xlane.f32.xlu0 %v2459
    %v2523 = vpop.xlane.xlu0 %2522
    %2524 = vadd.xlane.f32.xlu0 %v2461
    %v2525 = vpop.xlane.xlu0 %2524
    %2526 = vadd.xlane.f32.xlu0 %v2463
    %v2527 = vpop.xlane.xlu0 %2526
    %2528 = vadd.xlane.f32.xlu0 %v2465
    %v2529 = vpop.xlane.xlu0 %2528
    %2530 = vadd.xlane.f32.xlu0 %v2467
    %v2531 = vpop.xlane.xlu0 %2530
    %2532 = vadd.xlane.f32.xlu0 %v2469
    %v2533 = vpop.xlane.xlu0 %2532
    %2534 = vadd.xlane.f32.xlu0 %v2471
    %v2535 = vpop.xlane.xlu0 %2534
    %2536 = vadd.xlane.f32.xlu0 %v2473
    %v2537 = vpop.xlane.xlu0 %2536
    %2538 = vadd.xlane.f32.xlu0 %v2475
    %v2539 = vpop.xlane.xlu0 %2538
    %2540 = vadd.xlane.f32.xlu0 %v2477
    %v2541 = vpop.xlane.xlu0 %2540
    %2542 = vadd.xlane.f32.xlu0 %v2479
    %v2543 = vpop.xlane.xlu0 %2542
    %2544 = vadd.xlane.f32.xlu0 %v2481
    %v2545 = vpop.xlane.xlu0 %2544
    %2546 = vadd.xlane.f32.xlu0 %v2483
    %v2547 = vpop.xlane.xlu0 %2546
    %2548 = vadd.xlane.f32.xlu0 %v2485
    %v2549 = vpop.xlane.xlu0 %2548
    %2550 = vadd.xlane.f32.xlu0 %v2487
    %v2551 = vpop.xlane.xlu0 %2550
    %2552 = vadd.xlane.f32.xlu0 %v2489
    %v2553 = vpop.xlane.xlu0 %2552
    %2554 = vadd.xlane.f32.xlu0 %v2491
    %v2555 = vpop.xlane.xlu0 %2554
    %2556 = vadd.xlane.f32.xlu0 %v2493
    %v2557 = vpop.xlane.xlu0 %2556
    %2558 = vadd.xlane.f32.xlu0 %v2495
    %v2559 = vpop.xlane.xlu0 %2558
    %2560 = vadd.xlane.f32.xlu0 %v2497
    %v2561 = vpop.xlane.xlu0 %2560
    %2562 = vadd.xlane.f32.xlu0 %v2499
    %v2563 = vpop.xlane.xlu0 %2562
    %2564 = vadd.xlane.f32.xlu0 %v2501
    %v2565 = vpop.xlane.xlu0 %2564
    %2566 = vadd.xlane.f32.xlu0 %v2503
    %v2567 = vpop.xlane.xlu0 %2566
    %2568 = vadd.xlane.f32.xlu0 %v2505
    %v2569 = vpop.xlane.xlu0 %2568
    %2570 = vadd.xlane.f32.xlu0 %v2507
    %v2571 = vpop.xlane.xlu0 %2570
    %2572 = vadd.xlane.f32.xlu0 %v2509
    %v2573 = vpop.xlane.xlu0 %2572
    %2574 = vadd.xlane.f32.xlu0 %v2511
    %v2575 = vpop.xlane.xlu0 %2574
    %2576 = vadd.xlane.f32.xlu0 %v2513
    %v2577 = vpop.xlane.xlu0 %2576
    %2578 = vadd.xlane.f32.xlu0 %v2515
    %v2579 = vpop.xlane.xlu0 %2578
    %2580 = vadd.xlane.f32.xlu0 %v2517
    %v2581 = vpop.xlane.xlu0 %2580
    %2582 = vadd.xlane.f32.xlu0 %v2519
    %v2583 = vpop.xlane.xlu0 %2582
    %2584 = vadd.xlane.f32.xlu0 %v2521
    %v2585 = vpop.xlane.xlu0 %2584
    %v2586 = vrcp.pop %v2523
    %v2587 = vrcp.pop %v2525
    %v2588 = vrcp.pop %v2527
    %v2589 = vrcp.pop %v2529
    %v2590 = vrcp.pop %v2531
    %v2591 = vrcp.pop %v2533
    %v2592 = vrcp.pop %v2535
    %v2593 = vrcp.pop %v2537
    %v2594 = vrcp.pop %v2539
    %v2595 = vrcp.pop %v2541
    %v2596 = vrcp.pop %v2543
    %v2597 = vrcp.pop %v2545
    %v2598 = vrcp.pop %v2547
    %v2599 = vrcp.pop %v2549
    %v2600 = vrcp.pop %v2551
    %v2601 = vrcp.pop %v2553
    %v2602 = vrcp.pop %v2555
    %v2603 = vrcp.pop %v2557
    %v2604 = vrcp.pop %v2559
    %v2605 = vrcp.pop %v2561
    %v2606 = vrcp.pop %v2563
    %v2607 = vrcp.pop %v2565
    %v2608 = vrcp.pop %v2567
    %v2609 = vrcp.pop %v2569
    %v2610 = vrcp.pop %v2571
    %v2611 = vrcp.pop %v2573
    %v2612 = vrcp.pop %v2575
    %v2613 = vrcp.pop %v2577
    %v2614 = vrcp.pop %v2579
    %v2615 = vrcp.pop %v2581
    %v2616 = vrcp.pop %v2583
    %v2617 = vrcp.pop %v2585
    %v2618 = vmul.f32 %v2459, %v2586
    %v2619 = vmul.f32 %v2461, %v2587
    %v2620 = vmul.f32 %v2463, %v2588
    %v2621 = vmul.f32 %v2465, %v2589
    %v2622 = vmul.f32 %v2467, %v2590
    %v2623 = vmul.f32 %v2469, %v2591
    %v2624 = vmul.f32 %v2471, %v2592
    %v2625 = vmul.f32 %v2473, %v2593
    %v2626 = vmul.f32 %v2475, %v2594
    %v2627 = vmul.f32 %v2477, %v2595
    %v2628 = vmul.f32 %v2479, %v2596
    %v2629 = vmul.f32 %v2481, %v2597
    %v2630 = vmul.f32 %v2483, %v2598
    %v2631 = vmul.f32 %v2485, %v2599
    %v2632 = vmul.f32 %v2487, %v2600
    %v2633 = vmul.f32 %v2489, %v2601
    %v2634 = vmul.f32 %v2491, %v2602
    %v2635 = vmul.f32 %v2493, %v2603
    %v2636 = vmul.f32 %v2495, %v2604
    %v2637 = vmul.f32 %v2497, %v2605
    %v2638 = vmul.f32 %v2499, %v2606
    %v2639 = vmul.f32 %v2501, %v2607
    %v2640 = vmul.f32 %v2503, %v2608
    %v2641 = vmul.f32 %v2505, %v2609
    %v2642 = vmul.f32 %v2507, %v2610
    %v2643 = vmul.f32 %v2509, %v2611
    %v2644 = vmul.f32 %v2511, %v2612
    %v2645 = vmul.f32 %v2513, %v2613
    %v2646 = vmul.f32 %v2515, %v2614
    %v2647 = vmul.f32 %v2517, %v2615
    %v2648 = vmul.f32 %v2519, %v2616
    %v2649 = vmul.f32 %v2521, %v2617
    %v2650 = vpack.c.bf16 %v2619, %v2618
    %v2651 = vpack.c.bf16 %v2621, %v2620
    %v2652 = vpack.c.bf16 %v2623, %v2622
    %v2653 = vpack.c.bf16 %v2625, %v2624
    %v2654 = vpack.c.bf16 %v2627, %v2626
    %v2655 = vpack.c.bf16 %v2629, %v2628
    %v2656 = vpack.c.bf16 %v2631, %v2630
    %v2657 = vpack.c.bf16 %v2633, %v2632
    %v2658 = vpack.c.bf16 %v2635, %v2634
    %v2659 = vpack.c.bf16 %v2637, %v2636
    %v2660 = vpack.c.bf16 %v2639, %v2638
    %v2661 = vpack.c.bf16 %v2641, %v2640
    %v2662 = vpack.c.bf16 %v2643, %v2642
    %v2663 = vpack.c.bf16 %v2645, %v2644
    %v2664 = vpack.c.bf16 %v2647, %v2646
    %v2665 = vpack.c.bf16 %v2649, %v2648
    %2674 = vrot.lane.b32.xlu0 %v1171, 64
    %v2675 = vpop.permute.xlu0 %2674
    %2676 = vrot.lane.b32.xlu0 %v1172, 64
    %v2677 = vpop.permute.xlu0 %2676
    %2678 = vrot.lane.b32.xlu0 %v1173, 64
    %v2679 = vpop.permute.xlu0 %2678
    %2680 = vrot.lane.b32.xlu0 %v1174, 64
    %v2681 = vpop.permute.xlu0 %2680
    %2682 = vrot.lane.b32.xlu0 %v1175, 64
    %v2683 = vpop.permute.xlu0 %2682
    %2684 = vrot.lane.b32.xlu0 %v1176, 64
    %v2685 = vpop.permute.xlu0 %2684
    %2686 = vrot.lane.b32.xlu0 %v1177, 64
    %v2687 = vpop.permute.xlu0 %2686
    %2688 = vrot.lane.b32.xlu0 %v1178, 64
    %v2689 = vpop.permute.xlu0 %2688
    %2698 = vmatprep.subr.bf16.mxu0 0
    %2699 = vmatpush1.bf16.msra.mxu0 %v2689
    %2700 = vmatprep.subr.bf16.mxu0 0
    %2701 = vmatpush1.bf16.msra.mxu0 %v2687
    %2702 = vmatprep.subr.bf16.mxu0 0
    %2703 = vmatpush1.bf16.msra.mxu0 %v2685
    %2704 = vmatprep.subr.bf16.mxu0 0
    %2705 = vmatpush1.bf16.msra.mxu0 %v2683
    %2706 = vmatprep.subr.bf16.mxu0 0
    %2707 = vmatpush1.bf16.msra.mxu0 %v2681
    %2708 = vmatprep.subr.bf16.mxu0 0
    %2709 = vmatpush1.bf16.msra.mxu0 %v2679
    %2710 = vmatprep.subr.bf16.mxu0 0
    %2711 = vmatpush1.bf16.msra.mxu0 %v2677
    %2712 = vmatprep.subr.bf16.mxu0 0
    %2713 = vmatpush1.bf16.msra.mxu0 %v2675
    %2714 = vmatprep.subr.bf16.mxu0 0
    %2715 = vmatpush2.bf16.msra.mxu0 0
    %2716 = vmatprep.subr.bf16.mxu0 0
    %2717 = vmatpush2.bf16.msra.mxu0 0
    %2718 = vmatprep.subr.bf16.mxu0 0
    %2719 = vmatpush2.bf16.msra.mxu0 0
    %2720 = vmatprep.subr.bf16.mxu0 0
    %2721 = vmatpush2.bf16.msra.mxu0 0
    %2722 = vmatprep.subr.bf16.mxu0 0
    %2723 = vmatpush2.bf16.msra.mxu0 0
    %2724 = vmatprep.subr.bf16.mxu0 0
    %2725 = vmatpush2.bf16.msra.mxu0 0
    %2726 = vmatprep.subr.bf16.mxu0 0
    %2727 = vmatpush2.bf16.msra.mxu0 0
    %2728 = vmatprep.subr.bf16.mxu0 0
    %2729 = vmatpush2.bf16.msra.mxu0 0
    %2730 = vmatprep.mubr.bf16.mxu0 0
    %2731 = vmatmul.mubr.bf16.gmra.mxu0 %v2650
    %v2732 = vpop.f32.mrf.mxu0
    %v2733 = vadd.f32 0.0, %v2732
    %v2734 = vpop.f32.mrf.mxu0
    %v2735 = vpop.f32.mrf.mxu0
    %v2736 = vadd.f32 0.0, %v2735
    %v2737 = vpop.f32.mrf.mxu0
    %2738 = vmatprep.mubr.bf16.mxu0 0
    %2739 = vmatmul.mubr.bf16.gmra.mxu0 %v2651
    %v2740 = vpop.f32.mrf.mxu0
    %v2741 = vadd.f32 0.0, %v2740
    %v2742 = vpop.f32.mrf.mxu0
    %v2743 = vpop.f32.mrf.mxu0
    %v2744 = vadd.f32 0.0, %v2743
    %v2745 = vpop.f32.mrf.mxu0
    %2746 = vmatprep.mubr.bf16.mxu0 0
    %2747 = vmatmul.mubr.bf16.gmra.mxu0 %v2652
    %v2748 = vpop.f32.mrf.mxu0
    %v2749 = vadd.f32 0.0, %v2748
    %v2750 = vpop.f32.mrf.mxu0
    %v2751 = vpop.f32.mrf.mxu0
    %v2752 = vadd.f32 0.0, %v2751
    %v2753 = vpop.f32.mrf.mxu0
    %2754 = vmatprep.mubr.bf16.mxu0 0
    %2755 = vmatmul.mubr.bf16.gmra.mxu0 %v2653
    %v2756 = vpop.f32.mrf.mxu0
    %v2757 = vadd.f32 0.0, %v2756
    %v2758 = vpop.f32.mrf.mxu0
    %v2759 = vpop.f32.mrf.mxu0
    %v2760 = vadd.f32 0.0, %v2759
    %v2761 = vpop.f32.mrf.mxu0
    %2762 = vmatprep.mubr.bf16.mxu0 0
    %2763 = vmatmul.mubr.bf16.gmra.mxu0 %v2654
    %v2764 = vpop.f32.mrf.mxu0
    %v2765 = vadd.f32 0.0, %v2764
    %v2766 = vpop.f32.mrf.mxu0
    %v2767 = vpop.f32.mrf.mxu0
    %v2768 = vadd.f32 0.0, %v2767
    %v2769 = vpop.f32.mrf.mxu0
    %2770 = vmatprep.mubr.bf16.mxu0 0
    %2771 = vmatmul.mubr.bf16.gmra.mxu0 %v2655
    %v2772 = vpop.f32.mrf.mxu0
    %v2773 = vadd.f32 0.0, %v2772
    %v2774 = vpop.f32.mrf.mxu0
    %v2775 = vpop.f32.mrf.mxu0
    %v2776 = vadd.f32 0.0, %v2775
    %v2777 = vpop.f32.mrf.mxu0
    %2778 = vmatprep.mubr.bf16.mxu0 0
    %2779 = vmatmul.mubr.bf16.gmra.mxu0 %v2656
    %v2780 = vpop.f32.mrf.mxu0
    %v2781 = vadd.f32 0.0, %v2780
    %v2782 = vpop.f32.mrf.mxu0
    %v2783 = vpop.f32.mrf.mxu0
    %v2784 = vadd.f32 0.0, %v2783
    %v2785 = vpop.f32.mrf.mxu0
    %2786 = vmatprep.mubr.bf16.mxu0 0
    %2787 = vmatmul.mubr.bf16.gmra.mxu0 %v2657
    %v2788 = vpop.f32.mrf.mxu0
    %v2789 = vadd.f32 0.0, %v2788
    %v2790 = vpop.f32.mrf.mxu0
    %v2791 = vpop.f32.mrf.mxu0
    %v2792 = vadd.f32 0.0, %v2791
    %v2793 = vpop.f32.mrf.mxu0
    %2794 = vdwg.mxu0
    %2803 = vrot.lane.b32.xlu0 %v1179, 64
    %v2804 = vpop.permute.xlu0 %2803
    %2805 = vrot.lane.b32.xlu0 %v1180, 64
    %v2806 = vpop.permute.xlu0 %2805
    %2807 = vrot.lane.b32.xlu0 %v1181, 64
    %v2808 = vpop.permute.xlu0 %2807
    %2809 = vrot.lane.b32.xlu0 %v1182, 64
    %v2810 = vpop.permute.xlu0 %2809
    %2811 = vrot.lane.b32.xlu0 %v1183, 64
    %v2812 = vpop.permute.xlu0 %2811
    %2813 = vrot.lane.b32.xlu0 %v1184, 64
    %v2814 = vpop.permute.xlu0 %2813
    %2815 = vrot.lane.b32.xlu0 %v1185, 64
    %v2816 = vpop.permute.xlu0 %2815
    %2817 = vrot.lane.b32.xlu0 %v1186, 64
    %v2818 = vpop.permute.xlu0 %2817
    %2827 = vmatprep.subr.bf16.mxu0 0
    %2828 = vmatpush1.bf16.msra.mxu0 %v2818
    %2829 = vmatprep.subr.bf16.mxu0 0
    %2830 = vmatpush1.bf16.msra.mxu0 %v2816
    %2831 = vmatprep.subr.bf16.mxu0 0
    %2832 = vmatpush1.bf16.msra.mxu0 %v2814
    %2833 = vmatprep.subr.bf16.mxu0 0
    %2834 = vmatpush1.bf16.msra.mxu0 %v2812
    %2835 = vmatprep.subr.bf16.mxu0 0
    %2836 = vmatpush1.bf16.msra.mxu0 %v2810
    %2837 = vmatprep.subr.bf16.mxu0 0
    %2838 = vmatpush1.bf16.msra.mxu0 %v2808
    %2839 = vmatprep.subr.bf16.mxu0 0
    %2840 = vmatpush1.bf16.msra.mxu0 %v2806
    %2841 = vmatprep.subr.bf16.mxu0 0
    %2842 = vmatpush1.bf16.msra.mxu0 %v2804
    %2843 = vmatprep.subr.bf16.mxu0 0
    %2844 = vmatpush2.bf16.msra.mxu0 0
    %2845 = vmatprep.subr.bf16.mxu0 0
    %2846 = vmatpush2.bf16.msra.mxu0 0
    %2847 = vmatprep.subr.bf16.mxu0 0
    %2848 = vmatpush2.bf16.msra.mxu0 0
    %2849 = vmatprep.subr.bf16.mxu0 0
    %2850 = vmatpush2.bf16.msra.mxu0 0
    %2851 = vmatprep.subr.bf16.mxu0 0
    %2852 = vmatpush2.bf16.msra.mxu0 0
    %2853 = vmatprep.subr.bf16.mxu0 0
    %2854 = vmatpush2.bf16.msra.mxu0 0
    %2855 = vmatprep.subr.bf16.mxu0 0
    %2856 = vmatpush2.bf16.msra.mxu0 0
    %2857 = vmatprep.subr.bf16.mxu0 0
    %2858 = vmatpush2.bf16.msra.mxu0 0
    %2859 = vmatprep.mubr.bf16.mxu0 0
    %2860 = vmatmul.mubr.bf16.gmra.mxu0 %v2658
    %v2861 = vpop.f32.mrf.mxu0
    %v2862 = vadd.f32 0.0, %v2861
    %v2863 = vpop.f32.mrf.mxu0
    %v2864 = vpop.f32.mrf.mxu0
    %v2865 = vadd.f32 0.0, %v2864
    %v2866 = vpop.f32.mrf.mxu0
    %2867 = vmatprep.mubr.bf16.mxu0 0
    %2868 = vmatmul.mubr.bf16.gmra.mxu0 %v2659
    %v2869 = vpop.f32.mrf.mxu0
    %v2870 = vadd.f32 0.0, %v2869
    %v2871 = vpop.f32.mrf.mxu0
    %v2872 = vpop.f32.mrf.mxu0
    %v2873 = vadd.f32 0.0, %v2872
    %v2874 = vpop.f32.mrf.mxu0
    %2875 = vmatprep.mubr.bf16.mxu0 0
    %2876 = vmatmul.mubr.bf16.gmra.mxu0 %v2660
    %v2877 = vpop.f32.mrf.mxu0
    %v2878 = vadd.f32 0.0, %v2877
    %v2879 = vpop.f32.mrf.mxu0
    %v2880 = vpop.f32.mrf.mxu0
    %v2881 = vadd.f32 0.0, %v2880
    %v2882 = vpop.f32.mrf.mxu0
    %2883 = vmatprep.mubr.bf16.mxu0 0
    %2884 = vmatmul.mubr.bf16.gmra.mxu0 %v2661
    %v2885 = vpop.f32.mrf.mxu0
    %v2886 = vadd.f32 0.0, %v2885
    %v2887 = vpop.f32.mrf.mxu0
    %v2888 = vpop.f32.mrf.mxu0
    %v2889 = vadd.f32 0.0, %v2888
    %v2890 = vpop.f32.mrf.mxu0
    %2891 = vmatprep.mubr.bf16.mxu0 0
    %2892 = vmatmul.mubr.bf16.gmra.mxu0 %v2662
    %v2893 = vpop.f32.mrf.mxu0
    %v2894 = vadd.f32 0.0, %v2893
    %v2895 = vpop.f32.mrf.mxu0
    %v2896 = vpop.f32.mrf.mxu0
    %v2897 = vadd.f32 0.0, %v2896
    %v2898 = vpop.f32.mrf.mxu0
    %2899 = vmatprep.mubr.bf16.mxu0 0
    %2900 = vmatmul.mubr.bf16.gmra.mxu0 %v2663
    %v2901 = vpop.f32.mrf.mxu0
    %v2902 = vadd.f32 0.0, %v2901
    %v2903 = vpop.f32.mrf.mxu0
    %v2904 = vpop.f32.mrf.mxu0
    %v2905 = vadd.f32 0.0, %v2904
    %v2906 = vpop.f32.mrf.mxu0
    %2907 = vmatprep.mubr.bf16.mxu0 0
    %2908 = vmatmul.mubr.bf16.gmra.mxu0 %v2664
    %v2909 = vpop.f32.mrf.mxu0
    %v2910 = vadd.f32 0.0, %v2909
    %v2911 = vpop.f32.mrf.mxu0
    %v2912 = vpop.f32.mrf.mxu0
    %v2913 = vadd.f32 0.0, %v2912
    %v2914 = vpop.f32.mrf.mxu0
    %2915 = vmatprep.mubr.bf16.mxu0 0
    %2916 = vmatmul.mubr.bf16.gmra.mxu0 %v2665
    %v2917 = vpop.f32.mrf.mxu0
    %v2918 = vadd.f32 0.0, %v2917
    %v2919 = vpop.f32.mrf.mxu0
    %v2920 = vpop.f32.mrf.mxu0
    %v2921 = vadd.f32 0.0, %v2920
    %v2922 = vpop.f32.mrf.mxu0
    %2923 = vdwg.mxu0
    %2956 = vrot.lane.b32.xlu0 %v2733, 64
    %v2957 = vpop.permute.xlu0 %2956
    %2958 = vrot.lane.b32.xlu0 %v2736, 64
    %v2959 = vpop.permute.xlu0 %2958
    %2960 = vrot.lane.b32.xlu0 %v2741, 64
    %v2961 = vpop.permute.xlu0 %2960
    %2962 = vrot.lane.b32.xlu0 %v2744, 64
    %v2963 = vpop.permute.xlu0 %2962
    %2964 = vrot.lane.b32.xlu0 %v2749, 64
    %v2965 = vpop.permute.xlu0 %2964
    %2966 = vrot.lane.b32.xlu0 %v2752, 64
    %v2967 = vpop.permute.xlu0 %2966
    %2968 = vrot.lane.b32.xlu0 %v2757, 64
    %v2969 = vpop.permute.xlu0 %2968
    %2970 = vrot.lane.b32.xlu0 %v2760, 64
    %v2971 = vpop.permute.xlu0 %2970
    %2972 = vrot.lane.b32.xlu0 %v2765, 64
    %v2973 = vpop.permute.xlu0 %2972
    %2974 = vrot.lane.b32.xlu0 %v2768, 64
    %v2975 = vpop.permute.xlu0 %2974
    %2976 = vrot.lane.b32.xlu0 %v2773, 64
    %v2977 = vpop.permute.xlu0 %2976
    %2978 = vrot.lane.b32.xlu0 %v2776, 64
    %v2979 = vpop.permute.xlu0 %2978
    %2980 = vrot.lane.b32.xlu0 %v2781, 64
    %v2981 = vpop.permute.xlu0 %2980
    %2982 = vrot.lane.b32.xlu0 %v2784, 64
    %v2983 = vpop.permute.xlu0 %2982
    %2984 = vrot.lane.b32.xlu0 %v2789, 64
    %v2985 = vpop.permute.xlu0 %2984
    %2986 = vrot.lane.b32.xlu0 %v2792, 64
    %v2987 = vpop.permute.xlu0 %2986
    %2988 = vrot.lane.b32.xlu0 %v2862, 64
    %v2989 = vpop.permute.xlu0 %2988
    %2990 = vrot.lane.b32.xlu0 %v2865, 64
    %v2991 = vpop.permute.xlu0 %2990
    %2992 = vrot.lane.b32.xlu0 %v2870, 64
    %v2993 = vpop.permute.xlu0 %2992
    %2994 = vrot.lane.b32.xlu0 %v2873, 64
    %v2995 = vpop.permute.xlu0 %2994
    %2996 = vrot.lane.b32.xlu0 %v2878, 64
    %v2997 = vpop.permute.xlu0 %2996
    %2998 = vrot.lane.b32.xlu0 %v2881, 64
    %v2999 = vpop.permute.xlu0 %2998
    %3000 = vrot.lane.b32.xlu0 %v2886, 64
    %v3001 = vpop.permute.xlu0 %3000
    %3002 = vrot.lane.b32.xlu0 %v2889, 64
    %v3003 = vpop.permute.xlu0 %3002
    %3004 = vrot.lane.b32.xlu0 %v2894, 64
    %v3005 = vpop.permute.xlu0 %3004
    %3006 = vrot.lane.b32.xlu0 %v2897, 64
    %v3007 = vpop.permute.xlu0 %3006
    %3008 = vrot.lane.b32.xlu0 %v2902, 64
    %v3009 = vpop.permute.xlu0 %3008
    %3010 = vrot.lane.b32.xlu0 %v2905, 64
    %v3011 = vpop.permute.xlu0 %3010
    %3012 = vrot.lane.b32.xlu0 %v2910, 64
    %v3013 = vpop.permute.xlu0 %3012
    %3014 = vrot.lane.b32.xlu0 %v2913, 64
    %v3015 = vpop.permute.xlu0 %3014
    %3016 = vrot.lane.b32.xlu0 %v2918, 64
    %v3017 = vpop.permute.xlu0 %3016
    %3018 = vrot.lane.b32.xlu0 %v2921, 64
    %v3019 = vpop.permute.xlu0 %3018
    %v3052 = vsel %vm1187, %v1817, %v2957
    %v3053 = vsel %vm1187, %v1820, %v2959
    %v3054 = vsel %vm1187, %v1825, %v2961
    %v3055 = vsel %vm1187, %v1828, %v2963
    %v3056 = vsel %vm1187, %v1833, %v2965
    %v3057 = vsel %vm1187, %v1836, %v2967
    %v3058 = vsel %vm1187, %v1841, %v2969
    %v3059 = vsel %vm1187, %v1844, %v2971
    %v3060 = vsel %vm1187, %v1849, %v2973
    %v3061 = vsel %vm1187, %v1852, %v2975
    %v3062 = vsel %vm1187, %v1857, %v2977
    %v3063 = vsel %vm1187, %v1860, %v2979
    %v3064 = vsel %vm1187, %v1865, %v2981
    %v3065 = vsel %vm1187, %v1868, %v2983
    %v3066 = vsel %vm1187, %v1873, %v2985
    %v3067 = vsel %vm1187, %v1876, %v2987
    %v3068 = vsel %vm1187, %v1914, %v2989
    %v3069 = vsel %vm1187, %v1917, %v2991
    %v3070 = vsel %vm1187, %v1922, %v2993
    %v3071 = vsel %vm1187, %v1925, %v2995
    %v3072 = vsel %vm1187, %v1930, %v2997
    %v3073 = vsel %vm1187, %v1933, %v2999
    %v3074 = vsel %vm1187, %v1938, %v3001
    %v3075 = vsel %vm1187, %v1941, %v3003
    %v3076 = vsel %vm1187, %v1946, %v3005
    %v3077 = vsel %vm1187, %v1949, %v3007
    %v3078 = vsel %vm1187, %v1954, %v3009
    %v3079 = vsel %vm1187, %v1957, %v3011
    %v3080 = vsel %vm1187, %v1962, %v3013
    %v3081 = vsel %vm1187, %v1965, %v3015
    %v3082 = vsel %vm1187, %v1970, %v3017
    %v3083 = vsel %vm1187, %v1973, %v3019
    %s3084 = smul.u32 4, 16
    %s3085 = smul.u32 %s3084, 1
    %s3086 = sshll.u32 %s3085, 4
    %3087 = dma.done [#allocation5], %s3086
    %v3088 = vpack.c.bf16 %v3053, %v3052
    %v3089 = vpack.c.bf16 %v3055, %v3054
    %v3090 = vpack.c.bf16 %v3057, %v3056
    %v3091 = vpack.c.bf16 %v3059, %v3058
    %v3092 = vpack.c.bf16 %v3061, %v3060
    %v3093 = vpack.c.bf16 %v3063, %v3062
    %v3094 = vpack.c.bf16 %v3065, %v3064
    %v3095 = vpack.c.bf16 %v3067, %v3066
    %v3096 = vpack.c.bf16 %v3069, %v3068
    %v3097 = vpack.c.bf16 %v3071, %v3070
    %v3098 = vpack.c.bf16 %v3073, %v3072
    %v3099 = vpack.c.bf16 %v3075, %v3074
    %v3100 = vpack.c.bf16 %v3077, %v3076
    %v3101 = vpack.c.bf16 %v3079, %v3078
    %v3102 = vpack.c.bf16 %v3081, %v3080
    %v3103 = vpack.c.bf16 %v3083, %v3082
    %v3104 = vld [vmem:[#allocation2] sm:$0xf]
    %v3105 = vld [vmem:[#allocation2 + $0x4] sm:$0xf]
    %v3106 = vld [vmem:[#allocation2 + $0x8] sm:$0xf]
    %v3107 = vld [vmem:[#allocation2 + $0xc] sm:$0xf]
    %v3108 = vld [vmem:[#allocation2 + $0x10] sm:$0xf]
    %v3109 = vld [vmem:[#allocation2 + $0x14] sm:$0xf]
    %v3110 = vld [vmem:[#allocation2 + $0x18] sm:$0xf]
    %v3111 = vld [vmem:[#allocation2 + $0x1c] sm:$0xf]
    %v3112 = vld [vmem:[#allocation2 + $0x20] sm:$0xf]
    %v3113 = vld [vmem:[#allocation2 + $0x24] sm:$0xf]
    %v3114 = vld [vmem:[#allocation2 + $0x28] sm:$0xf]
    %v3115 = vld [vmem:[#allocation2 + $0x2c] sm:$0xf]
    %v3116 = vld [vmem:[#allocation2 + $0x30] sm:$0xf]
    %v3117 = vld [vmem:[#allocation2 + $0x34] sm:$0xf]
    %v3118 = vld [vmem:[#allocation2 + $0x38] sm:$0xf]
    %v3119 = vld [vmem:[#allocation2 + $0x3c] sm:$0xf]
    %v3120 = vld [vmem:[%s6] sm:$0x1]
    %v3122 = vlaneseq
    %v3123 = vshrl.u32 %v3122, 7
    %v3124 = vsub.s32 0, %v3123
    %v3125 = vrot.slane %v3120, %v3124
    %v3143 = vunpack.c.l.b16 %v3104
    %v3144 = vunpack.c.l.b16 %v3105
    %v3145 = vunpack.c.l.b16 %v3106
    %v3146 = vunpack.c.l.b16 %v3107
    %v3147 = vunpack.c.l.b16 %v3108
    %v3148 = vunpack.c.l.b16 %v3109
    %v3149 = vunpack.c.l.b16 %v3110
    %v3150 = vunpack.c.l.b16 %v3111
    %v3151 = vunpack.c.l.b16 %v3112
    %v3152 = vunpack.c.l.b16 %v3113
    %v3153 = vunpack.c.l.b16 %v3114
    %v3154 = vunpack.c.l.b16 %v3115
    %v3155 = vunpack.c.l.b16 %v3116
    %v3156 = vunpack.c.l.b16 %v3117
    %v3157 = vunpack.c.l.b16 %v3118
    %v3158 = vunpack.c.l.b16 %v3119
    %v3159 = vpack.c.b16 %v3144, %v3143
    %v3160 = vpack.c.b16 %v3146, %v3145
    %v3161 = vpack.c.b16 %v3148, %v3147
    %v3162 = vpack.c.b16 %v3150, %v3149
    %v3163 = vpack.c.b16 %v3152, %v3151
    %v3164 = vpack.c.b16 %v3154, %v3153
    %v3165 = vpack.c.b16 %v3156, %v3155
    %v3166 = vpack.c.b16 %v3158, %v3157
    %3175 = vmatprep.subr.bf16.mxu0 0
    %3176 = vmatpush1.bf16.msra.mxu0 %v3166
    %3177 = vmatprep.subr.bf16.mxu0 0
    %3178 = vmatpush1.bf16.msra.mxu0 %v3165
    %3179 = vmatprep.subr.bf16.mxu0 0
    %3180 = vmatpush1.bf16.msra.mxu0 %v3164
    %3181 = vmatprep.subr.bf16.mxu0 0
    %3182 = vmatpush1.bf16.msra.mxu0 %v3163
    %3183 = vmatprep.subr.bf16.mxu0 0
    %3184 = vmatpush1.bf16.msra.mxu0 %v3162
    %3185 = vmatprep.subr.bf16.mxu0 0
    %3186 = vmatpush1.bf16.msra.mxu0 %v3161
    %3187 = vmatprep.subr.bf16.mxu0 0
    %3188 = vmatpush1.bf16.msra.mxu0 %v3160
    %3189 = vmatprep.subr.bf16.mxu0 0
    %3190 = vmatpush1.bf16.msra.mxu0 %v3159
    %3191 = vmatprep.subr.bf16.mxu0 0
    %3192 = vmatpush2.bf16.msra.mxu0 0
    %3193 = vmatprep.subr.bf16.mxu0 0
    %3194 = vmatpush2.bf16.msra.mxu0 0
    %3195 = vmatprep.subr.bf16.mxu0 0
    %3196 = vmatpush2.bf16.msra.mxu0 0
    %3197 = vmatprep.subr.bf16.mxu0 0
    %3198 = vmatpush2.bf16.msra.mxu0 0
    %3199 = vmatprep.subr.bf16.mxu0 0
    %3200 = vmatpush2.bf16.msra.mxu0 0
    %3201 = vmatprep.subr.bf16.mxu0 0
    %3202 = vmatpush2.bf16.msra.mxu0 0
    %3203 = vmatprep.subr.bf16.mxu0 0
    %3204 = vmatpush2.bf16.msra.mxu0 0
    %3205 = vmatprep.subr.bf16.mxu0 0
    %3206 = vmatpush2.bf16.msra.mxu0 0
    %3207 = vmatprep.mubr.bf16.mxu0 0
    %3208 = vmatmul.mubr.bf16.gmra.mxu0 %v3088
    %v3209 = vpop.f32.mrf.mxu0
    %v3210 = vadd.f32 %v3125, %v3209
    %v3211 = vpop.f32.mrf.mxu0
    %v3212 = vpop.f32.mrf.mxu0
    %v3213 = vadd.f32 %v3125, %v3212
    %v3214 = vpop.f32.mrf.mxu0
    %3215 = vmatprep.mubr.bf16.mxu0 0
    %3216 = vmatmul.mubr.bf16.gmra.mxu0 %v3089
    %v3217 = vpop.f32.mrf.mxu0
    %v3218 = vadd.f32 %v3125, %v3217
    %v3219 = vpop.f32.mrf.mxu0
    %v3220 = vpop.f32.mrf.mxu0
    %v3221 = vadd.f32 %v3125, %v3220
    %v3222 = vpop.f32.mrf.mxu0
    %3223 = vmatprep.mubr.bf16.mxu0 0
    %3224 = vmatmul.mubr.bf16.gmra.mxu0 %v3090
    %v3225 = vpop.f32.mrf.mxu0
    %v3226 = vadd.f32 %v3125, %v3225
    %v3227 = vpop.f32.mrf.mxu0
    %v3228 = vpop.f32.mrf.mxu0
    %v3229 = vadd.f32 %v3125, %v3228
    %v3230 = vpop.f32.mrf.mxu0
    %3231 = vmatprep.mubr.bf16.mxu0 0
    %3232 = vmatmul.mubr.bf16.gmra.mxu0 %v3091
    %v3233 = vpop.f32.mrf.mxu0
    %v3234 = vadd.f32 %v3125, %v3233
    %v3235 = vpop.f32.mrf.mxu0
    %v3236 = vpop.f32.mrf.mxu0
    %v3237 = vadd.f32 %v3125, %v3236
    %v3238 = vpop.f32.mrf.mxu0
    %3239 = vmatprep.mubr.bf16.mxu0 0
    %3240 = vmatmul.mubr.bf16.gmra.mxu0 %v3092
    %v3241 = vpop.f32.mrf.mxu0
    %v3242 = vadd.f32 %v3125, %v3241
    %v3243 = vpop.f32.mrf.mxu0
    %v3244 = vpop.f32.mrf.mxu0
    %v3245 = vadd.f32 %v3125, %v3244
    %v3246 = vpop.f32.mrf.mxu0
    %3247 = vmatprep.mubr.bf16.mxu0 0
    %3248 = vmatmul.mubr.bf16.gmra.mxu0 %v3093
    %v3249 = vpop.f32.mrf.mxu0
    %v3250 = vadd.f32 %v3125, %v3249
    %v3251 = vpop.f32.mrf.mxu0
    %v3252 = vpop.f32.mrf.mxu0
    %v3253 = vadd.f32 %v3125, %v3252
    %v3254 = vpop.f32.mrf.mxu0
    %3255 = vmatprep.mubr.bf16.mxu0 0
    %3256 = vmatmul.mubr.bf16.gmra.mxu0 %v3094
    %v3257 = vpop.f32.mrf.mxu0
    %v3258 = vadd.f32 %v3125, %v3257
    %v3259 = vpop.f32.mrf.mxu0
    %v3260 = vpop.f32.mrf.mxu0
    %v3261 = vadd.f32 %v3125, %v3260
    %v3262 = vpop.f32.mrf.mxu0
    %3263 = vmatprep.mubr.bf16.mxu0 0
    %3264 = vmatmul.mubr.bf16.gmra.mxu0 %v3095
    %v3265 = vpop.f32.mrf.mxu0
    %v3266 = vadd.f32 %v3125, %v3265
    %v3267 = vpop.f32.mrf.mxu0
    %v3268 = vpop.f32.mrf.mxu0
    %v3269 = vadd.f32 %v3125, %v3268
    %v3270 = vpop.f32.mrf.mxu0
    %3271 = vmatprep.mubr.bf16.mxu0 0
    %3272 = vmatmul.mubr.bf16.gmra.mxu0 %v3096
    %v3273 = vpop.f32.mrf.mxu0
    %v3274 = vadd.f32 %v3125, %v3273
    %v3275 = vpop.f32.mrf.mxu0
    %v3276 = vpop.f32.mrf.mxu0
    %v3277 = vadd.f32 %v3125, %v3276
    %v3278 = vpop.f32.mrf.mxu0
    %3279 = vmatprep.mubr.bf16.mxu0 0
    %3280 = vmatmul.mubr.bf16.gmra.mxu0 %v3097
    %v3281 = vpop.f32.mrf.mxu0
    %v3282 = vadd.f32 %v3125, %v3281
    %v3283 = vpop.f32.mrf.mxu0
    %v3284 = vpop.f32.mrf.mxu0
    %v3285 = vadd.f32 %v3125, %v3284
    %v3286 = vpop.f32.mrf.mxu0
    %3287 = vmatprep.mubr.bf16.mxu0 0
    %3288 = vmatmul.mubr.bf16.gmra.mxu0 %v3098
    %v3289 = vpop.f32.mrf.mxu0
    %v3290 = vadd.f32 %v3125, %v3289
    %v3291 = vpop.f32.mrf.mxu0
    %v3292 = vpop.f32.mrf.mxu0
    %v3293 = vadd.f32 %v3125, %v3292
    %v3294 = vpop.f32.mrf.mxu0
    %3295 = vmatprep.mubr.bf16.mxu0 0
    %3296 = vmatmul.mubr.bf16.gmra.mxu0 %v3099
    %v3297 = vpop.f32.mrf.mxu0
    %v3298 = vadd.f32 %v3125, %v3297
    %v3299 = vpop.f32.mrf.mxu0
    %v3300 = vpop.f32.mrf.mxu0
    %v3301 = vadd.f32 %v3125, %v3300
    %v3302 = vpop.f32.mrf.mxu0
    %3303 = vmatprep.mubr.bf16.mxu0 0
    %3304 = vmatmul.mubr.bf16.gmra.mxu0 %v3100
    %v3305 = vpop.f32.mrf.mxu0
    %v3306 = vadd.f32 %v3125, %v3305
    %v3307 = vpop.f32.mrf.mxu0
    %v3308 = vpop.f32.mrf.mxu0
    %v3309 = vadd.f32 %v3125, %v3308
    %v3310 = vpop.f32.mrf.mxu0
    %3311 = vmatprep.mubr.bf16.mxu0 0
    %3312 = vmatmul.mubr.bf16.gmra.mxu0 %v3101
    %v3313 = vpop.f32.mrf.mxu0
    %v3314 = vadd.f32 %v3125, %v3313
    %v3315 = vpop.f32.mrf.mxu0
    %v3316 = vpop.f32.mrf.mxu0
    %v3317 = vadd.f32 %v3125, %v3316
    %v3318 = vpop.f32.mrf.mxu0
    %3319 = vmatprep.mubr.bf16.mxu0 0
    %3320 = vmatmul.mubr.bf16.gmra.mxu0 %v3102
    %v3321 = vpop.f32.mrf.mxu0
    %v3322 = vadd.f32 %v3125, %v3321
    %v3323 = vpop.f32.mrf.mxu0
    %v3324 = vpop.f32.mrf.mxu0
    %v3325 = vadd.f32 %v3125, %v3324
    %v3326 = vpop.f32.mrf.mxu0
    %3327 = vmatprep.mubr.bf16.mxu0 0
    %3328 = vmatmul.mubr.bf16.gmra.mxu0 %v3103
    %v3329 = vpop.f32.mrf.mxu0
    %v3330 = vadd.f32 %v3125, %v3329
    %v3331 = vpop.f32.mrf.mxu0
    %v3332 = vpop.f32.mrf.mxu0
    %v3333 = vadd.f32 %v3125, %v3332
    %v3334 = vpop.f32.mrf.mxu0
    %3335 = vdwg.mxu0
    %v3336 = vadd.f32 %v3210, %v129
    %v3337 = vadd.f32 %v3213, %v130
    %v3338 = vadd.f32 %v3218, %v131
    %v3339 = vadd.f32 %v3221, %v132
    %v3340 = vadd.f32 %v3226, %v133
    %v3341 = vadd.f32 %v3229, %v134
    %v3342 = vadd.f32 %v3234, %v135
    %v3343 = vadd.f32 %v3237, %v136
    %v3344 = vadd.f32 %v3242, %v137
    %v3345 = vadd.f32 %v3245, %v138
    %v3346 = vadd.f32 %v3250, %v139
    %v3347 = vadd.f32 %v3253, %v140
    %v3348 = vadd.f32 %v3258, %v141
    %v3349 = vadd.f32 %v3261, %v142
    %v3350 = vadd.f32 %v3266, %v143
    %v3351 = vadd.f32 %v3269, %v144
    %v3352 = vadd.f32 %v3274, %v145
    %v3353 = vadd.f32 %v3277, %v146
    %v3354 = vadd.f32 %v3282, %v147
    %v3355 = vadd.f32 %v3285, %v148
    %v3356 = vadd.f32 %v3290, %v149
    %v3357 = vadd.f32 %v3293, %v150
    %v3358 = vadd.f32 %v3298, %v151
    %v3359 = vadd.f32 %v3301, %v152
    %v3360 = vadd.f32 %v3306, %v153
    %v3361 = vadd.f32 %v3309, %v154
    %v3362 = vadd.f32 %v3314, %v155
    %v3363 = vadd.f32 %v3317, %v156
    %v3364 = vadd.f32 %v3322, %v157
    %v3365 = vadd.f32 %v3325, %v158
    %v3366 = vadd.f32 %v3330, %v159
    %v3367 = vadd.f32 %v3333, %v160
    %v3368 = vld [vmem:[%s7] sm:$0x1]
    %v3369 = vld [vmem:[%s8] sm:$0x1]
    %3370 = vadd.xlane.f32.xlu0 %v3336
    %v3371 = vpop.xlane.xlu0 %3370
    %3372 = vadd.xlane.f32.xlu0 %v3337
    %v3373 = vpop.xlane.xlu0 %3372
    %3374 = vadd.xlane.f32.xlu0 %v3338
    %v3375 = vpop.xlane.xlu0 %3374
    %3376 = vadd.xlane.f32.xlu0 %v3339
    %v3377 = vpop.xlane.xlu0 %3376
    %3378 = vadd.xlane.f32.xlu0 %v3340
    %v3379 = vpop.xlane.xlu0 %3378
    %3380 = vadd.xlane.f32.xlu0 %v3341
    %v3381 = vpop.xlane.xlu0 %3380
    %3382 = vadd.xlane.f32.xlu0 %v3342
    %v3383 = vpop.xlane.xlu0 %3382
    %3384 = vadd.xlane.f32.xlu0 %v3343
    %v3385 = vpop.xlane.xlu0 %3384
    %3386 = vadd.xlane.f32.xlu0 %v3344
    %v3387 = vpop.xlane.xlu0 %3386
    %3388 = vadd.xlane.f32.xlu0 %v3345
    %v3389 = vpop.xlane.xlu0 %3388
    %3390 = vadd.xlane.f32.xlu0 %v3346
    %v3391 = vpop.xlane.xlu0 %3390
    %3392 = vadd.xlane.f32.xlu0 %v3347
    %v3393 = vpop.xlane.xlu0 %3392
    %3394 = vadd.xlane.f32.xlu0 %v3348
    %v3395 = vpop.xlane.xlu0 %3394
    %3396 = vadd.xlane.f32.xlu0 %v3349
    %v3397 = vpop.xlane.xlu0 %3396
    %3398 = vadd.xlane.f32.xlu0 %v3350
    %v3399 = vpop.xlane.xlu0 %3398
    %3400 = vadd.xlane.f32.xlu0 %v3351
    %v3401 = vpop.xlane.xlu0 %3400
    %3402 = vadd.xlane.f32.xlu0 %v3352
    %v3403 = vpop.xlane.xlu0 %3402
    %3404 = vadd.xlane.f32.xlu0 %v3353
    %v3405 = vpop.xlane.xlu0 %3404
    %3406 = vadd.xlane.f32.xlu0 %v3354
    %v3407 = vpop.xlane.xlu0 %3406
    %3408 = vadd.xlane.f32.xlu0 %v3355
    %v3409 = vpop.xlane.xlu0 %3408
    %3410 = vadd.xlane.f32.xlu0 %v3356
    %v3411 = vpop.xlane.xlu0 %3410
    %3412 = vadd.xlane.f32.xlu0 %v3357
    %v3413 = vpop.xlane.xlu0 %3412
    %3414 = vadd.xlane.f32.xlu0 %v3358
    %v3415 = vpop.xlane.xlu0 %3414
    %3416 = vadd.xlane.f32.xlu0 %v3359
    %v3417 = vpop.xlane.xlu0 %3416
    %3418 = vadd.xlane.f32.xlu0 %v3360
    %v3419 = vpop.xlane.xlu0 %3418
    %3420 = vadd.xlane.f32.xlu0 %v3361
    %v3421 = vpop.xlane.xlu0 %3420
    %3422 = vadd.xlane.f32.xlu0 %v3362
    %v3423 = vpop.xlane.xlu0 %3422
    %3424 = vadd.xlane.f32.xlu0 %v3363
    %v3425 = vpop.xlane.xlu0 %3424
    %3426 = vadd.xlane.f32.xlu0 %v3364
    %v3427 = vpop.xlane.xlu0 %3426
    %3428 = vadd.xlane.f32.xlu0 %v3365
    %v3429 = vpop.xlane.xlu0 %3428
    %3430 = vadd.xlane.f32.xlu0 %v3366
    %v3431 = vpop.xlane.xlu0 %3430
    %3432 = vadd.xlane.f32.xlu0 %v3367
    %v3433 = vpop.xlane.xlu0 %3432
    %v3434 = vmul.f32 %v3371, %v227
    %v3435 = vmul.f32 %v3373, %v227
    %v3436 = vmul.f32 %v3375, %v227
    %v3437 = vmul.f32 %v3377, %v227
    %v3438 = vmul.f32 %v3379, %v227
    %v3439 = vmul.f32 %v3381, %v227
    %v3440 = vmul.f32 %v3383, %v227
    %v3441 = vmul.f32 %v3385, %v227
    %v3442 = vmul.f32 %v3387, %v227
    %v3443 = vmul.f32 %v3389, %v227
    %v3444 = vmul.f32 %v3391, %v227
    %v3445 = vmul.f32 %v3393, %v227
    %v3446 = vmul.f32 %v3395, %v227
    %v3447 = vmul.f32 %v3397, %v227
    %v3448 = vmul.f32 %v3399, %v227
    %v3449 = vmul.f32 %v3401, %v227
    %v3450 = vmul.f32 %v3403, %v227
    %v3451 = vmul.f32 %v3405, %v227
    %v3452 = vmul.f32 %v3407, %v227
    %v3453 = vmul.f32 %v3409, %v227
    %v3454 = vmul.f32 %v3411, %v227
    %v3455 = vmul.f32 %v3413, %v227
    %v3456 = vmul.f32 %v3415, %v227
    %v3457 = vmul.f32 %v3417, %v227
    %v3458 = vmul.f32 %v3419, %v227
    %v3459 = vmul.f32 %v3421, %v227
    %v3460 = vmul.f32 %v3423, %v227
    %v3461 = vmul.f32 %v3425, %v227
    %v3462 = vmul.f32 %v3427, %v227
    %v3463 = vmul.f32 %v3429, %v227
    %v3464 = vmul.f32 %v3431, %v227
    %v3465 = vmul.f32 %v3433, %v227
    %v3466 = vsub.f32 %v3336, %v3434
    %v3467 = vsub.f32 %v3337, %v3435
    %v3468 = vsub.f32 %v3338, %v3436
    %v3469 = vsub.f32 %v3339, %v3437
    %v3470 = vsub.f32 %v3340, %v3438
    %v3471 = vsub.f32 %v3341, %v3439
    %v3472 = vsub.f32 %v3342, %v3440
    %v3473 = vsub.f32 %v3343, %v3441
    %v3474 = vsub.f32 %v3344, %v3442
    %v3475 = vsub.f32 %v3345, %v3443
    %v3476 = vsub.f32 %v3346, %v3444
    %v3477 = vsub.f32 %v3347, %v3445
    %v3478 = vsub.f32 %v3348, %v3446
    %v3479 = vsub.f32 %v3349, %v3447
    %v3480 = vsub.f32 %v3350, %v3448
    %v3481 = vsub.f32 %v3351, %v3449
    %v3482 = vsub.f32 %v3352, %v3450
    %v3483 = vsub.f32 %v3353, %v3451
    %v3484 = vsub.f32 %v3354, %v3452
    %v3485 = vsub.f32 %v3355, %v3453
    %v3486 = vsub.f32 %v3356, %v3454
    %v3487 = vsub.f32 %v3357, %v3455
    %v3488 = vsub.f32 %v3358, %v3456
    %v3489 = vsub.f32 %v3359, %v3457
    %v3490 = vsub.f32 %v3360, %v3458
    %v3491 = vsub.f32 %v3361, %v3459
    %v3492 = vsub.f32 %v3362, %v3460
    %v3493 = vsub.f32 %v3363, %v3461
    %v3494 = vsub.f32 %v3364, %v3462
    %v3495 = vsub.f32 %v3365, %v3463
    %v3496 = vsub.f32 %v3366, %v3464
    %v3497 = vsub.f32 %v3367, %v3465
    %v3498 = vmul.f32 %v3466, %v3466
    %v3499 = vmul.f32 %v3467, %v3467
    %v3500 = vmul.f32 %v3468, %v3468
    %v3501 = vmul.f32 %v3469, %v3469
    %v3502 = vmul.f32 %v3470, %v3470
    %v3503 = vmul.f32 %v3471, %v3471
    %v3504 = vmul.f32 %v3472, %v3472
    %v3505 = vmul.f32 %v3473, %v3473
    %v3506 = vmul.f32 %v3474, %v3474
    %v3507 = vmul.f32 %v3475, %v3475
    %v3508 = vmul.f32 %v3476, %v3476
    %v3509 = vmul.f32 %v3477, %v3477
    %v3510 = vmul.f32 %v3478, %v3478
    %v3511 = vmul.f32 %v3479, %v3479
    %v3512 = vmul.f32 %v3480, %v3480
    %v3513 = vmul.f32 %v3481, %v3481
    %v3514 = vmul.f32 %v3482, %v3482
    %v3515 = vmul.f32 %v3483, %v3483
    %v3516 = vmul.f32 %v3484, %v3484
    %v3517 = vmul.f32 %v3485, %v3485
    %v3518 = vmul.f32 %v3486, %v3486
    %v3519 = vmul.f32 %v3487, %v3487
    %v3520 = vmul.f32 %v3488, %v3488
    %v3521 = vmul.f32 %v3489, %v3489
    %v3522 = vmul.f32 %v3490, %v3490
    %v3523 = vmul.f32 %v3491, %v3491
    %v3524 = vmul.f32 %v3492, %v3492
    %v3525 = vmul.f32 %v3493, %v3493
    %v3526 = vmul.f32 %v3494, %v3494
    %v3527 = vmul.f32 %v3495, %v3495
    %v3528 = vmul.f32 %v3496, %v3496
    %v3529 = vmul.f32 %v3497, %v3497
    %3530 = vadd.xlane.f32.xlu0 %v3498
    %v3531 = vpop.xlane.xlu0 %3530
    %3532 = vadd.xlane.f32.xlu0 %v3499
    %v3533 = vpop.xlane.xlu0 %3532
    %3534 = vadd.xlane.f32.xlu0 %v3500
    %v3535 = vpop.xlane.xlu0 %3534
    %3536 = vadd.xlane.f32.xlu0 %v3501
    %v3537 = vpop.xlane.xlu0 %3536
    %3538 = vadd.xlane.f32.xlu0 %v3502
    %v3539 = vpop.xlane.xlu0 %3538
    %3540 = vadd.xlane.f32.xlu0 %v3503
    %v3541 = vpop.xlane.xlu0 %3540
    %3542 = vadd.xlane.f32.xlu0 %v3504
    %v3543 = vpop.xlane.xlu0 %3542
    %3544 = vadd.xlane.f32.xlu0 %v3505
    %v3545 = vpop.xlane.xlu0 %3544
    %3546 = vadd.xlane.f32.xlu0 %v3506
    %v3547 = vpop.xlane.xlu0 %3546
    %3548 = vadd.xlane.f32.xlu0 %v3507
    %v3549 = vpop.xlane.xlu0 %3548
    %3550 = vadd.xlane.f32.xlu0 %v3508
    %v3551 = vpop.xlane.xlu0 %3550
    %3552 = vadd.xlane.f32.xlu0 %v3509
    %v3553 = vpop.xlane.xlu0 %3552
    %3554 = vadd.xlane.f32.xlu0 %v3510
    %v3555 = vpop.xlane.xlu0 %3554
    %3556 = vadd.xlane.f32.xlu0 %v3511
    %v3557 = vpop.xlane.xlu0 %3556
    %3558 = vadd.xlane.f32.xlu0 %v3512
    %v3559 = vpop.xlane.xlu0 %3558
    %3560 = vadd.xlane.f32.xlu0 %v3513
    %v3561 = vpop.xlane.xlu0 %3560
    %3562 = vadd.xlane.f32.xlu0 %v3514
    %v3563 = vpop.xlane.xlu0 %3562
    %3564 = vadd.xlane.f32.xlu0 %v3515
    %v3565 = vpop.xlane.xlu0 %3564
    %3566 = vadd.xlane.f32.xlu0 %v3516
    %v3567 = vpop.xlane.xlu0 %3566
    %3568 = vadd.xlane.f32.xlu0 %v3517
    %v3569 = vpop.xlane.xlu0 %3568
    %3570 = vadd.xlane.f32.xlu0 %v3518
    %v3571 = vpop.xlane.xlu0 %3570
    %3572 = vadd.xlane.f32.xlu0 %v3519
    %v3573 = vpop.xlane.xlu0 %3572
    %3574 = vadd.xlane.f32.xlu0 %v3520
    %v3575 = vpop.xlane.xlu0 %3574
    %3576 = vadd.xlane.f32.xlu0 %v3521
    %v3577 = vpop.xlane.xlu0 %3576
    %3578 = vadd.xlane.f32.xlu0 %v3522
    %v3579 = vpop.xlane.xlu0 %3578
    %3580 = vadd.xlane.f32.xlu0 %v3523
    %v3581 = vpop.xlane.xlu0 %3580
    %3582 = vadd.xlane.f32.xlu0 %v3524
    %v3583 = vpop.xlane.xlu0 %3582
    %3584 = vadd.xlane.f32.xlu0 %v3525
    %v3585 = vpop.xlane.xlu0 %3584
    %3586 = vadd.xlane.f32.xlu0 %v3526
    %v3587 = vpop.xlane.xlu0 %3586
    %3588 = vadd.xlane.f32.xlu0 %v3527
    %v3589 = vpop.xlane.xlu0 %3588
    %3590 = vadd.xlane.f32.xlu0 %v3528
    %v3591 = vpop.xlane.xlu0 %3590
    %3592 = vadd.xlane.f32.xlu0 %v3529
    %v3593 = vpop.xlane.xlu0 %3592
    %v3594 = vmul.f32 %v3531, %v227
    %v3595 = vmul.f32 %v3533, %v227
    %v3596 = vmul.f32 %v3535, %v227
    %v3597 = vmul.f32 %v3537, %v227
    %v3598 = vmul.f32 %v3539, %v227
    %v3599 = vmul.f32 %v3541, %v227
    %v3600 = vmul.f32 %v3543, %v227
    %v3601 = vmul.f32 %v3545, %v227
    %v3602 = vmul.f32 %v3547, %v227
    %v3603 = vmul.f32 %v3549, %v227
    %v3604 = vmul.f32 %v3551, %v227
    %v3605 = vmul.f32 %v3553, %v227
    %v3606 = vmul.f32 %v3555, %v227
    %v3607 = vmul.f32 %v3557, %v227
    %v3608 = vmul.f32 %v3559, %v227
    %v3609 = vmul.f32 %v3561, %v227
    %v3610 = vmul.f32 %v3563, %v227
    %v3611 = vmul.f32 %v3565, %v227
    %v3612 = vmul.f32 %v3567, %v227
    %v3613 = vmul.f32 %v3569, %v227
    %v3614 = vmul.f32 %v3571, %v227
    %v3615 = vmul.f32 %v3573, %v227
    %v3616 = vmul.f32 %v3575, %v227
    %v3617 = vmul.f32 %v3577, %v227
    %v3618 = vmul.f32 %v3579, %v227
    %v3619 = vmul.f32 %v3581, %v227
    %v3620 = vmul.f32 %v3583, %v227
    %v3621 = vmul.f32 %v3585, %v227
    %v3622 = vmul.f32 %v3587, %v227
    %v3623 = vmul.f32 %v3589, %v227
    %v3624 = vmul.f32 %v3591, %v227
    %v3625 = vmul.f32 %v3593, %v227
    %v3626 = vadd.f32 %v3594, 1e-05
    %v3627 = vadd.f32 %v3595, 1e-05
    %v3628 = vadd.f32 %v3596, 1e-05
    %v3629 = vadd.f32 %v3597, 1e-05
    %v3630 = vadd.f32 %v3598, 1e-05
    %v3631 = vadd.f32 %v3599, 1e-05
    %v3632 = vadd.f32 %v3600, 1e-05
    %v3633 = vadd.f32 %v3601, 1e-05
    %v3634 = vadd.f32 %v3602, 1e-05
    %v3635 = vadd.f32 %v3603, 1e-05
    %v3636 = vadd.f32 %v3604, 1e-05
    %v3637 = vadd.f32 %v3605, 1e-05
    %v3638 = vadd.f32 %v3606, 1e-05
    %v3639 = vadd.f32 %v3607, 1e-05
    %v3640 = vadd.f32 %v3608, 1e-05
    %v3641 = vadd.f32 %v3609, 1e-05
    %v3642 = vadd.f32 %v3610, 1e-05
    %v3643 = vadd.f32 %v3611, 1e-05
    %v3644 = vadd.f32 %v3612, 1e-05
    %v3645 = vadd.f32 %v3613, 1e-05
    %v3646 = vadd.f32 %v3614, 1e-05
    %v3647 = vadd.f32 %v3615, 1e-05
    %v3648 = vadd.f32 %v3616, 1e-05
    %v3649 = vadd.f32 %v3617, 1e-05
    %v3650 = vadd.f32 %v3618, 1e-05
    %v3651 = vadd.f32 %v3619, 1e-05
    %v3652 = vadd.f32 %v3620, 1e-05
    %v3653 = vadd.f32 %v3621, 1e-05
    %v3654 = vadd.f32 %v3622, 1e-05
    %v3655 = vadd.f32 %v3623, 1e-05
    %v3656 = vadd.f32 %v3624, 1e-05
    %v3657 = vadd.f32 %v3625, 1e-05
    %v3658 = vrsqrt.pop %v3626
    %v3659 = vrsqrt.pop %v3627
    %v3660 = vrsqrt.pop %v3628
    %v3661 = vrsqrt.pop %v3629
    %v3662 = vrsqrt.pop %v3630
    %v3663 = vrsqrt.pop %v3631
    %v3664 = vrsqrt.pop %v3632
    %v3665 = vrsqrt.pop %v3633
    %v3666 = vrsqrt.pop %v3634
    %v3667 = vrsqrt.pop %v3635
    %v3668 = vrsqrt.pop %v3636
    %v3669 = vrsqrt.pop %v3637
    %v3670 = vrsqrt.pop %v3638
    %v3671 = vrsqrt.pop %v3639
    %v3672 = vrsqrt.pop %v3640
    %v3673 = vrsqrt.pop %v3641
    %v3674 = vrsqrt.pop %v3642
    %v3675 = vrsqrt.pop %v3643
    %v3676 = vrsqrt.pop %v3644
    %v3677 = vrsqrt.pop %v3645
    %v3678 = vrsqrt.pop %v3646
    %v3679 = vrsqrt.pop %v3647
    %v3680 = vrsqrt.pop %v3648
    %v3681 = vrsqrt.pop %v3649
    %v3682 = vrsqrt.pop %v3650
    %v3683 = vrsqrt.pop %v3651
    %v3684 = vrsqrt.pop %v3652
    %v3685 = vrsqrt.pop %v3653
    %v3686 = vrsqrt.pop %v3654
    %v3687 = vrsqrt.pop %v3655
    %v3688 = vrsqrt.pop %v3656
    %v3689 = vrsqrt.pop %v3657
    %v3691 = vlaneseq
    %v3692 = vshrl.u32 %v3691, 7
    %v3693 = vsub.s32 0, %v3692
    %v3694 = vrot.slane %v3368, %v3693
    %v3696 = vmul.f32 %v3658, %v3694
    %v3697 = vmul.f32 %v3659, %v3694
    %v3698 = vmul.f32 %v3660, %v3694
    %v3699 = vmul.f32 %v3661, %v3694
    %v3700 = vmul.f32 %v3662, %v3694
    %v3701 = vmul.f32 %v3663, %v3694
    %v3702 = vmul.f32 %v3664, %v3694
    %v3703 = vmul.f32 %v3665, %v3694
    %v3704 = vmul.f32 %v3666, %v3694
    %v3705 = vmul.f32 %v3667, %v3694
    %v3706 = vmul.f32 %v3668, %v3694
    %v3707 = vmul.f32 %v3669, %v3694
    %v3708 = vmul.f32 %v3670, %v3694
    %v3709 = vmul.f32 %v3671, %v3694
    %v3710 = vmul.f32 %v3672, %v3694
    %v3711 = vmul.f32 %v3673, %v3694
    %v3712 = vmul.f32 %v3674, %v3694
    %v3713 = vmul.f32 %v3675, %v3694
    %v3714 = vmul.f32 %v3676, %v3694
    %v3715 = vmul.f32 %v3677, %v3694
    %v3716 = vmul.f32 %v3678, %v3694
    %v3717 = vmul.f32 %v3679, %v3694
    %v3718 = vmul.f32 %v3680, %v3694
    %v3719 = vmul.f32 %v3681, %v3694
    %v3720 = vmul.f32 %v3682, %v3694
    %v3721 = vmul.f32 %v3683, %v3694
    %v3722 = vmul.f32 %v3684, %v3694
    %v3723 = vmul.f32 %v3685, %v3694
    %v3724 = vmul.f32 %v3686, %v3694
    %v3725 = vmul.f32 %v3687, %v3694
    %v3726 = vmul.f32 %v3688, %v3694
    %v3727 = vmul.f32 %v3689, %v3694
    %v3728 = vmul.f32 %v3466, %v3696
    %v3729 = vmul.f32 %v3467, %v3697
    %v3730 = vmul.f32 %v3468, %v3698
    %v3731 = vmul.f32 %v3469, %v3699
    %v3732 = vmul.f32 %v3470, %v3700
    %v3733 = vmul.f32 %v3471, %v3701
    %v3734 = vmul.f32 %v3472, %v3702
    %v3735 = vmul.f32 %v3473, %v3703
    %v3736 = vmul.f32 %v3474, %v3704
    %v3737 = vmul.f32 %v3475, %v3705
    %v3738 = vmul.f32 %v3476, %v3706
    %v3739 = vmul.f32 %v3477, %v3707
    %v3740 = vmul.f32 %v3478, %v3708
    %v3741 = vmul.f32 %v3479, %v3709
    %v3742 = vmul.f32 %v3480, %v3710
    %v3743 = vmul.f32 %v3481, %v3711
    %v3744 = vmul.f32 %v3482, %v3712
    %v3745 = vmul.f32 %v3483, %v3713
    %v3746 = vmul.f32 %v3484, %v3714
    %v3747 = vmul.f32 %v3485, %v3715
    %v3748 = vmul.f32 %v3486, %v3716
    %v3749 = vmul.f32 %v3487, %v3717
    %v3750 = vmul.f32 %v3488, %v3718
    %v3751 = vmul.f32 %v3489, %v3719
    %v3752 = vmul.f32 %v3490, %v3720
    %v3753 = vmul.f32 %v3491, %v3721
    %v3754 = vmul.f32 %v3492, %v3722
    %v3755 = vmul.f32 %v3493, %v3723
    %v3756 = vmul.f32 %v3494, %v3724
    %v3757 = vmul.f32 %v3495, %v3725
    %v3758 = vmul.f32 %v3496, %v3726
    %v3759 = vmul.f32 %v3497, %v3727
    %v3761 = vlaneseq
    %v3762 = vshrl.u32 %v3761, 7
    %v3763 = vsub.s32 0, %v3762
    %v3764 = vrot.slane %v3369, %v3763
    %v3766 = vadd.f32 %v3728, %v3764
    %v3767 = vadd.f32 %v3729, %v3764
    %v3768 = vadd.f32 %v3730, %v3764
    %v3769 = vadd.f32 %v3731, %v3764
    %v3770 = vadd.f32 %v3732, %v3764
    %v3771 = vadd.f32 %v3733, %v3764
    %v3772 = vadd.f32 %v3734, %v3764
    %v3773 = vadd.f32 %v3735, %v3764
    %v3774 = vadd.f32 %v3736, %v3764
    %v3775 = vadd.f32 %v3737, %v3764
    %v3776 = vadd.f32 %v3738, %v3764
    %v3777 = vadd.f32 %v3739, %v3764
    %v3778 = vadd.f32 %v3740, %v3764
    %v3779 = vadd.f32 %v3741, %v3764
    %v3780 = vadd.f32 %v3742, %v3764
    %v3781 = vadd.f32 %v3743, %v3764
    %v3782 = vadd.f32 %v3744, %v3764
    %v3783 = vadd.f32 %v3745, %v3764
    %v3784 = vadd.f32 %v3746, %v3764
    %v3785 = vadd.f32 %v3747, %v3764
    %v3786 = vadd.f32 %v3748, %v3764
    %v3787 = vadd.f32 %v3749, %v3764
    %v3788 = vadd.f32 %v3750, %v3764
    %v3789 = vadd.f32 %v3751, %v3764
    %v3790 = vadd.f32 %v3752, %v3764
    %v3791 = vadd.f32 %v3753, %v3764
    %v3792 = vadd.f32 %v3754, %v3764
    %v3793 = vadd.f32 %v3755, %v3764
    %v3794 = vadd.f32 %v3756, %v3764
    %v3795 = vadd.f32 %v3757, %v3764
    %v3796 = vadd.f32 %v3758, %v3764
    %v3797 = vadd.f32 %v3759, %v3764
    %s3798 = smul.u32 %s3084, 4
    %s3799 = sshll.u32 %s3798, 4
    %3800 = dma.done %s105, %s3799
    %v3801 = vpack.c.bf16 %v3767, %v3766
    %v3802 = vpack.c.bf16 %v3769, %v3768
    %v3803 = vpack.c.bf16 %v3771, %v3770
    %v3804 = vpack.c.bf16 %v3773, %v3772
    %v3805 = vpack.c.bf16 %v3775, %v3774
    %v3806 = vpack.c.bf16 %v3777, %v3776
    %v3807 = vpack.c.bf16 %v3779, %v3778
    %v3808 = vpack.c.bf16 %v3781, %v3780
    %v3809 = vpack.c.bf16 %v3783, %v3782
    %v3810 = vpack.c.bf16 %v3785, %v3784
    %v3811 = vpack.c.bf16 %v3787, %v3786
    %v3812 = vpack.c.bf16 %v3789, %v3788
    %v3813 = vpack.c.bf16 %v3791, %v3790
    %v3814 = vpack.c.bf16 %v3793, %v3792
    %v3815 = vpack.c.bf16 %v3795, %v3794
    %v3816 = vpack.c.bf16 %v3797, %v3796
    %v3817 = vld [vmem:[#allocation3] sm:$0xff]
    %v3818 = vld [vmem:[#allocation3 + $0x8] sm:$0xff]
    %v3819 = vld [vmem:[#allocation3 + $0x10] sm:$0xff]
    %v3820 = vld [vmem:[#allocation3 + $0x18] sm:$0xff]
    %v3821 = vld [vmem:[#allocation3 + $0x20] sm:$0xff]
    %v3822 = vld [vmem:[#allocation3 + $0x28] sm:$0xff]
    %v3823 = vld [vmem:[#allocation3 + $0x30] sm:$0xff]
    %v3824 = vld [vmem:[#allocation3 + $0x38] sm:$0xff]
    %v3825 = vld [vmem:[#allocation3 + $0x40] sm:$0xff]
    %v3826 = vld [vmem:[#allocation3 + $0x48] sm:$0xff]
    %v3827 = vld [vmem:[#allocation3 + $0x50] sm:$0xff]
    %v3828 = vld [vmem:[#allocation3 + $0x58] sm:$0xff]
    %v3829 = vld [vmem:[#allocation3 + $0x60] sm:$0xff]
    %v3830 = vld [vmem:[#allocation3 + $0x68] sm:$0xff]
    %v3831 = vld [vmem:[#allocation3 + $0x70] sm:$0xff]
    %v3832 = vld [vmem:[#allocation3 + $0x78] sm:$0xff]
    %v3833 = vld [vmem:[#allocation3 + $0x80] sm:$0xff]
    %v3834 = vld [vmem:[#allocation3 + $0x88] sm:$0xff]
    %v3835 = vld [vmem:[#allocation3 + $0x90] sm:$0xff]
    %v3836 = vld [vmem:[#allocation3 + $0x98] sm:$0xff]
    %v3837 = vld [vmem:[#allocation3 + $0xa0] sm:$0xff]
    %v3838 = vld [vmem:[#allocation3 + $0xa8] sm:$0xff]
    %v3839 = vld [vmem:[#allocation3 + $0xb0] sm:$0xff]
    %v3840 = vld [vmem:[#allocation3 + $0xb8] sm:$0xff]
    %v3841 = vld [vmem:[#allocation3 + $0xc0] sm:$0xff]
    %v3842 = vld [vmem:[#allocation3 + $0xc8] sm:$0xff]
    %v3843 = vld [vmem:[#allocation3 + $0xd0] sm:$0xff]
    %v3844 = vld [vmem:[#allocation3 + $0xd8] sm:$0xff]
    %v3845 = vld [vmem:[#allocation3 + $0xe0] sm:$0xff]
    %v3846 = vld [vmem:[#allocation3 + $0xe8] sm:$0xff]
    %v3847 = vld [vmem:[#allocation3 + $0xf0] sm:$0xff]
    %v3848 = vld [vmem:[#allocation3 + $0xf8] sm:$0xff]
    %v3849 = vld [vmem:[%s10] sm:$0xf]
    %v3851 = vlaneseq
    %v3852 = vshrl.u32 %v3851, 7
    %v3853 = vsub.s32 0, %v3852
    %v3854 = vrot.slane %v3849, %v3853
    %v3855 = vlaneseq
    %v3856 = vshrl.u32 %v3855, 7
    %v3857 = vsub.s32 1, %v3856
    %v3858 = vrot.slane %v3849, %v3857
    %v3859 = vlaneseq
    %v3860 = vshrl.u32 %v3859, 7
    %v3861 = vsub.s32 2, %v3860
    %v3862 = vrot.slane %v3849, %v3861
    %v3863 = vlaneseq
    %v3864 = vshrl.u32 %v3863, 7
    %v3865 = vsub.s32 3, %v3864
    %v3866 = vrot.slane %v3849, %v3865
    %v3903 = vunpack.c.l.b16 %v3817
    %v3904 = vunpack.c.h.b16 %v3817
    %v3905 = vunpack.c.l.b16 %v3818
    %v3906 = vunpack.c.h.b16 %v3818
    %v3907 = vunpack.c.l.b16 %v3819
    %v3908 = vunpack.c.h.b16 %v3819
    %v3909 = vunpack.c.l.b16 %v3820
    %v3910 = vunpack.c.h.b16 %v3820
    %v3911 = vunpack.c.l.b16 %v3821
    %v3912 = vunpack.c.h.b16 %v3821
    %v3913 = vunpack.c.l.b16 %v3822
    %v3914 = vunpack.c.h.b16 %v3822
    %v3915 = vunpack.c.l.b16 %v3823
    %v3916 = vunpack.c.h.b16 %v3823
    %v3917 = vunpack.c.l.b16 %v3824
    %v3918 = vunpack.c.h.b16 %v3824
    %v3919 = vunpack.c.l.b16 %v3825
    %v3920 = vunpack.c.h.b16 %v3825
    %v3921 = vunpack.c.l.b16 %v3826
    %v3922 = vunpack.c.h.b16 %v3826
    %v3923 = vunpack.c.l.b16 %v3827
    %v3924 = vunpack.c.h.b16 %v3827
    %v3925 = vunpack.c.l.b16 %v3828
    %v3926 = vunpack.c.h.b16 %v3828
    %v3927 = vunpack.c.l.b16 %v3829
    %v3928 = vunpack.c.h.b16 %v3829
    %v3929 = vunpack.c.l.b16 %v3830
    %v3930 = vunpack.c.h.b16 %v3830
    %v3931 = vunpack.c.l.b16 %v3831
    %v3932 = vunpack.c.h.b16 %v3831
    %v3933 = vunpack.c.l.b16 %v3832
    %v3934 = vunpack.c.h.b16 %v3832
    %v3935 = vunpack.c.l.b16 %v3833
    %v3936 = vunpack.c.h.b16 %v3833
    %v3937 = vunpack.c.l.b16 %v3834
    %v3938 = vunpack.c.h.b16 %v3834
    %v3939 = vunpack.c.l.b16 %v3835
    %v3940 = vunpack.c.h.b16 %v3835
    %v3941 = vunpack.c.l.b16 %v3836
    %v3942 = vunpack.c.h.b16 %v3836
    %v3943 = vunpack.c.l.b16 %v3837
    %v3944 = vunpack.c.h.b16 %v3837
    %v3945 = vunpack.c.l.b16 %v3838
    %v3946 = vunpack.c.h.b16 %v3838
    %v3947 = vunpack.c.l.b16 %v3839
    %v3948 = vunpack.c.h.b16 %v3839
    %v3949 = vunpack.c.l.b16 %v3840
    %v3950 = vunpack.c.h.b16 %v3840
    %v3951 = vunpack.c.l.b16 %v3841
    %v3952 = vunpack.c.h.b16 %v3841
    %v3953 = vunpack.c.l.b16 %v3842
    %v3954 = vunpack.c.h.b16 %v3842
    %v3955 = vunpack.c.l.b16 %v3843
    %v3956 = vunpack.c.h.b16 %v3843
    %v3957 = vunpack.c.l.b16 %v3844
    %v3958 = vunpack.c.h.b16 %v3844
    %v3959 = vunpack.c.l.b16 %v3845
    %v3960 = vunpack.c.h.b16 %v3845
    %v3961 = vunpack.c.l.b16 %v3846
    %v3962 = vunpack.c.h.b16 %v3846
    %v3963 = vunpack.c.l.b16 %v3847
    %v3964 = vunpack.c.h.b16 %v3847
    %v3965 = vunpack.c.l.b16 %v3848
    %v3966 = vunpack.c.h.b16 %v3848
    %v3967 = vpack.c.b16 %v3907, %v3903
    %v3968 = vpack.c.b16 %v3908, %v3904
    %v3969 = vpack.c.b16 %v3909, %v3905
    %v3970 = vpack.c.b16 %v3910, %v3906
    %v3971 = vpack.c.b16 %v3915, %v3911
    %v3972 = vpack.c.b16 %v3916, %v3912
    %v3973 = vpack.c.b16 %v3917, %v3913
    %v3974 = vpack.c.b16 %v3918, %v3914
    %v3975 = vpack.c.b16 %v3923, %v3919
    %v3976 = vpack.c.b16 %v3924, %v3920
    %v3977 = vpack.c.b16 %v3925, %v3921
    %v3978 = vpack.c.b16 %v3926, %v3922
    %v3979 = vpack.c.b16 %v3931, %v3927
    %v3980 = vpack.c.b16 %v3932, %v3928
    %v3981 = vpack.c.b16 %v3933, %v3929
    %v3982 = vpack.c.b16 %v3934, %v3930
    %v3983 = vpack.c.b16 %v3939, %v3935
    %v3984 = vpack.c.b16 %v3940, %v3936
    %v3985 = vpack.c.b16 %v3941, %v3937
    %v3986 = vpack.c.b16 %v3942, %v3938
    %v3987 = vpack.c.b16 %v3947, %v3943
    %v3988 = vpack.c.b16 %v3948, %v3944
    %v3989 = vpack.c.b16 %v3949, %v3945
    %v3990 = vpack.c.b16 %v3950, %v3946
    %v3991 = vpack.c.b16 %v3955, %v3951
    %v3992 = vpack.c.b16 %v3956, %v3952
    %v3993 = vpack.c.b16 %v3957, %v3953
    %v3994 = vpack.c.b16 %v3958, %v3954
    %v3995 = vpack.c.b16 %v3963, %v3959
    %v3996 = vpack.c.b16 %v3964, %v3960
    %v3997 = vpack.c.b16 %v3965, %v3961
    %v3998 = vpack.c.b16 %v3966, %v3962
    %4031 = vmatprep.subr.bf16.mxu0 %v3996
    %4032 = vmatpush1.bf16.msra.mxu0 %v3995
    %4033 = vmatprep.subr.bf16.mxu0 %v3992
    %4034 = vmatpush1.bf16.msra.mxu0 %v3991
    %4035 = vmatprep.subr.bf16.mxu0 %v3988
    %4036 = vmatpush1.bf16.msra.mxu0 %v3987
    %4037 = vmatprep.subr.bf16.mxu0 %v3984
    %4038 = vmatpush1.bf16.msra.mxu0 %v3983
    %4039 = vmatprep.subr.bf16.mxu0 %v3980
    %4040 = vmatpush1.bf16.msra.mxu0 %v3979
    %4041 = vmatprep.subr.bf16.mxu0 %v3976
    %4042 = vmatpush1.bf16.msra.mxu0 %v3975
    %4043 = vmatprep.subr.bf16.mxu0 %v3972
    %4044 = vmatpush1.bf16.msra.mxu0 %v3971
    %4045 = vmatprep.subr.bf16.mxu0 %v3968
    %4046 = vmatpush1.bf16.msra.mxu0 %v3967
    %4047 = vmatprep.subr.bf16.mxu0 0
    %4048 = vmatpush2.bf16.msra.mxu0 0
    %4049 = vmatprep.subr.bf16.mxu0 0
    %4050 = vmatpush2.bf16.msra.mxu0 0
    %4051 = vmatprep.subr.bf16.mxu0 0
    %4052 = vmatpush2.bf16.msra.mxu0 0
    %4053 = vmatprep.subr.bf16.mxu0 0
    %4054 = vmatpush2.bf16.msra.mxu0 0
    %4055 = vmatprep.subr.bf16.mxu0 0
    %4056 = vmatpush2.bf16.msra.mxu0 0
    %4057 = vmatprep.subr.bf16.mxu0 0
    %4058 = vmatpush2.bf16.msra.mxu0 0
    %4059 = vmatprep.subr.bf16.mxu0 0
    %4060 = vmatpush2.bf16.msra.mxu0 0
    %4061 = vmatprep.subr.bf16.mxu0 0
    %4062 = vmatpush2.bf16.msra.mxu0 0
    %4063 = vmatprep.mubr.bf16.mxu0 0
    %4064 = vmatmul.mubr.bf16.gmra.mxu0 %v3801
    %v4065 = vpop.f32.mrf.mxu0
    %v4066 = vadd.f32 %v3854, %v4065
    %v4067 = vpop.f32.mrf.mxu0
    %v4068 = vadd.f32 %v3858, %v4067
    %v4069 = vpop.f32.mrf.mxu0
    %v4070 = vadd.f32 %v3854, %v4069
    %v4071 = vpop.f32.mrf.mxu0
    %v4072 = vadd.f32 %v3858, %v4071
    %4073 = vmatprep.mubr.bf16.mxu0 0
    %4074 = vmatmul.mubr.bf16.gmra.mxu0 %v3802
    %v4075 = vpop.f32.mrf.mxu0
    %v4076 = vadd.f32 %v3854, %v4075
    %v4077 = vpop.f32.mrf.mxu0
    %v4078 = vadd.f32 %v3858, %v4077
    %v4079 = vpop.f32.mrf.mxu0
    %v4080 = vadd.f32 %v3854, %v4079
    %v4081 = vpop.f32.mrf.mxu0
    %v4082 = vadd.f32 %v3858, %v4081
    %4083 = vmatprep.mubr.bf16.mxu0 0
    %4084 = vmatmul.mubr.bf16.gmra.mxu0 %v3803
    %v4085 = vpop.f32.mrf.mxu0
    %v4086 = vadd.f32 %v3854, %v4085
    %v4087 = vpop.f32.mrf.mxu0
    %v4088 = vadd.f32 %v3858, %v4087
    %v4089 = vpop.f32.mrf.mxu0
    %v4090 = vadd.f32 %v3854, %v4089
    %v4091 = vpop.f32.mrf.mxu0
    %v4092 = vadd.f32 %v3858, %v4091
    %4093 = vmatprep.mubr.bf16.mxu0 0
    %4094 = vmatmul.mubr.bf16.gmra.mxu0 %v3804
    %v4095 = vpop.f32.mrf.mxu0
    %v4096 = vadd.f32 %v3854, %v4095
    %v4097 = vpop.f32.mrf.mxu0
    %v4098 = vadd.f32 %v3858, %v4097
    %v4099 = vpop.f32.mrf.mxu0
    %v4100 = vadd.f32 %v3854, %v4099
    %v4101 = vpop.f32.mrf.mxu0
    %v4102 = vadd.f32 %v3858, %v4101
    %4103 = vmatprep.mubr.bf16.mxu0 0
    %4104 = vmatmul.mubr.bf16.gmra.mxu0 %v3805
    %v4105 = vpop.f32.mrf.mxu0
    %v4106 = vadd.f32 %v3854, %v4105
    %v4107 = vpop.f32.mrf.mxu0
    %v4108 = vadd.f32 %v3858, %v4107
    %v4109 = vpop.f32.mrf.mxu0
    %v4110 = vadd.f32 %v3854, %v4109
    %v4111 = vpop.f32.mrf.mxu0
    %v4112 = vadd.f32 %v3858, %v4111
    %4113 = vmatprep.mubr.bf16.mxu0 0
    %4114 = vmatmul.mubr.bf16.gmra.mxu0 %v3806
    %v4115 = vpop.f32.mrf.mxu0
    %v4116 = vadd.f32 %v3854, %v4115
    %v4117 = vpop.f32.mrf.mxu0
    %v4118 = vadd.f32 %v3858, %v4117
    %v4119 = vpop.f32.mrf.mxu0
    %v4120 = vadd.f32 %v3854, %v4119
    %v4121 = vpop.f32.mrf.mxu0
    %v4122 = vadd.f32 %v3858, %v4121
    %4123 = vmatprep.mubr.bf16.mxu0 0
    %4124 = vmatmul.mubr.bf16.gmra.mxu0 %v3807
    %v4125 = vpop.f32.mrf.mxu0
    %v4126 = vadd.f32 %v3854, %v4125
    %v4127 = vpop.f32.mrf.mxu0
    %v4128 = vadd.f32 %v3858, %v4127
    %v4129 = vpop.f32.mrf.mxu0
    %v4130 = vadd.f32 %v3854, %v4129
    %v4131 = vpop.f32.mrf.mxu0
    %v4132 = vadd.f32 %v3858, %v4131
    %4133 = vmatprep.mubr.bf16.mxu0 0
    %4134 = vmatmul.mubr.bf16.gmra.mxu0 %v3808
    %v4135 = vpop.f32.mrf.mxu0
    %v4136 = vadd.f32 %v3854, %v4135
    %v4137 = vpop.f32.mrf.mxu0
    %v4138 = vadd.f32 %v3858, %v4137
    %v4139 = vpop.f32.mrf.mxu0
    %v4140 = vadd.f32 %v3854, %v4139
    %v4141 = vpop.f32.mrf.mxu0
    %v4142 = vadd.f32 %v3858, %v4141
    %4143 = vmatprep.mubr.bf16.mxu0 0
    %4144 = vmatmul.mubr.bf16.gmra.mxu0 %v3809
    %v4145 = vpop.f32.mrf.mxu0
    %v4146 = vadd.f32 %v3854, %v4145
    %v4147 = vpop.f32.mrf.mxu0
    %v4148 = vadd.f32 %v3858, %v4147
    %v4149 = vpop.f32.mrf.mxu0
    %v4150 = vadd.f32 %v3854, %v4149
    %v4151 = vpop.f32.mrf.mxu0
    %v4152 = vadd.f32 %v3858, %v4151
    %4153 = vmatprep.mubr.bf16.mxu0 0
    %4154 = vmatmul.mubr.bf16.gmra.mxu0 %v3810
    %v4155 = vpop.f32.mrf.mxu0
    %v4156 = vadd.f32 %v3854, %v4155
    %v4157 = vpop.f32.mrf.mxu0
    %v4158 = vadd.f32 %v3858, %v4157
    %v4159 = vpop.f32.mrf.mxu0
    %v4160 = vadd.f32 %v3854, %v4159
    %v4161 = vpop.f32.mrf.mxu0
    %v4162 = vadd.f32 %v3858, %v4161
    %4163 = vmatprep.mubr.bf16.mxu0 0
    %4164 = vmatmul.mubr.bf16.gmra.mxu0 %v3811
    %v4165 = vpop.f32.mrf.mxu0
    %v4166 = vadd.f32 %v3854, %v4165
    %v4167 = vpop.f32.mrf.mxu0
    %v4168 = vadd.f32 %v3858, %v4167
    %v4169 = vpop.f32.mrf.mxu0
    %v4170 = vadd.f32 %v3854, %v4169
    %v4171 = vpop.f32.mrf.mxu0
    %v4172 = vadd.f32 %v3858, %v4171
    %4173 = vmatprep.mubr.bf16.mxu0 0
    %4174 = vmatmul.mubr.bf16.gmra.mxu0 %v3812
    %v4175 = vpop.f32.mrf.mxu0
    %v4176 = vadd.f32 %v3854, %v4175
    %v4177 = vpop.f32.mrf.mxu0
    %v4178 = vadd.f32 %v3858, %v4177
    %v4179 = vpop.f32.mrf.mxu0
    %v4180 = vadd.f32 %v3854, %v4179
    %v4181 = vpop.f32.mrf.mxu0
    %v4182 = vadd.f32 %v3858, %v4181
    %4183 = vmatprep.mubr.bf16.mxu0 0
    %4184 = vmatmul.mubr.bf16.gmra.mxu0 %v3813
    %v4185 = vpop.f32.mrf.mxu0
    %v4186 = vadd.f32 %v3854, %v4185
    %v4187 = vpop.f32.mrf.mxu0
    %v4188 = vadd.f32 %v3858, %v4187
    %v4189 = vpop.f32.mrf.mxu0
    %v4190 = vadd.f32 %v3854, %v4189
    %v4191 = vpop.f32.mrf.mxu0
    %v4192 = vadd.f32 %v3858, %v4191
    %4193 = vmatprep.mubr.bf16.mxu0 0
    %4194 = vmatmul.mubr.bf16.gmra.mxu0 %v3814
    %v4195 = vpop.f32.mrf.mxu0
    %v4196 = vadd.f32 %v3854, %v4195
    %v4197 = vpop.f32.mrf.mxu0
    %v4198 = vadd.f32 %v3858, %v4197
    %v4199 = vpop.f32.mrf.mxu0
    %v4200 = vadd.f32 %v3854, %v4199
    %v4201 = vpop.f32.mrf.mxu0
    %v4202 = vadd.f32 %v3858, %v4201
    %4203 = vmatprep.mubr.bf16.mxu0 0
    %4204 = vmatmul.mubr.bf16.gmra.mxu0 %v3815
    %v4205 = vpop.f32.mrf.mxu0
    %v4206 = vadd.f32 %v3854, %v4205
    %v4207 = vpop.f32.mrf.mxu0
    %v4208 = vadd.f32 %v3858, %v4207
    %v4209 = vpop.f32.mrf.mxu0
    %v4210 = vadd.f32 %v3854, %v4209
    %v4211 = vpop.f32.mrf.mxu0
    %v4212 = vadd.f32 %v3858, %v4211
    %4213 = vmatprep.mubr.bf16.mxu0 0
    %4214 = vmatmul.mubr.bf16.gmra.mxu0 %v3816
    %v4215 = vpop.f32.mrf.mxu0
    %v4216 = vadd.f32 %v3854, %v4215
    %v4217 = vpop.f32.mrf.mxu0
    %v4218 = vadd.f32 %v3858, %v4217
    %v4219 = vpop.f32.mrf.mxu0
    %v4220 = vadd.f32 %v3854, %v4219
    %v4221 = vpop.f32.mrf.mxu0
    %v4222 = vadd.f32 %v3858, %v4221
    %4223 = vdwg.mxu0
    %4224 = vmatprep.subr.bf16.mxu0 %v3998
    %4225 = vmatpush1.bf16.msra.mxu0 %v3997
    %4226 = vmatprep.subr.bf16.mxu0 %v3994
    %4227 = vmatpush1.bf16.msra.mxu0 %v3993
    %4228 = vmatprep.subr.bf16.mxu0 %v3990
    %4229 = vmatpush1.bf16.msra.mxu0 %v3989
    %4230 = vmatprep.subr.bf16.mxu0 %v3986
    %4231 = vmatpush1.bf16.msra.mxu0 %v3985
    %4232 = vmatprep.subr.bf16.mxu0 %v3982
    %4233 = vmatpush1.bf16.msra.mxu0 %v3981
    %4234 = vmatprep.subr.bf16.mxu0 %v3978
    %4235 = vmatpush1.bf16.msra.mxu0 %v3977
    %4236 = vmatprep.subr.bf16.mxu0 %v3974
    %4237 = vmatpush1.bf16.msra.mxu0 %v3973
    %4238 = vmatprep.subr.bf16.mxu0 %v3970
    %4239 = vmatpush1.bf16.msra.mxu0 %v3969
    %4240 = vmatprep.subr.bf16.mxu0 0
    %4241 = vmatpush2.bf16.msra.mxu0 0
    %4242 = vmatprep.subr.bf16.mxu0 0
    %4243 = vmatpush2.bf16.msra.mxu0 0
    %4244 = vmatprep.subr.bf16.mxu0 0
    %4245 = vmatpush2.bf16.msra.mxu0 0
    %4246 = vmatprep.subr.bf16.mxu0 0
    %4247 = vmatpush2.bf16.msra.mxu0 0
    %4248 = vmatprep.subr.bf16.mxu0 0
    %4249 = vmatpush2.bf16.msra.mxu0 0
    %4250 = vmatprep.subr.bf16.mxu0 0
    %4251 = vmatpush2.bf16.msra.mxu0 0
    %4252 = vmatprep.subr.bf16.mxu0 0
    %4253 = vmatpush2.bf16.msra.mxu0 0
    %4254 = vmatprep.subr.bf16.mxu0 0
    %4255 = vmatpush2.bf16.msra.mxu0 0
    %4256 = vmatprep.mubr.bf16.mxu0 0
    %4257 = vmatmul.mubr.bf16.gmra.mxu0 %v3801
    %v4258 = vpop.f32.mrf.mxu0
    %v4259 = vadd.f32 %v3862, %v4258
    %v4260 = vpop.f32.mrf.mxu0
    %v4261 = vadd.f32 %v3866, %v4260
    %v4262 = vpop.f32.mrf.mxu0
    %v4263 = vadd.f32 %v3862, %v4262
    %v4264 = vpop.f32.mrf.mxu0
    %v4265 = vadd.f32 %v3866, %v4264
    %4266 = vmatprep.mubr.bf16.mxu0 0
    %4267 = vmatmul.mubr.bf16.gmra.mxu0 %v3802
    %v4268 = vpop.f32.mrf.mxu0
    %v4269 = vadd.f32 %v3862, %v4268
    %v4270 = vpop.f32.mrf.mxu0
    %v4271 = vadd.f32 %v3866, %v4270
    %v4272 = vpop.f32.mrf.mxu0
    %v4273 = vadd.f32 %v3862, %v4272
    %v4274 = vpop.f32.mrf.mxu0
    %v4275 = vadd.f32 %v3866, %v4274
    %4276 = vmatprep.mubr.bf16.mxu0 0
    %4277 = vmatmul.mubr.bf16.gmra.mxu0 %v3803
    %v4278 = vpop.f32.mrf.mxu0
    %v4279 = vadd.f32 %v3862, %v4278
    %v4280 = vpop.f32.mrf.mxu0
    %v4281 = vadd.f32 %v3866, %v4280
    %v4282 = vpop.f32.mrf.mxu0
    %v4283 = vadd.f32 %v3862, %v4282
    %v4284 = vpop.f32.mrf.mxu0
    %v4285 = vadd.f32 %v3866, %v4284
    %4286 = vmatprep.mubr.bf16.mxu0 0
    %4287 = vmatmul.mubr.bf16.gmra.mxu0 %v3804
    %v4288 = vpop.f32.mrf.mxu0
    %v4289 = vadd.f32 %v3862, %v4288
    %v4290 = vpop.f32.mrf.mxu0
    %v4291 = vadd.f32 %v3866, %v4290
    %v4292 = vpop.f32.mrf.mxu0
    %v4293 = vadd.f32 %v3862, %v4292
    %v4294 = vpop.f32.mrf.mxu0
    %v4295 = vadd.f32 %v3866, %v4294
    %4296 = vmatprep.mubr.bf16.mxu0 0
    %4297 = vmatmul.mubr.bf16.gmra.mxu0 %v3805
    %v4298 = vpop.f32.mrf.mxu0
    %v4299 = vadd.f32 %v3862, %v4298
    %v4300 = vpop.f32.mrf.mxu0
    %v4301 = vadd.f32 %v3866, %v4300
    %v4302 = vpop.f32.mrf.mxu0
    %v4303 = vadd.f32 %v3862, %v4302
    %v4304 = vpop.f32.mrf.mxu0
    %v4305 = vadd.f32 %v3866, %v4304
    %4306 = vmatprep.mubr.bf16.mxu0 0
    %4307 = vmatmul.mubr.bf16.gmra.mxu0 %v3806
    %v4308 = vpop.f32.mrf.mxu0
    %v4309 = vadd.f32 %v3862, %v4308
    %v4310 = vpop.f32.mrf.mxu0
    %v4311 = vadd.f32 %v3866, %v4310
    %v4312 = vpop.f32.mrf.mxu0
    %v4313 = vadd.f32 %v3862, %v4312
    %v4314 = vpop.f32.mrf.mxu0
    %v4315 = vadd.f32 %v3866, %v4314
    %4316 = vmatprep.mubr.bf16.mxu0 0
    %4317 = vmatmul.mubr.bf16.gmra.mxu0 %v3807
    %v4318 = vpop.f32.mrf.mxu0
    %v4319 = vadd.f32 %v3862, %v4318
    %v4320 = vpop.f32.mrf.mxu0
    %v4321 = vadd.f32 %v3866, %v4320
    %v4322 = vpop.f32.mrf.mxu0
    %v4323 = vadd.f32 %v3862, %v4322
    %v4324 = vpop.f32.mrf.mxu0
    %v4325 = vadd.f32 %v3866, %v4324
    %4326 = vmatprep.mubr.bf16.mxu0 0
    %4327 = vmatmul.mubr.bf16.gmra.mxu0 %v3808
    %v4328 = vpop.f32.mrf.mxu0
    %v4329 = vadd.f32 %v3862, %v4328
    %v4330 = vpop.f32.mrf.mxu0
    %v4331 = vadd.f32 %v3866, %v4330
    %v4332 = vpop.f32.mrf.mxu0
    %v4333 = vadd.f32 %v3862, %v4332
    %v4334 = vpop.f32.mrf.mxu0
    %v4335 = vadd.f32 %v3866, %v4334
    %4336 = vmatprep.mubr.bf16.mxu0 0
    %4337 = vmatmul.mubr.bf16.gmra.mxu0 %v3809
    %v4338 = vpop.f32.mrf.mxu0
    %v4339 = vadd.f32 %v3862, %v4338
    %v4340 = vpop.f32.mrf.mxu0
    %v4341 = vadd.f32 %v3866, %v4340
    %v4342 = vpop.f32.mrf.mxu0
    %v4343 = vadd.f32 %v3862, %v4342
    %v4344 = vpop.f32.mrf.mxu0
    %v4345 = vadd.f32 %v3866, %v4344
    %4346 = vmatprep.mubr.bf16.mxu0 0
    %4347 = vmatmul.mubr.bf16.gmra.mxu0 %v3810
    %v4348 = vpop.f32.mrf.mxu0
    %v4349 = vadd.f32 %v3862, %v4348
    %v4350 = vpop.f32.mrf.mxu0
    %v4351 = vadd.f32 %v3866, %v4350
    %v4352 = vpop.f32.mrf.mxu0
    %v4353 = vadd.f32 %v3862, %v4352
    %v4354 = vpop.f32.mrf.mxu0
    %v4355 = vadd.f32 %v3866, %v4354
    %4356 = vmatprep.mubr.bf16.mxu0 0
    %4357 = vmatmul.mubr.bf16.gmra.mxu0 %v3811
    %v4358 = vpop.f32.mrf.mxu0
    %v4359 = vadd.f32 %v3862, %v4358
    %v4360 = vpop.f32.mrf.mxu0
    %v4361 = vadd.f32 %v3866, %v4360
    %v4362 = vpop.f32.mrf.mxu0
    %v4363 = vadd.f32 %v3862, %v4362
    %v4364 = vpop.f32.mrf.mxu0
    %v4365 = vadd.f32 %v3866, %v4364
    %4366 = vmatprep.mubr.bf16.mxu0 0
    %4367 = vmatmul.mubr.bf16.gmra.mxu0 %v3812
    %v4368 = vpop.f32.mrf.mxu0
    %v4369 = vadd.f32 %v3862, %v4368
    %v4370 = vpop.f32.mrf.mxu0
    %v4371 = vadd.f32 %v3866, %v4370
    %v4372 = vpop.f32.mrf.mxu0
    %v4373 = vadd.f32 %v3862, %v4372
    %v4374 = vpop.f32.mrf.mxu0
    %v4375 = vadd.f32 %v3866, %v4374
    %4376 = vmatprep.mubr.bf16.mxu0 0
    %4377 = vmatmul.mubr.bf16.gmra.mxu0 %v3813
    %v4378 = vpop.f32.mrf.mxu0
    %v4379 = vadd.f32 %v3862, %v4378
    %v4380 = vpop.f32.mrf.mxu0
    %v4381 = vadd.f32 %v3866, %v4380
    %v4382 = vpop.f32.mrf.mxu0
    %v4383 = vadd.f32 %v3862, %v4382
    %v4384 = vpop.f32.mrf.mxu0
    %v4385 = vadd.f32 %v3866, %v4384
    %4386 = vmatprep.mubr.bf16.mxu0 0
    %4387 = vmatmul.mubr.bf16.gmra.mxu0 %v3814
    %v4388 = vpop.f32.mrf.mxu0
    %v4389 = vadd.f32 %v3862, %v4388
    %v4390 = vpop.f32.mrf.mxu0
    %v4391 = vadd.f32 %v3866, %v4390
    %v4392 = vpop.f32.mrf.mxu0
    %v4393 = vadd.f32 %v3862, %v4392
    %v4394 = vpop.f32.mrf.mxu0
    %v4395 = vadd.f32 %v3866, %v4394
    %4396 = vmatprep.mubr.bf16.mxu0 0
    %4397 = vmatmul.mubr.bf16.gmra.mxu0 %v3815
    %v4398 = vpop.f32.mrf.mxu0
    %v4399 = vadd.f32 %v3862, %v4398
    %v4400 = vpop.f32.mrf.mxu0
    %v4401 = vadd.f32 %v3866, %v4400
    %v4402 = vpop.f32.mrf.mxu0
    %v4403 = vadd.f32 %v3862, %v4402
    %v4404 = vpop.f32.mrf.mxu0
    %v4405 = vadd.f32 %v3866, %v4404
    %4406 = vmatprep.mubr.bf16.mxu0 0
    %4407 = vmatmul.mubr.bf16.gmra.mxu0 %v3816
    %v4408 = vpop.f32.mrf.mxu0
    %v4409 = vadd.f32 %v3862, %v4408
    %v4410 = vpop.f32.mrf.mxu0
    %v4411 = vadd.f32 %v3866, %v4410
    %v4412 = vpop.f32.mrf.mxu0
    %v4413 = vadd.f32 %v3862, %v4412
    %v4414 = vpop.f32.mrf.mxu0
    %v4415 = vadd.f32 %v3866, %v4414
    %4416 = vdwg.mxu0
    %v4417 = vmul.f32 %v4066, 0.5
    %v4418 = vmul.f32 %v4068, 0.5
    %v4419 = vmul.f32 %v4259, 0.5
    %v4420 = vmul.f32 %v4261, 0.5
    %v4421 = vmul.f32 %v4070, 0.5
    %v4422 = vmul.f32 %v4072, 0.5
    %v4423 = vmul.f32 %v4263, 0.5
    %v4424 = vmul.f32 %v4265, 0.5
    %v4425 = vmul.f32 %v4076, 0.5
    %v4426 = vmul.f32 %v4078, 0.5
    %v4427 = vmul.f32 %v4269, 0.5
    %v4428 = vmul.f32 %v4271, 0.5
    %v4429 = vmul.f32 %v4080, 0.5
    %v4430 = vmul.f32 %v4082, 0.5
    %v4431 = vmul.f32 %v4273, 0.5
    %v4432 = vmul.f32 %v4275, 0.5
    %v4433 = vmul.f32 %v4086, 0.5
    %v4434 = vmul.f32 %v4088, 0.5
    %v4435 = vmul.f32 %v4279, 0.5
    %v4436 = vmul.f32 %v4281, 0.5
    %v4437 = vmul.f32 %v4090, 0.5
    %v4438 = vmul.f32 %v4092, 0.5
    %v4439 = vmul.f32 %v4283, 0.5
    %v4440 = vmul.f32 %v4285, 0.5
    %v4441 = vmul.f32 %v4096, 0.5
    %v4442 = vmul.f32 %v4098, 0.5
    %v4443 = vmul.f32 %v4289, 0.5
    %v4444 = vmul.f32 %v4291, 0.5
    %v4445 = vmul.f32 %v4100, 0.5
    %v4446 = vmul.f32 %v4102, 0.5
    %v4447 = vmul.f32 %v4293, 0.5
    %v4448 = vmul.f32 %v4295, 0.5
    %v4449 = vmul.f32 %v4106, 0.5
    %v4450 = vmul.f32 %v4108, 0.5
    %v4451 = vmul.f32 %v4299, 0.5
    %v4452 = vmul.f32 %v4301, 0.5
    %v4453 = vmul.f32 %v4110, 0.5
    %v4454 = vmul.f32 %v4112, 0.5
    %v4455 = vmul.f32 %v4303, 0.5
    %v4456 = vmul.f32 %v4305, 0.5
    %v4457 = vmul.f32 %v4116, 0.5
    %v4458 = vmul.f32 %v4118, 0.5
    %v4459 = vmul.f32 %v4309, 0.5
    %v4460 = vmul.f32 %v4311, 0.5
    %v4461 = vmul.f32 %v4120, 0.5
    %v4462 = vmul.f32 %v4122, 0.5
    %v4463 = vmul.f32 %v4313, 0.5
    %v4464 = vmul.f32 %v4315, 0.5
    %v4465 = vmul.f32 %v4126, 0.5
    %v4466 = vmul.f32 %v4128, 0.5
    %v4467 = vmul.f32 %v4319, 0.5
    %v4468 = vmul.f32 %v4321, 0.5
    %v4469 = vmul.f32 %v4130, 0.5
    %v4470 = vmul.f32 %v4132, 0.5
    %v4471 = vmul.f32 %v4323, 0.5
    %v4472 = vmul.f32 %v4325, 0.5
    %v4473 = vmul.f32 %v4136, 0.5
    %v4474 = vmul.f32 %v4138, 0.5
    %v4475 = vmul.f32 %v4329, 0.5
    %v4476 = vmul.f32 %v4331, 0.5
    %v4477 = vmul.f32 %v4140, 0.5
    %v4478 = vmul.f32 %v4142, 0.5
    %v4479 = vmul.f32 %v4333, 0.5
    %v4480 = vmul.f32 %v4335, 0.5
    %v4481 = vmul.f32 %v4146, 0.5
    %v4482 = vmul.f32 %v4148, 0.5
    %v4483 = vmul.f32 %v4339, 0.5
    %v4484 = vmul.f32 %v4341, 0.5
    %v4485 = vmul.f32 %v4150, 0.5
    %v4486 = vmul.f32 %v4152, 0.5
    %v4487 = vmul.f32 %v4343, 0.5
    %v4488 = vmul.f32 %v4345, 0.5
    %v4489 = vmul.f32 %v4156, 0.5
    %v4490 = vmul.f32 %v4158, 0.5
    %v4491 = vmul.f32 %v4349, 0.5
    %v4492 = vmul.f32 %v4351, 0.5
    %v4493 = vmul.f32 %v4160, 0.5
    %v4494 = vmul.f32 %v4162, 0.5
    %v4495 = vmul.f32 %v4353, 0.5
    %v4496 = vmul.f32 %v4355, 0.5
    %v4497 = vmul.f32 %v4166, 0.5
    %v4498 = vmul.f32 %v4168, 0.5
    %v4499 = vmul.f32 %v4359, 0.5
    %v4500 = vmul.f32 %v4361, 0.5
    %v4501 = vmul.f32 %v4170, 0.5
    %v4502 = vmul.f32 %v4172, 0.5
    %v4503 = vmul.f32 %v4363, 0.5
    %v4504 = vmul.f32 %v4365, 0.5
    %v4505 = vmul.f32 %v4176, 0.5
    %v4506 = vmul.f32 %v4178, 0.5
    %v4507 = vmul.f32 %v4369, 0.5
    %v4508 = vmul.f32 %v4371, 0.5
    %v4509 = vmul.f32 %v4180, 0.5
    %v4510 = vmul.f32 %v4182, 0.5
    %v4511 = vmul.f32 %v4373, 0.5
    %v4512 = vmul.f32 %v4375, 0.5
    %v4513 = vmul.f32 %v4186, 0.5
    %v4514 = vmul.f32 %v4188, 0.5
    %v4515 = vmul.f32 %v4379, 0.5
    %v4516 = vmul.f32 %v4381, 0.5
    %v4517 = vmul.f32 %v4190, 0.5
    %v4518 = vmul.f32 %v4192, 0.5
    %v4519 = vmul.f32 %v4383, 0.5
    %v4520 = vmul.f32 %v4385, 0.5
    %v4521 = vmul.f32 %v4196, 0.5
    %v4522 = vmul.f32 %v4198, 0.5
    %v4523 = vmul.f32 %v4389, 0.5
    %v4524 = vmul.f32 %v4391, 0.5
    %v4525 = vmul.f32 %v4200, 0.5
    %v4526 = vmul.f32 %v4202, 0.5
    %v4527 = vmul.f32 %v4393, 0.5
    %v4528 = vmul.f32 %v4395, 0.5
    %v4529 = vmul.f32 %v4206, 0.5
    %v4530 = vmul.f32 %v4208, 0.5
    %v4531 = vmul.f32 %v4399, 0.5
    %v4532 = vmul.f32 %v4401, 0.5
    %v4533 = vmul.f32 %v4210, 0.5
    %v4534 = vmul.f32 %v4212, 0.5
    %v4535 = vmul.f32 %v4403, 0.5
    %v4536 = vmul.f32 %v4405, 0.5
    %v4537 = vmul.f32 %v4216, 0.5
    %v4538 = vmul.f32 %v4218, 0.5
    %v4539 = vmul.f32 %v4409, 0.5
    %v4540 = vmul.f32 %v4411, 0.5
    %v4541 = vmul.f32 %v4220, 0.5
    %v4542 = vmul.f32 %v4222, 0.5
    %v4543 = vmul.f32 %v4413, 0.5
    %v4544 = vmul.f32 %v4415, 0.5
    %v4545 = vmul.f32 %v4066, 0.70710677
    %v4546 = vmul.f32 %v4068, 0.70710677
    %v4547 = vmul.f32 %v4259, 0.70710677
    %v4548 = vmul.f32 %v4261, 0.70710677
    %v4549 = vmul.f32 %v4070, 0.70710677
    %v4550 = vmul.f32 %v4072, 0.70710677
    %v4551 = vmul.f32 %v4263, 0.70710677
    %v4552 = vmul.f32 %v4265, 0.70710677
    %v4553 = vmul.f32 %v4076, 0.70710677
    %v4554 = vmul.f32 %v4078, 0.70710677
    %v4555 = vmul.f32 %v4269, 0.70710677
    %v4556 = vmul.f32 %v4271, 0.70710677
    %v4557 = vmul.f32 %v4080, 0.70710677
    %v4558 = vmul.f32 %v4082, 0.70710677
    %v4559 = vmul.f32 %v4273, 0.70710677
    %v4560 = vmul.f32 %v4275, 0.70710677
    %v4561 = vmul.f32 %v4086, 0.70710677
    %v4562 = vmul.f32 %v4088, 0.70710677
    %v4563 = vmul.f32 %v4279, 0.70710677
    %v4564 = vmul.f32 %v4281, 0.70710677
    %v4565 = vmul.f32 %v4090, 0.70710677
    %v4566 = vmul.f32 %v4092, 0.70710677
    %v4567 = vmul.f32 %v4283, 0.70710677
    %v4568 = vmul.f32 %v4285, 0.70710677
    %v4569 = vmul.f32 %v4096, 0.70710677
    %v4570 = vmul.f32 %v4098, 0.70710677
    %v4571 = vmul.f32 %v4289, 0.70710677
    %v4572 = vmul.f32 %v4291, 0.70710677
    %v4573 = vmul.f32 %v4100, 0.70710677
    %v4574 = vmul.f32 %v4102, 0.70710677
    %v4575 = vmul.f32 %v4293, 0.70710677
    %v4576 = vmul.f32 %v4295, 0.70710677
    %v4577 = vmul.f32 %v4106, 0.70710677
    %v4578 = vmul.f32 %v4108, 0.70710677
    %v4579 = vmul.f32 %v4299, 0.70710677
    %v4580 = vmul.f32 %v4301, 0.70710677
    %v4581 = vmul.f32 %v4110, 0.70710677
    %v4582 = vmul.f32 %v4112, 0.70710677
    %v4583 = vmul.f32 %v4303, 0.70710677
    %v4584 = vmul.f32 %v4305, 0.70710677
    %v4585 = vmul.f32 %v4116, 0.70710677
    %v4586 = vmul.f32 %v4118, 0.70710677
    %v4587 = vmul.f32 %v4309, 0.70710677
    %v4588 = vmul.f32 %v4311, 0.70710677
    %v4589 = vmul.f32 %v4120, 0.70710677
    %v4590 = vmul.f32 %v4122, 0.70710677
    %v4591 = vmul.f32 %v4313, 0.70710677
    %v4592 = vmul.f32 %v4315, 0.70710677
    %v4593 = vmul.f32 %v4126, 0.70710677
    %v4594 = vmul.f32 %v4128, 0.70710677
    %v4595 = vmul.f32 %v4319, 0.70710677
    %v4596 = vmul.f32 %v4321, 0.70710677
    %v4597 = vmul.f32 %v4130, 0.70710677
    %v4598 = vmul.f32 %v4132, 0.70710677
    %v4599 = vmul.f32 %v4323, 0.70710677
    %v4600 = vmul.f32 %v4325, 0.70710677
    %v4601 = vmul.f32 %v4136, 0.70710677
    %v4602 = vmul.f32 %v4138, 0.70710677
    %v4603 = vmul.f32 %v4329, 0.70710677
    %v4604 = vmul.f32 %v4331, 0.70710677
    %v4605 = vmul.f32 %v4140, 0.70710677
    %v4606 = vmul.f32 %v4142, 0.70710677
    %v4607 = vmul.f32 %v4333, 0.70710677
    %v4608 = vmul.f32 %v4335, 0.70710677
    %v4609 = vmul.f32 %v4146, 0.70710677
    %v4610 = vmul.f32 %v4148, 0.70710677
    %v4611 = vmul.f32 %v4339, 0.70710677
    %v4612 = vmul.f32 %v4341, 0.70710677
    %v4613 = vmul.f32 %v4150, 0.70710677
    %v4614 = vmul.f32 %v4152, 0.70710677
    %v4615 = vmul.f32 %v4343, 0.70710677
    %v4616 = vmul.f32 %v4345, 0.70710677
    %v4617 = vmul.f32 %v4156, 0.70710677
    %v4618 = vmul.f32 %v4158, 0.70710677
    %v4619 = vmul.f32 %v4349, 0.70710677
    %v4620 = vmul.f32 %v4351, 0.70710677
    %v4621 = vmul.f32 %v4160, 0.70710677
    %v4622 = vmul.f32 %v4162, 0.70710677
    %v4623 = vmul.f32 %v4353, 0.70710677
    %v4624 = vmul.f32 %v4355, 0.70710677
    %v4625 = vmul.f32 %v4166, 0.70710677
    %v4626 = vmul.f32 %v4168, 0.70710677
    %v4627 = vmul.f32 %v4359, 0.70710677
    %v4628 = vmul.f32 %v4361, 0.70710677
    %v4629 = vmul.f32 %v4170, 0.70710677
    %v4630 = vmul.f32 %v4172, 0.70710677
    %v4631 = vmul.f32 %v4363, 0.70710677
    %v4632 = vmul.f32 %v4365, 0.70710677
    %v4633 = vmul.f32 %v4176, 0.70710677
    %v4634 = vmul.f32 %v4178, 0.70710677
    %v4635 = vmul.f32 %v4369, 0.70710677
    %v4636 = vmul.f32 %v4371, 0.70710677
    %v4637 = vmul.f32 %v4180, 0.70710677
    %v4638 = vmul.f32 %v4182, 0.70710677
    %v4639 = vmul.f32 %v4373, 0.70710677
    %v4640 = vmul.f32 %v4375, 0.70710677
    %v4641 = vmul.f32 %v4186, 0.70710677
    %v4642 = vmul.f32 %v4188, 0.70710677
    %v4643 = vmul.f32 %v4379, 0.70710677
    %v4644 = vmul.f32 %v4381, 0.70710677
    %v4645 = vmul.f32 %v4190, 0.70710677
    %v4646 = vmul.f32 %v4192, 0.70710677
    %v4647 = vmul.f32 %v4383, 0.70710677
    %v4648 = vmul.f32 %v4385, 0.70710677
    %v4649 = vmul.f32 %v4196, 0.70710677
    %v4650 = vmul.f32 %v4198, 0.70710677
    %v4651 = vmul.f32 %v4389, 0.70710677
    %v4652 = vmul.f32 %v4391, 0.70710677
    %v4653 = vmul.f32 %v4200, 0.70710677
    %v4654 = vmul.f32 %v4202, 0.70710677
    %v4655 = vmul.f32 %v4393, 0.70710677
    %v4656 = vmul.f32 %v4395, 0.70710677
    %v4657 = vmul.f32 %v4206, 0.70710677
    %v4658 = vmul.f32 %v4208, 0.70710677
    %v4659 = vmul.f32 %v4399, 0.70710677
    %v4660 = vmul.f32 %v4401, 0.70710677
    %v4661 = vmul.f32 %v4210, 0.70710677
    %v4662 = vmul.f32 %v4212, 0.70710677
    %v4663 = vmul.f32 %v4403, 0.70710677
    %v4664 = vmul.f32 %v4405, 0.70710677
    %v4665 = vmul.f32 %v4216, 0.70710677
    %v4666 = vmul.f32 %v4218, 0.70710677
    %v4667 = vmul.f32 %v4409, 0.70710677
    %v4668 = vmul.f32 %v4411, 0.70710677
    %v4669 = vmul.f32 %v4220, 0.70710677
    %v4670 = vmul.f32 %v4222, 0.70710677
    %v4671 = vmul.f32 %v4413, 0.70710677
    %v4672 = vmul.f32 %v4415, 0.70710677
    %v4673 = verf.f32.pop %v4545
    %v4674 = verf.f32.pop %v4546
    %v4675 = verf.f32.pop %v4547
    %v4676 = verf.f32.pop %v4548
    %v4677 = verf.f32.pop %v4549
    %v4678 = verf.f32.pop %v4550
    %v4679 = verf.f32.pop %v4551
    %v4680 = verf.f32.pop %v4552
    %v4681 = verf.f32.pop %v4553
    %v4682 = verf.f32.pop %v4554
    %v4683 = verf.f32.pop %v4555
    %v4684 = verf.f32.pop %v4556
    %v4685 = verf.f32.pop %v4557
    %v4686 = verf.f32.pop %v4558
    %v4687 = verf.f32.pop %v4559
    %v4688 = verf.f32.pop %v4560
    %v4689 = verf.f32.pop %v4561
    %v4690 = verf.f32.pop %v4562
    %v4691 = verf.f32.pop %v4563
    %v4692 = verf.f32.pop %v4564
    %v4693 = verf.f32.pop %v4565
    %v4694 = verf.f32.pop %v4566
    %v4695 = verf.f32.pop %v4567
    %v4696 = verf.f32.pop %v4568
    %v4697 = verf.f32.pop %v4569
    %v4698 = verf.f32.pop %v4570
    %v4699 = verf.f32.pop %v4571
    %v4700 = verf.f32.pop %v4572
    %v4701 = verf.f32.pop %v4573
    %v4702 = verf.f32.pop %v4574
    %v4703 = verf.f32.pop %v4575
    %v4704 = verf.f32.pop %v4576
    %v4705 = verf.f32.pop %v4577
    %v4706 = verf.f32.pop %v4578
    %v4707 = verf.f32.pop %v4579
    %v4708 = verf.f32.pop %v4580
    %v4709 = verf.f32.pop %v4581
    %v4710 = verf.f32.pop %v4582
    %v4711 = verf.f32.pop %v4583
    %v4712 = verf.f32.pop %v4584
    %v4713 = verf.f32.pop %v4585
    %v4714 = verf.f32.pop %v4586
    %v4715 = verf.f32.pop %v4587
    %v4716 = verf.f32.pop %v4588
    %v4717 = verf.f32.pop %v4589
    %v4718 = verf.f32.pop %v4590
    %v4719 = verf.f32.pop %v4591
    %v4720 = verf.f32.pop %v4592
    %v4721 = verf.f32.pop %v4593
    %v4722 = verf.f32.pop %v4594
    %v4723 = verf.f32.pop %v4595
    %v4724 = verf.f32.pop %v4596
    %v4725 = verf.f32.pop %v4597
    %v4726 = verf.f32.pop %v4598
    %v4727 = verf.f32.pop %v4599
    %v4728 = verf.f32.pop %v4600
    %v4729 = verf.f32.pop %v4601
    %v4730 = verf.f32.pop %v4602
    %v4731 = verf.f32.pop %v4603
    %v4732 = verf.f32.pop %v4604
    %v4733 = verf.f32.pop %v4605
    %v4734 = verf.f32.pop %v4606
    %v4735 = verf.f32.pop %v4607
    %v4736 = verf.f32.pop %v4608
    %v4737 = verf.f32.pop %v4609
    %v4738 = verf.f32.pop %v4610
    %v4739 = verf.f32.pop %v4611
    %v4740 = verf.f32.pop %v4612
    %v4741 = verf.f32.pop %v4613
    %v4742 = verf.f32.pop %v4614
    %v4743 = verf.f32.pop %v4615
    %v4744 = verf.f32.pop %v4616
    %v4745 = verf.f32.pop %v4617
    %v4746 = verf.f32.pop %v4618
    %v4747 = verf.f32.pop %v4619
    %v4748 = verf.f32.pop %v4620
    %v4749 = verf.f32.pop %v4621
    %v4750 = verf.f32.pop %v4622
    %v4751 = verf.f32.pop %v4623
    %v4752 = verf.f32.pop %v4624
    %v4753 = verf.f32.pop %v4625
    %v4754 = verf.f32.pop %v4626
    %v4755 = verf.f32.pop %v4627
    %v4756 = verf.f32.pop %v4628
    %v4757 = verf.f32.pop %v4629
    %v4758 = verf.f32.pop %v4630
    %v4759 = verf.f32.pop %v4631
    %v4760 = verf.f32.pop %v4632
    %v4761 = verf.f32.pop %v4633
    %v4762 = verf.f32.pop %v4634
    %v4763 = verf.f32.pop %v4635
    %v4764 = verf.f32.pop %v4636
    %v4765 = verf.f32.pop %v4637
    %v4766 = verf.f32.pop %v4638
    %v4767 = verf.f32.pop %v4639
    %v4768 = verf.f32.pop %v4640
    %v4769 = verf.f32.pop %v4641
    %v4770 = verf.f32.pop %v4642
    %v4771 = verf.f32.pop %v4643
    %v4772 = verf.f32.pop %v4644
    %v4773 = verf.f32.pop %v4645
    %v4774 = verf.f32.pop %v4646
    %v4775 = verf.f32.pop %v4647
    %v4776 = verf.f32.pop %v4648
    %v4777 = verf.f32.pop %v4649
    %v4778 = verf.f32.pop %v4650
    %v4779 = verf.f32.pop %v4651
    %v4780 = verf.f32.pop %v4652
    %v4781 = verf.f32.pop %v4653
    %v4782 = verf.f32.pop %v4654
    %v4783 = verf.f32.pop %v4655
    %v4784 = verf.f32.pop %v4656
    %v4785 = verf.f32.pop %v4657
    %v4786 = verf.f32.pop %v4658
    %v4787 = verf.f32.pop %v4659
    %v4788 = verf.f32.pop %v4660
    %v4789 = verf.f32.pop %v4661
    %v4790 = verf.f32.pop %v4662
    %v4791 = verf.f32.pop %v4663
    %v4792 = verf.f32.pop %v4664
    %v4793 = verf.f32.pop %v4665
    %v4794 = verf.f32.pop %v4666
    %v4795 = verf.f32.pop %v4667
    %v4796 = verf.f32.pop %v4668
    %v4797 = verf.f32.pop %v4669
    %v4798 = verf.f32.pop %v4670
    %v4799 = verf.f32.pop %v4671
    %v4800 = verf.f32.pop %v4672
    %v4801 = vadd.f32 %v4673, 1.0
    %v4802 = vadd.f32 %v4674, 1.0
    %v4803 = vadd.f32 %v4675, 1.0
    %v4804 = vadd.f32 %v4676, 1.0
    %v4805 = vadd.f32 %v4677, 1.0
    %v4806 = vadd.f32 %v4678, 1.0
    %v4807 = vadd.f32 %v4679, 1.0
    %v4808 = vadd.f32 %v4680, 1.0
    %v4809 = vadd.f32 %v4681, 1.0
    %v4810 = vadd.f32 %v4682, 1.0
    %v4811 = vadd.f32 %v4683, 1.0
    %v4812 = vadd.f32 %v4684, 1.0
    %v4813 = vadd.f32 %v4685, 1.0
    %v4814 = vadd.f32 %v4686, 1.0
    %v4815 = vadd.f32 %v4687, 1.0
    %v4816 = vadd.f32 %v4688, 1.0
    %v4817 = vadd.f32 %v4689, 1.0
    %v4818 = vadd.f32 %v4690, 1.0
    %v4819 = vadd.f32 %v4691, 1.0
    %v4820 = vadd.f32 %v4692, 1.0
    %v4821 = vadd.f32 %v4693, 1.0
    %v4822 = vadd.f32 %v4694, 1.0
    %v4823 = vadd.f32 %v4695, 1.0
    %v4824 = vadd.f32 %v4696, 1.0
    %v4825 = vadd.f32 %v4697, 1.0
    %v4826 = vadd.f32 %v4698, 1.0
    %v4827 = vadd.f32 %v4699, 1.0
    %v4828 = vadd.f32 %v4700, 1.0
    %v4829 = vadd.f32 %v4701, 1.0
    %v4830 = vadd.f32 %v4702, 1.0
    %v4831 = vadd.f32 %v4703, 1.0
    %v4832 = vadd.f32 %v4704, 1.0
    %v4833 = vadd.f32 %v4705, 1.0
    %v4834 = vadd.f32 %v4706, 1.0
    %v4835 = vadd.f32 %v4707, 1.0
    %v4836 = vadd.f32 %v4708, 1.0
    %v4837 = vadd.f32 %v4709, 1.0
    %v4838 = vadd.f32 %v4710, 1.0
    %v4839 = vadd.f32 %v4711, 1.0
    %v4840 = vadd.f32 %v4712, 1.0
    %v4841 = vadd.f32 %v4713, 1.0
    %v4842 = vadd.f32 %v4714, 1.0
    %v4843 = vadd.f32 %v4715, 1.0
    %v4844 = vadd.f32 %v4716, 1.0
    %v4845 = vadd.f32 %v4717, 1.0
    %v4846 = vadd.f32 %v4718, 1.0
    %v4847 = vadd.f32 %v4719, 1.0
    %v4848 = vadd.f32 %v4720, 1.0
    %v4849 = vadd.f32 %v4721, 1.0
    %v4850 = vadd.f32 %v4722, 1.0
    %v4851 = vadd.f32 %v4723, 1.0
    %v4852 = vadd.f32 %v4724, 1.0
    %v4853 = vadd.f32 %v4725, 1.0
    %v4854 = vadd.f32 %v4726, 1.0
    %v4855 = vadd.f32 %v4727, 1.0
    %v4856 = vadd.f32 %v4728, 1.0
    %v4857 = vadd.f32 %v4729, 1.0
    %v4858 = vadd.f32 %v4730, 1.0
    %v4859 = vadd.f32 %v4731, 1.0
    %v4860 = vadd.f32 %v4732, 1.0
    %v4861 = vadd.f32 %v4733, 1.0
    %v4862 = vadd.f32 %v4734, 1.0
    %v4863 = vadd.f32 %v4735, 1.0
    %v4864 = vadd.f32 %v4736, 1.0
    %v4865 = vadd.f32 %v4737, 1.0
    %v4866 = vadd.f32 %v4738, 1.0
    %v4867 = vadd.f32 %v4739, 1.0
    %v4868 = vadd.f32 %v4740, 1.0
    %v4869 = vadd.f32 %v4741, 1.0
    %v4870 = vadd.f32 %v4742, 1.0
    %v4871 = vadd.f32 %v4743, 1.0
    %v4872 = vadd.f32 %v4744, 1.0
    %v4873 = vadd.f32 %v4745, 1.0
    %v4874 = vadd.f32 %v4746, 1.0
    %v4875 = vadd.f32 %v4747, 1.0
    %v4876 = vadd.f32 %v4748, 1.0
    %v4877 = vadd.f32 %v4749, 1.0
    %v4878 = vadd.f32 %v4750, 1.0
    %v4879 = vadd.f32 %v4751, 1.0
    %v4880 = vadd.f32 %v4752, 1.0
    %v4881 = vadd.f32 %v4753, 1.0
    %v4882 = vadd.f32 %v4754, 1.0
    %v4883 = vadd.f32 %v4755, 1.0
    %v4884 = vadd.f32 %v4756, 1.0
    %v4885 = vadd.f32 %v4757, 1.0
    %v4886 = vadd.f32 %v4758, 1.0
    %v4887 = vadd.f32 %v4759, 1.0
    %v4888 = vadd.f32 %v4760, 1.0
    %v4889 = vadd.f32 %v4761, 1.0
    %v4890 = vadd.f32 %v4762, 1.0
    %v4891 = vadd.f32 %v4763, 1.0
    %v4892 = vadd.f32 %v4764, 1.0
    %v4893 = vadd.f32 %v4765, 1.0
    %v4894 = vadd.f32 %v4766, 1.0
    %v4895 = vadd.f32 %v4767, 1.0
    %v4896 = vadd.f32 %v4768, 1.0
    %v4897 = vadd.f32 %v4769, 1.0
    %v4898 = vadd.f32 %v4770, 1.0
    %v4899 = vadd.f32 %v4771, 1.0
    %v4900 = vadd.f32 %v4772, 1.0
    %v4901 = vadd.f32 %v4773, 1.0
    %v4902 = vadd.f32 %v4774, 1.0
    %v4903 = vadd.f32 %v4775, 1.0
    %v4904 = vadd.f32 %v4776, 1.0
    %v4905 = vadd.f32 %v4777, 1.0
    %v4906 = vadd.f32 %v4778, 1.0
    %v4907 = vadd.f32 %v4779, 1.0
    %v4908 = vadd.f32 %v4780, 1.0
    %v4909 = vadd.f32 %v4781, 1.0
    %v4910 = vadd.f32 %v4782, 1.0
    %v4911 = vadd.f32 %v4783, 1.0
    %v4912 = vadd.f32 %v4784, 1.0
    %v4913 = vadd.f32 %v4785, 1.0
    %v4914 = vadd.f32 %v4786, 1.0
    %v4915 = vadd.f32 %v4787, 1.0
    %v4916 = vadd.f32 %v4788, 1.0
    %v4917 = vadd.f32 %v4789, 1.0
    %v4918 = vadd.f32 %v4790, 1.0
    %v4919 = vadd.f32 %v4791, 1.0
    %v4920 = vadd.f32 %v4792, 1.0
    %v4921 = vadd.f32 %v4793, 1.0
    %v4922 = vadd.f32 %v4794, 1.0
    %v4923 = vadd.f32 %v4795, 1.0
    %v4924 = vadd.f32 %v4796, 1.0
    %v4925 = vadd.f32 %v4797, 1.0
    %v4926 = vadd.f32 %v4798, 1.0
    %v4927 = vadd.f32 %v4799, 1.0
    %v4928 = vadd.f32 %v4800, 1.0
    %v4929 = vmul.f32 %v4417, %v4801
    %v4930 = vmul.f32 %v4418, %v4802
    %v4931 = vmul.f32 %v4419, %v4803
    %v4932 = vmul.f32 %v4420, %v4804
    %v4933 = vmul.f32 %v4421, %v4805
    %v4934 = vmul.f32 %v4422, %v4806
    %v4935 = vmul.f32 %v4423, %v4807
    %v4936 = vmul.f32 %v4424, %v4808
    %v4937 = vmul.f32 %v4425, %v4809
    %v4938 = vmul.f32 %v4426, %v4810
    %v4939 = vmul.f32 %v4427, %v4811
    %v4940 = vmul.f32 %v4428, %v4812
    %v4941 = vmul.f32 %v4429, %v4813
    %v4942 = vmul.f32 %v4430, %v4814
    %v4943 = vmul.f32 %v4431, %v4815
    %v4944 = vmul.f32 %v4432, %v4816
    %v4945 = vmul.f32 %v4433, %v4817
    %v4946 = vmul.f32 %v4434, %v4818
    %v4947 = vmul.f32 %v4435, %v4819
    %v4948 = vmul.f32 %v4436, %v4820
    %v4949 = vmul.f32 %v4437, %v4821
    %v4950 = vmul.f32 %v4438, %v4822
    %v4951 = vmul.f32 %v4439, %v4823
    %v4952 = vmul.f32 %v4440, %v4824
    %v4953 = vmul.f32 %v4441, %v4825
    %v4954 = vmul.f32 %v4442, %v4826
    %v4955 = vmul.f32 %v4443, %v4827
    %v4956 = vmul.f32 %v4444, %v4828
    %v4957 = vmul.f32 %v4445, %v4829
    %v4958 = vmul.f32 %v4446, %v4830
    %v4959 = vmul.f32 %v4447, %v4831
    %v4960 = vmul.f32 %v4448, %v4832
    %v4961 = vmul.f32 %v4449, %v4833
    %v4962 = vmul.f32 %v4450, %v4834
    %v4963 = vmul.f32 %v4451, %v4835
    %v4964 = vmul.f32 %v4452, %v4836
    %v4965 = vmul.f32 %v4453, %v4837
    %v4966 = vmul.f32 %v4454, %v4838
    %v4967 = vmul.f32 %v4455, %v4839
    %v4968 = vmul.f32 %v4456, %v4840
    %v4969 = vmul.f32 %v4457, %v4841
    %v4970 = vmul.f32 %v4458, %v4842
    %v4971 = vmul.f32 %v4459, %v4843
    %v4972 = vmul.f32 %v4460, %v4844
    %v4973 = vmul.f32 %v4461, %v4845
    %v4974 = vmul.f32 %v4462, %v4846
    %v4975 = vmul.f32 %v4463, %v4847
    %v4976 = vmul.f32 %v4464, %v4848
    %v4977 = vmul.f32 %v4465, %v4849
    %v4978 = vmul.f32 %v4466, %v4850
    %v4979 = vmul.f32 %v4467, %v4851
    %v4980 = vmul.f32 %v4468, %v4852
    %v4981 = vmul.f32 %v4469, %v4853
    %v4982 = vmul.f32 %v4470, %v4854
    %v4983 = vmul.f32 %v4471, %v4855
    %v4984 = vmul.f32 %v4472, %v4856
    %v4985 = vmul.f32 %v4473, %v4857
    %v4986 = vmul.f32 %v4474, %v4858
    %v4987 = vmul.f32 %v4475, %v4859
    %v4988 = vmul.f32 %v4476, %v4860
    %v4989 = vmul.f32 %v4477, %v4861
    %v4990 = vmul.f32 %v4478, %v4862
    %v4991 = vmul.f32 %v4479, %v4863
    %v4992 = vmul.f32 %v4480, %v4864
    %v4993 = vmul.f32 %v4481, %v4865
    %v4994 = vmul.f32 %v4482, %v4866
    %v4995 = vmul.f32 %v4483, %v4867
    %v4996 = vmul.f32 %v4484, %v4868
    %v4997 = vmul.f32 %v4485, %v4869
    %v4998 = vmul.f32 %v4486, %v4870
    %v4999 = vmul.f32 %v4487, %v4871
    %v5000 = vmul.f32 %v4488, %v4872
    %v5001 = vmul.f32 %v4489, %v4873
    %v5002 = vmul.f32 %v4490, %v4874
    %v5003 = vmul.f32 %v4491, %v4875
    %v5004 = vmul.f32 %v4492, %v4876
    %v5005 = vmul.f32 %v4493, %v4877
    %v5006 = vmul.f32 %v4494, %v4878
    %v5007 = vmul.f32 %v4495, %v4879
    %v5008 = vmul.f32 %v4496, %v4880
    %v5009 = vmul.f32 %v4497, %v4881
    %v5010 = vmul.f32 %v4498, %v4882
    %v5011 = vmul.f32 %v4499, %v4883
    %v5012 = vmul.f32 %v4500, %v4884
    %v5013 = vmul.f32 %v4501, %v4885
    %v5014 = vmul.f32 %v4502, %v4886
    %v5015 = vmul.f32 %v4503, %v4887
    %v5016 = vmul.f32 %v4504, %v4888
    %v5017 = vmul.f32 %v4505, %v4889
    %v5018 = vmul.f32 %v4506, %v4890
    %v5019 = vmul.f32 %v4507, %v4891
    %v5020 = vmul.f32 %v4508, %v4892
    %v5021 = vmul.f32 %v4509, %v4893
    %v5022 = vmul.f32 %v4510, %v4894
    %v5023 = vmul.f32 %v4511, %v4895
    %v5024 = vmul.f32 %v4512, %v4896
    %v5025 = vmul.f32 %v4513, %v4897
    %v5026 = vmul.f32 %v4514, %v4898
    %v5027 = vmul.f32 %v4515, %v4899
    %v5028 = vmul.f32 %v4516, %v4900
    %v5029 = vmul.f32 %v4517, %v4901
    %v5030 = vmul.f32 %v4518, %v4902
    %v5031 = vmul.f32 %v4519, %v4903
    %v5032 = vmul.f32 %v4520, %v4904
    %v5033 = vmul.f32 %v4521, %v4905
    %v5034 = vmul.f32 %v4522, %v4906
    %v5035 = vmul.f32 %v4523, %v4907
    %v5036 = vmul.f32 %v4524, %v4908
    %v5037 = vmul.f32 %v4525, %v4909
    %v5038 = vmul.f32 %v4526, %v4910
    %v5039 = vmul.f32 %v4527, %v4911
    %v5040 = vmul.f32 %v4528, %v4912
    %v5041 = vmul.f32 %v4529, %v4913
    %v5042 = vmul.f32 %v4530, %v4914
    %v5043 = vmul.f32 %v4531, %v4915
    %v5044 = vmul.f32 %v4532, %v4916
    %v5045 = vmul.f32 %v4533, %v4917
    %v5046 = vmul.f32 %v4534, %v4918
    %v5047 = vmul.f32 %v4535, %v4919
    %v5048 = vmul.f32 %v4536, %v4920
    %v5049 = vmul.f32 %v4537, %v4921
    %v5050 = vmul.f32 %v4538, %v4922
    %v5051 = vmul.f32 %v4539, %v4923
    %v5052 = vmul.f32 %v4540, %v4924
    %v5053 = vmul.f32 %v4541, %v4925
    %v5054 = vmul.f32 %v4542, %v4926
    %v5055 = vmul.f32 %v4543, %v4927
    %v5056 = vmul.f32 %v4544, %v4928
    %s5057 = smul.u32 4, 64
    %s5058 = smul.u32 %s5057, 1
    %s5059 = sshll.u32 %s5058, 4
    %5060 = dma.done %s117, %s5059
    %v5061 = vpack.c.bf16 %v4933, %v4929
    %v5062 = vpack.c.bf16 %v4934, %v4930
    %v5063 = vpack.c.bf16 %v4935, %v4931
    %v5064 = vpack.c.bf16 %v4936, %v4932
    %v5065 = vpack.c.bf16 %v4941, %v4937
    %v5066 = vpack.c.bf16 %v4942, %v4938
    %v5067 = vpack.c.bf16 %v4943, %v4939
    %v5068 = vpack.c.bf16 %v4944, %v4940
    %v5069 = vpack.c.bf16 %v4949, %v4945
    %v5070 = vpack.c.bf16 %v4950, %v4946
    %v5071 = vpack.c.bf16 %v4951, %v4947
    %v5072 = vpack.c.bf16 %v4952, %v4948
    %v5073 = vpack.c.bf16 %v4957, %v4953
    %v5074 = vpack.c.bf16 %v4958, %v4954
    %v5075 = vpack.c.bf16 %v4959, %v4955
    %v5076 = vpack.c.bf16 %v4960, %v4956
    %v5077 = vpack.c.bf16 %v4965, %v4961
    %v5078 = vpack.c.bf16 %v4966, %v4962
    %v5079 = vpack.c.bf16 %v4967, %v4963
    %v5080 = vpack.c.bf16 %v4968, %v4964
    %v5081 = vpack.c.bf16 %v4973, %v4969
    %v5082 = vpack.c.bf16 %v4974, %v4970
    %v5083 = vpack.c.bf16 %v4975, %v4971
    %v5084 = vpack.c.bf16 %v4976, %v4972
    %v5085 = vpack.c.bf16 %v4981, %v4977
    %v5086 = vpack.c.bf16 %v4982, %v4978
    %v5087 = vpack.c.bf16 %v4983, %v4979
    %v5088 = vpack.c.bf16 %v4984, %v4980
    %v5089 = vpack.c.bf16 %v4989, %v4985
    %v5090 = vpack.c.bf16 %v4990, %v4986
    %v5091 = vpack.c.bf16 %v4991, %v4987
    %v5092 = vpack.c.bf16 %v4992, %v4988
    %v5093 = vpack.c.bf16 %v4997, %v4993
    %v5094 = vpack.c.bf16 %v4998, %v4994
    %v5095 = vpack.c.bf16 %v4999, %v4995
    %v5096 = vpack.c.bf16 %v5000, %v4996
    %v5097 = vpack.c.bf16 %v5005, %v5001
    %v5098 = vpack.c.bf16 %v5006, %v5002
    %v5099 = vpack.c.bf16 %v5007, %v5003
    %v5100 = vpack.c.bf16 %v5008, %v5004
    %v5101 = vpack.c.bf16 %v5013, %v5009
    %v5102 = vpack.c.bf16 %v5014, %v5010
    %v5103 = vpack.c.bf16 %v5015, %v5011
    %v5104 = vpack.c.bf16 %v5016, %v5012
    %v5105 = vpack.c.bf16 %v5021, %v5017
    %v5106 = vpack.c.bf16 %v5022, %v5018
    %v5107 = vpack.c.bf16 %v5023, %v5019
    %v5108 = vpack.c.bf16 %v5024, %v5020
    %v5109 = vpack.c.bf16 %v5029, %v5025
    %v5110 = vpack.c.bf16 %v5030, %v5026
    %v5111 = vpack.c.bf16 %v5031, %v5027
    %v5112 = vpack.c.bf16 %v5032, %v5028
    %v5113 = vpack.c.bf16 %v5037, %v5033
    %v5114 = vpack.c.bf16 %v5038, %v5034
    %v5115 = vpack.c.bf16 %v5039, %v5035
    %v5116 = vpack.c.bf16 %v5040, %v5036
    %v5117 = vpack.c.bf16 %v5045, %v5041
    %v5118 = vpack.c.bf16 %v5046, %v5042
    %v5119 = vpack.c.bf16 %v5047, %v5043
    %v5120 = vpack.c.bf16 %v5048, %v5044
    %v5121 = vpack.c.bf16 %v5053, %v5049
    %v5122 = vpack.c.bf16 %v5054, %v5050
    %v5123 = vpack.c.bf16 %v5055, %v5051
    %v5124 = vpack.c.bf16 %v5056, %v5052
    %v5125 = vld [vmem:[#allocation4] sm:$0xf]
    %v5126 = vld [vmem:[#allocation4 + $0x4] sm:$0xf]
    %v5127 = vld [vmem:[#allocation4 + $0x8] sm:$0xf]
    %v5128 = vld [vmem:[#allocation4 + $0xc] sm:$0xf]
    %v5129 = vld [vmem:[#allocation4 + $0x10] sm:$0xf]
    %v5130 = vld [vmem:[#allocation4 + $0x14] sm:$0xf]
    %v5131 = vld [vmem:[#allocation4 + $0x18] sm:$0xf]
    %v5132 = vld [vmem:[#allocation4 + $0x1c] sm:$0xf]
    %v5133 = vld [vmem:[#allocation4 + $0x20] sm:$0xf]
    %v5134 = vld [vmem:[#allocation4 + $0x24] sm:$0xf]
    %v5135 = vld [vmem:[#allocation4 + $0x28] sm:$0xf]
    %v5136 = vld [vmem:[#allocation4 + $0x2c] sm:$0xf]
    %v5137 = vld [vmem:[#allocation4 + $0x30] sm:$0xf]
    %v5138 = vld [vmem:[#allocation4 + $0x34] sm:$0xf]
    %v5139 = vld [vmem:[#allocation4 + $0x38] sm:$0xf]
    %v5140 = vld [vmem:[#allocation4 + $0x3c] sm:$0xf]
    %v5141 = vld [vmem:[#allocation4 + $0x40] sm:$0xf]
    %v5142 = vld [vmem:[#allocation4 + $0x44] sm:$0xf]
    %v5143 = vld [vmem:[#allocation4 + $0x48] sm:$0xf]
    %v5144 = vld [vmem:[#allocation4 + $0x4c] sm:$0xf]
    %v5145 = vld [vmem:[#allocation4 + $0x50] sm:$0xf]
    %v5146 = vld [vmem:[#allocation4 + $0x54] sm:$0xf]
    %v5147 = vld [vmem:[#allocation4 + $0x58] sm:$0xf]
    %v5148 = vld [vmem:[#allocation4 + $0x5c] sm:$0xf]
    %v5149 = vld [vmem:[#allocation4 + $0x60] sm:$0xf]
    %v5150 = vld [vmem:[#allocation4 + $0x64] sm:$0xf]
    %v5151 = vld [vmem:[#allocation4 + $0x68] sm:$0xf]
    %v5152 = vld [vmem:[#allocation4 + $0x6c] sm:$0xf]
    %v5153 = vld [vmem:[#allocation4 + $0x70] sm:$0xf]
    %v5154 = vld [vmem:[#allocation4 + $0x74] sm:$0xf]
    %v5155 = vld [vmem:[#allocation4 + $0x78] sm:$0xf]
    %v5156 = vld [vmem:[#allocation4 + $0x7c] sm:$0xf]
    %v5157 = vld [vmem:[#allocation4 + $0x80] sm:$0xf]
    %v5158 = vld [vmem:[#allocation4 + $0x84] sm:$0xf]
    %v5159 = vld [vmem:[#allocation4 + $0x88] sm:$0xf]
    %v5160 = vld [vmem:[#allocation4 + $0x8c] sm:$0xf]
    %v5161 = vld [vmem:[#allocation4 + $0x90] sm:$0xf]
    %v5162 = vld [vmem:[#allocation4 + $0x94] sm:$0xf]
    %v5163 = vld [vmem:[#allocation4 + $0x98] sm:$0xf]
    %v5164 = vld [vmem:[#allocation4 + $0x9c] sm:$0xf]
    %v5165 = vld [vmem:[#allocation4 + $0xa0] sm:$0xf]
    %v5166 = vld [vmem:[#allocation4 + $0xa4] sm:$0xf]
    %v5167 = vld [vmem:[#allocation4 + $0xa8] sm:$0xf]
    %v5168 = vld [vmem:[#allocation4 + $0xac] sm:$0xf]
    %v5169 = vld [vmem:[#allocation4 + $0xb0] sm:$0xf]
    %v5170 = vld [vmem:[#allocation4 + $0xb4] sm:$0xf]
    %v5171 = vld [vmem:[#allocation4 + $0xb8] sm:$0xf]
    %v5172 = vld [vmem:[#allocation4 + $0xbc] sm:$0xf]
    %v5173 = vld [vmem:[#allocation4 + $0xc0] sm:$0xf]
    %v5174 = vld [vmem:[#allocation4 + $0xc4] sm:$0xf]
    %v5175 = vld [vmem:[#allocation4 + $0xc8] sm:$0xf]
    %v5176 = vld [vmem:[#allocation4 + $0xcc] sm:$0xf]
    %v5177 = vld [vmem:[#allocation4 + $0xd0] sm:$0xf]
    %v5178 = vld [vmem:[#allocation4 + $0xd4] sm:$0xf]
    %v5179 = vld [vmem:[#allocation4 + $0xd8] sm:$0xf]
    %v5180 = vld [vmem:[#allocation4 + $0xdc] sm:$0xf]
    %v5181 = vld [vmem:[#allocation4 + $0xe0] sm:$0xf]
    %v5182 = vld [vmem:[#allocation4 + $0xe4] sm:$0xf]
    %v5183 = vld [vmem:[#allocation4 + $0xe8] sm:$0xf]
    %v5184 = vld [vmem:[#allocation4 + $0xec] sm:$0xf]
    %v5185 = vld [vmem:[#allocation4 + $0xf0] sm:$0xf]
    %v5186 = vld [vmem:[#allocation4 + $0xf4] sm:$0xf]
    %v5187 = vld [vmem:[#allocation4 + $0xf8] sm:$0xf]
    %v5188 = vld [vmem:[#allocation4 + $0xfc] sm:$0xf]
    %v5189 = vld [vmem:[%s12] sm:$0x1]
    %v5191 = vlaneseq
    %v5192 = vshrl.u32 %v5191, 7
    %v5193 = vsub.s32 0, %v5192
    %v5194 = vrot.slane %v5189, %v5193
    %v5260 = vunpack.c.l.b16 %v5125
    %v5261 = vunpack.c.l.b16 %v5126
    %v5262 = vunpack.c.l.b16 %v5127
    %v5263 = vunpack.c.l.b16 %v5128
    %v5264 = vunpack.c.l.b16 %v5129
    %v5265 = vunpack.c.l.b16 %v5130
    %v5266 = vunpack.c.l.b16 %v5131
    %v5267 = vunpack.c.l.b16 %v5132
    %v5268 = vunpack.c.l.b16 %v5133
    %v5269 = vunpack.c.l.b16 %v5134
    %v5270 = vunpack.c.l.b16 %v5135
    %v5271 = vunpack.c.l.b16 %v5136
    %v5272 = vunpack.c.l.b16 %v5137
    %v5273 = vunpack.c.l.b16 %v5138
    %v5274 = vunpack.c.l.b16 %v5139
    %v5275 = vunpack.c.l.b16 %v5140
    %v5276 = vunpack.c.l.b16 %v5141
    %v5277 = vunpack.c.l.b16 %v5142
    %v5278 = vunpack.c.l.b16 %v5143
    %v5279 = vunpack.c.l.b16 %v5144
    %v5280 = vunpack.c.l.b16 %v5145
    %v5281 = vunpack.c.l.b16 %v5146
    %v5282 = vunpack.c.l.b16 %v5147
    %v5283 = vunpack.c.l.b16 %v5148
    %v5284 = vunpack.c.l.b16 %v5149
    %v5285 = vunpack.c.l.b16 %v5150
    %v5286 = vunpack.c.l.b16 %v5151
    %v5287 = vunpack.c.l.b16 %v5152
    %v5288 = vunpack.c.l.b16 %v5153
    %v5289 = vunpack.c.l.b16 %v5154
    %v5290 = vunpack.c.l.b16 %v5155
    %v5291 = vunpack.c.l.b16 %v5156
    %v5292 = vunpack.c.l.b16 %v5157
    %v5293 = vunpack.c.l.b16 %v5158
    %v5294 = vunpack.c.l.b16 %v5159
    %v5295 = vunpack.c.l.b16 %v5160
    %v5296 = vunpack.c.l.b16 %v5161
    %v5297 = vunpack.c.l.b16 %v5162
    %v5298 = vunpack.c.l.b16 %v5163
    %v5299 = vunpack.c.l.b16 %v5164
    %v5300 = vunpack.c.l.b16 %v5165
    %v5301 = vunpack.c.l.b16 %v5166
    %v5302 = vunpack.c.l.b16 %v5167
    %v5303 = vunpack.c.l.b16 %v5168
    %v5304 = vunpack.c.l.b16 %v5169
    %v5305 = vunpack.c.l.b16 %v5170
    %v5306 = vunpack.c.l.b16 %v5171
    %v5307 = vunpack.c.l.b16 %v5172
    %v5308 = vunpack.c.l.b16 %v5173
    %v5309 = vunpack.c.l.b16 %v5174
    %v5310 = vunpack.c.l.b16 %v5175
    %v5311 = vunpack.c.l.b16 %v5176
    %v5312 = vunpack.c.l.b16 %v5177
    %v5313 = vunpack.c.l.b16 %v5178
    %v5314 = vunpack.c.l.b16 %v5179
    %v5315 = vunpack.c.l.b16 %v5180
    %v5316 = vunpack.c.l.b16 %v5181
    %v5317 = vunpack.c.l.b16 %v5182
    %v5318 = vunpack.c.l.b16 %v5183
    %v5319 = vunpack.c.l.b16 %v5184
    %v5320 = vunpack.c.l.b16 %v5185
    %v5321 = vunpack.c.l.b16 %v5186
    %v5322 = vunpack.c.l.b16 %v5187
    %v5323 = vunpack.c.l.b16 %v5188
    %v5324 = vpack.c.b16 %v5261, %v5260
    %v5325 = vpack.c.b16 %v5263, %v5262
    %v5326 = vpack.c.b16 %v5265, %v5264
    %v5327 = vpack.c.b16 %v5267, %v5266
    %v5328 = vpack.c.b16 %v5269, %v5268
    %v5329 = vpack.c.b16 %v5271, %v5270
    %v5330 = vpack.c.b16 %v5273, %v5272
    %v5331 = vpack.c.b16 %v5275, %v5274
    %v5332 = vpack.c.b16 %v5277, %v5276
    %v5333 = vpack.c.b16 %v5279, %v5278
    %v5334 = vpack.c.b16 %v5281, %v5280
    %v5335 = vpack.c.b16 %v5283, %v5282
    %v5336 = vpack.c.b16 %v5285, %v5284
    %v5337 = vpack.c.b16 %v5287, %v5286
    %v5338 = vpack.c.b16 %v5289, %v5288
    %v5339 = vpack.c.b16 %v5291, %v5290
    %v5340 = vpack.c.b16 %v5293, %v5292
    %v5341 = vpack.c.b16 %v5295, %v5294
    %v5342 = vpack.c.b16 %v5297, %v5296
    %v5343 = vpack.c.b16 %v5299, %v5298
    %v5344 = vpack.c.b16 %v5301, %v5300
    %v5345 = vpack.c.b16 %v5303, %v5302
    %v5346 = vpack.c.b16 %v5305, %v5304
    %v5347 = vpack.c.b16 %v5307, %v5306
    %v5348 = vpack.c.b16 %v5309, %v5308
    %v5349 = vpack.c.b16 %v5311, %v5310
    %v5350 = vpack.c.b16 %v5313, %v5312
    %v5351 = vpack.c.b16 %v5315, %v5314
    %v5352 = vpack.c.b16 %v5317, %v5316
    %v5353 = vpack.c.b16 %v5319, %v5318
    %v5354 = vpack.c.b16 %v5321, %v5320
    %v5355 = vpack.c.b16 %v5323, %v5322
    %5388 = vmatprep.subr.bf16.mxu0 0
    %5389 = vmatpush1.bf16.msra.mxu0 %v5331
    %5390 = vmatprep.subr.bf16.mxu0 0
    %5391 = vmatpush1.bf16.msra.mxu0 %v5330
    %5392 = vmatprep.subr.bf16.mxu0 0
    %5393 = vmatpush1.bf16.msra.mxu0 %v5329
    %5394 = vmatprep.subr.bf16.mxu0 0
    %5395 = vmatpush1.bf16.msra.mxu0 %v5328
    %5396 = vmatprep.subr.bf16.mxu0 0
    %5397 = vmatpush1.bf16.msra.mxu0 %v5327
    %5398 = vmatprep.subr.bf16.mxu0 0
    %5399 = vmatpush1.bf16.msra.mxu0 %v5326
    %5400 = vmatprep.subr.bf16.mxu0 0
    %5401 = vmatpush1.bf16.msra.mxu0 %v5325
    %5402 = vmatprep.subr.bf16.mxu0 0
    %5403 = vmatpush1.bf16.msra.mxu0 %v5324
    %5404 = vmatprep.subr.bf16.mxu0 0
    %5405 = vmatpush2.bf16.msra.mxu0 %v5339
    %5406 = vmatprep.subr.bf16.mxu0 0
    %5407 = vmatpush2.bf16.msra.mxu0 %v5338
    %5408 = vmatprep.subr.bf16.mxu0 0
    %5409 = vmatpush2.bf16.msra.mxu0 %v5337
    %5410 = vmatprep.subr.bf16.mxu0 0
    %5411 = vmatpush2.bf16.msra.mxu0 %v5336
    %5412 = vmatprep.subr.bf16.mxu0 0
    %5413 = vmatpush2.bf16.msra.mxu0 %v5335
    %5414 = vmatprep.subr.bf16.mxu0 0
    %5415 = vmatpush2.bf16.msra.mxu0 %v5334
    %5416 = vmatprep.subr.bf16.mxu0 0
    %5417 = vmatpush2.bf16.msra.mxu0 %v5333
    %5418 = vmatprep.subr.bf16.mxu0 0
    %5419 = vmatpush2.bf16.msra.mxu0 %v5332
    %5420 = vmatprep.mubr.bf16.mxu0 %v5062
    %5421 = vmatmul.mubr.bf16.gmra.mxu0 %v5061
    %v5422 = vpop.f32.mrf.mxu0
    %v5423 = vadd.f32 %v5194, %v5422
    %v5424 = vpop.f32.mrf.mxu0
    %v5425 = vpop.f32.mrf.mxu0
    %v5426 = vadd.f32 %v5194, %v5425
    %v5427 = vpop.f32.mrf.mxu0
    %5428 = vmatprep.mubr.bf16.mxu0 %v5066
    %5429 = vmatmul.mubr.bf16.gmra.mxu0 %v5065
    %v5430 = vpop.f32.mrf.mxu0
    %v5431 = vadd.f32 %v5194, %v5430
    %v5432 = vpop.f32.mrf.mxu0
    %v5433 = vpop.f32.mrf.mxu0
    %v5434 = vadd.f32 %v5194, %v5433
    %v5435 = vpop.f32.mrf.mxu0
    %5436 = vmatprep.mubr.bf16.mxu0 %v5070
    %5437 = vmatmul.mubr.bf16.gmra.mxu0 %v5069
    %v5438 = vpop.f32.mrf.mxu0
    %v5439 = vadd.f32 %v5194, %v5438
    %v5440 = vpop.f32.mrf.mxu0
    %v5441 = vpop.f32.mrf.mxu0
    %v5442 = vadd.f32 %v5194, %v5441
    %v5443 = vpop.f32.mrf.mxu0
    %5444 = vmatprep.mubr.bf16.mxu0 %v5074
    %5445 = vmatmul.mubr.bf16.gmra.mxu0 %v5073
    %v5446 = vpop.f32.mrf.mxu0
    %v5447 = vadd.f32 %v5194, %v5446
    %v5448 = vpop.f32.mrf.mxu0
    %v5449 = vpop.f32.mrf.mxu0
    %v5450 = vadd.f32 %v5194, %v5449
    %v5451 = vpop.f32.mrf.mxu0
    %5452 = vmatprep.mubr.bf16.mxu0 %v5078
    %5453 = vmatmul.mubr.bf16.gmra.mxu0 %v5077
    %v5454 = vpop.f32.mrf.mxu0
    %v5455 = vadd.f32 %v5194, %v5454
    %v5456 = vpop.f32.mrf.mxu0
    %v5457 = vpop.f32.mrf.mxu0
    %v5458 = vadd.f32 %v5194, %v5457
    %v5459 = vpop.f32.mrf.mxu0
    %5460 = vmatprep.mubr.bf16.mxu0 %v5082
    %5461 = vmatmul.mubr.bf16.gmra.mxu0 %v5081
    %v5462 = vpop.f32.mrf.mxu0
    %v5463 = vadd.f32 %v5194, %v5462
    %v5464 = vpop.f32.mrf.mxu0
    %v5465 = vpop.f32.mrf.mxu0
    %v5466 = vadd.f32 %v5194, %v5465
    %v5467 = vpop.f32.mrf.mxu0
    %5468 = vmatprep.mubr.bf16.mxu0 %v5086
    %5469 = vmatmul.mubr.bf16.gmra.mxu0 %v5085
    %v5470 = vpop.f32.mrf.mxu0
    %v5471 = vadd.f32 %v5194, %v5470
    %v5472 = vpop.f32.mrf.mxu0
    %v5473 = vpop.f32.mrf.mxu0
    %v5474 = vadd.f32 %v5194, %v5473
    %v5475 = vpop.f32.mrf.mxu0
    %5476 = vmatprep.mubr.bf16.mxu0 %v5090
    %5477 = vmatmul.mubr.bf16.gmra.mxu0 %v5089
    %v5478 = vpop.f32.mrf.mxu0
    %v5479 = vadd.f32 %v5194, %v5478
    %v5480 = vpop.f32.mrf.mxu0
    %v5481 = vpop.f32.mrf.mxu0
    %v5482 = vadd.f32 %v5194, %v5481
    %v5483 = vpop.f32.mrf.mxu0
    %5484 = vmatprep.mubr.bf16.mxu0 %v5094
    %5485 = vmatmul.mubr.bf16.gmra.mxu0 %v5093
    %v5486 = vpop.f32.mrf.mxu0
    %v5487 = vadd.f32 %v5194, %v5486
    %v5488 = vpop.f32.mrf.mxu0
    %v5489 = vpop.f32.mrf.mxu0
    %v5490 = vadd.f32 %v5194, %v5489
    %v5491 = vpop.f32.mrf.mxu0
    %5492 = vmatprep.mubr.bf16.mxu0 %v5098
    %5493 = vmatmul.mubr.bf16.gmra.mxu0 %v5097
    %v5494 = vpop.f32.mrf.mxu0
    %v5495 = vadd.f32 %v5194, %v5494
    %v5496 = vpop.f32.mrf.mxu0
    %v5497 = vpop.f32.mrf.mxu0
    %v5498 = vadd.f32 %v5194, %v5497
    %v5499 = vpop.f32.mrf.mxu0
    %5500 = vmatprep.mubr.bf16.mxu0 %v5102
    %5501 = vmatmul.mubr.bf16.gmra.mxu0 %v5101
    %v5502 = vpop.f32.mrf.mxu0
    %v5503 = vadd.f32 %v5194, %v5502
    %v5504 = vpop.f32.mrf.mxu0
    %v5505 = vpop.f32.mrf.mxu0
    %v5506 = vadd.f32 %v5194, %v5505
    %v5507 = vpop.f32.mrf.mxu0
    %5508 = vmatprep.mubr.bf16.mxu0 %v5106
    %5509 = vmatmul.mubr.bf16.gmra.mxu0 %v5105
    %v5510 = vpop.f32.mrf.mxu0
    %v5511 = vadd.f32 %v5194, %v5510
    %v5512 = vpop.f32.mrf.mxu0
    %v5513 = vpop.f32.mrf.mxu0
    %v5514 = vadd.f32 %v5194, %v5513
    %v5515 = vpop.f32.mrf.mxu0
    %5516 = vmatprep.mubr.bf16.mxu0 %v5110
    %5517 = vmatmul.mubr.bf16.gmra.mxu0 %v5109
    %v5518 = vpop.f32.mrf.mxu0
    %v5519 = vadd.f32 %v5194, %v5518
    %v5520 = vpop.f32.mrf.mxu0
    %v5521 = vpop.f32.mrf.mxu0
    %v5522 = vadd.f32 %v5194, %v5521
    %v5523 = vpop.f32.mrf.mxu0
    %5524 = vmatprep.mubr.bf16.mxu0 %v5114
    %5525 = vmatmul.mubr.bf16.gmra.mxu0 %v5113
    %v5526 = vpop.f32.mrf.mxu0
    %v5527 = vadd.f32 %v5194, %v5526
    %v5528 = vpop.f32.mrf.mxu0
    %v5529 = vpop.f32.mrf.mxu0
    %v5530 = vadd.f32 %v5194, %v5529
    %v5531 = vpop.f32.mrf.mxu0
    %5532 = vmatprep.mubr.bf16.mxu0 %v5118
    %5533 = vmatmul.mubr.bf16.gmra.mxu0 %v5117
    %v5534 = vpop.f32.mrf.mxu0
    %v5535 = vadd.f32 %v5194, %v5534
    %v5536 = vpop.f32.mrf.mxu0
    %v5537 = vpop.f32.mrf.mxu0
    %v5538 = vadd.f32 %v5194, %v5537
    %v5539 = vpop.f32.mrf.mxu0
    %5540 = vmatprep.mubr.bf16.mxu0 %v5122
    %5541 = vmatmul.mubr.bf16.gmra.mxu0 %v5121
    %v5542 = vpop.f32.mrf.mxu0
    %v5543 = vadd.f32 %v5194, %v5542
    %v5544 = vpop.f32.mrf.mxu0
    %v5545 = vpop.f32.mrf.mxu0
    %v5546 = vadd.f32 %v5194, %v5545
    %v5547 = vpop.f32.mrf.mxu0
    %5548 = vdwg.mxu0
    %5549 = vmatprep.subr.bf16.mxu0 0
    %5550 = vmatpush1.bf16.msra.mxu0 %v5347
    %5551 = vmatprep.subr.bf16.mxu0 0
    %5552 = vmatpush1.bf16.msra.mxu0 %v5346
    %5553 = vmatprep.subr.bf16.mxu0 0
    %5554 = vmatpush1.bf16.msra.mxu0 %v5345
    %5555 = vmatprep.subr.bf16.mxu0 0
    %5556 = vmatpush1.bf16.msra.mxu0 %v5344
    %5557 = vmatprep.subr.bf16.mxu0 0
    %5558 = vmatpush1.bf16.msra.mxu0 %v5343
    %5559 = vmatprep.subr.bf16.mxu0 0
    %5560 = vmatpush1.bf16.msra.mxu0 %v5342
    %5561 = vmatprep.subr.bf16.mxu0 0
    %5562 = vmatpush1.bf16.msra.mxu0 %v5341
    %5563 = vmatprep.subr.bf16.mxu0 0
    %5564 = vmatpush1.bf16.msra.mxu0 %v5340
    %5565 = vmatprep.subr.bf16.mxu0 0
    %5566 = vmatpush2.bf16.msra.mxu0 %v5355
    %5567 = vmatprep.subr.bf16.mxu0 0
    %5568 = vmatpush2.bf16.msra.mxu0 %v5354
    %5569 = vmatprep.subr.bf16.mxu0 0
    %5570 = vmatpush2.bf16.msra.mxu0 %v5353
    %5571 = vmatprep.subr.bf16.mxu0 0
    %5572 = vmatpush2.bf16.msra.mxu0 %v5352
    %5573 = vmatprep.subr.bf16.mxu0 0
    %5574 = vmatpush2.bf16.msra.mxu0 %v5351
    %5575 = vmatprep.subr.bf16.mxu0 0
    %5576 = vmatpush2.bf16.msra.mxu0 %v5350
    %5577 = vmatprep.subr.bf16.mxu0 0
    %5578 = vmatpush2.bf16.msra.mxu0 %v5349
    %5579 = vmatprep.subr.bf16.mxu0 0
    %5580 = vmatpush2.bf16.msra.mxu0 %v5348
    %5581 = vmatprep.mubr.bf16.mxu0 %v5064
    %5582 = vmatmul.mubr.bf16.gmra.mxu0 %v5063
    %v5583 = vpop.f32.mrf.mxu0
    %v5584 = vadd.f32 %v5423, %v5583
    %v5585 = vpop.f32.mrf.mxu0
    %v5586 = vpop.f32.mrf.mxu0
    %v5587 = vadd.f32 %v5426, %v5586
    %v5588 = vpop.f32.mrf.mxu0
    %5589 = vmatprep.mubr.bf16.mxu0 %v5068
    %5590 = vmatmul.mubr.bf16.gmra.mxu0 %v5067
    %v5591 = vpop.f32.mrf.mxu0
    %v5592 = vadd.f32 %v5431, %v5591
    %v5593 = vpop.f32.mrf.mxu0
    %v5594 = vpop.f32.mrf.mxu0
    %v5595 = vadd.f32 %v5434, %v5594
    %v5596 = vpop.f32.mrf.mxu0
    %5597 = vmatprep.mubr.bf16.mxu0 %v5072
    %5598 = vmatmul.mubr.bf16.gmra.mxu0 %v5071
    %v5599 = vpop.f32.mrf.mxu0
    %v5600 = vadd.f32 %v5439, %v5599
    %v5601 = vpop.f32.mrf.mxu0
    %v5602 = vpop.f32.mrf.mxu0
    %v5603 = vadd.f32 %v5442, %v5602
    %v5604 = vpop.f32.mrf.mxu0
    %5605 = vmatprep.mubr.bf16.mxu0 %v5076
    %5606 = vmatmul.mubr.bf16.gmra.mxu0 %v5075
    %v5607 = vpop.f32.mrf.mxu0
    %v5608 = vadd.f32 %v5447, %v5607
    %v5609 = vpop.f32.mrf.mxu0
    %v5610 = vpop.f32.mrf.mxu0
    %v5611 = vadd.f32 %v5450, %v5610
    %v5612 = vpop.f32.mrf.mxu0
    %5613 = vmatprep.mubr.bf16.mxu0 %v5080
    %5614 = vmatmul.mubr.bf16.gmra.mxu0 %v5079
    %v5615 = vpop.f32.mrf.mxu0
    %v5616 = vadd.f32 %v5455, %v5615
    %v5617 = vpop.f32.mrf.mxu0
    %v5618 = vpop.f32.mrf.mxu0
    %v5619 = vadd.f32 %v5458, %v5618
    %v5620 = vpop.f32.mrf.mxu0
    %5621 = vmatprep.mubr.bf16.mxu0 %v5084
    %5622 = vmatmul.mubr.bf16.gmra.mxu0 %v5083
    %v5623 = vpop.f32.mrf.mxu0
    %v5624 = vadd.f32 %v5463, %v5623
    %v5625 = vpop.f32.mrf.mxu0
    %v5626 = vpop.f32.mrf.mxu0
    %v5627 = vadd.f32 %v5466, %v5626
    %v5628 = vpop.f32.mrf.mxu0
    %5629 = vmatprep.mubr.bf16.mxu0 %v5088
    %5630 = vmatmul.mubr.bf16.gmra.mxu0 %v5087
    %v5631 = vpop.f32.mrf.mxu0
    %v5632 = vadd.f32 %v5471, %v5631
    %v5633 = vpop.f32.mrf.mxu0
    %v5634 = vpop.f32.mrf.mxu0
    %v5635 = vadd.f32 %v5474, %v5634
    %v5636 = vpop.f32.mrf.mxu0
    %5637 = vmatprep.mubr.bf16.mxu0 %v5092
    %5638 = vmatmul.mubr.bf16.gmra.mxu0 %v5091
    %v5639 = vpop.f32.mrf.mxu0
    %v5640 = vadd.f32 %v5479, %v5639
    %v5641 = vpop.f32.mrf.mxu0
    %v5642 = vpop.f32.mrf.mxu0
    %v5643 = vadd.f32 %v5482, %v5642
    %v5644 = vpop.f32.mrf.mxu0
    %5645 = vmatprep.mubr.bf16.mxu0 %v5096
    %5646 = vmatmul.mubr.bf16.gmra.mxu0 %v5095
    %v5647 = vpop.f32.mrf.mxu0
    %v5648 = vadd.f32 %v5487, %v5647
    %v5649 = vpop.f32.mrf.mxu0
    %v5650 = vpop.f32.mrf.mxu0
    %v5651 = vadd.f32 %v5490, %v5650
    %v5652 = vpop.f32.mrf.mxu0
    %5653 = vmatprep.mubr.bf16.mxu0 %v5100
    %5654 = vmatmul.mubr.bf16.gmra.mxu0 %v5099
    %v5655 = vpop.f32.mrf.mxu0
    %v5656 = vadd.f32 %v5495, %v5655
    %v5657 = vpop.f32.mrf.mxu0
    %v5658 = vpop.f32.mrf.mxu0
    %v5659 = vadd.f32 %v5498, %v5658
    %v5660 = vpop.f32.mrf.mxu0
    %5661 = vmatprep.mubr.bf16.mxu0 %v5104
    %5662 = vmatmul.mubr.bf16.gmra.mxu0 %v5103
    %v5663 = vpop.f32.mrf.mxu0
    %v5664 = vadd.f32 %v5503, %v5663
    %v5665 = vpop.f32.mrf.mxu0
    %v5666 = vpop.f32.mrf.mxu0
    %v5667 = vadd.f32 %v5506, %v5666
    %v5668 = vpop.f32.mrf.mxu0
    %5669 = vmatprep.mubr.bf16.mxu0 %v5108
    %5670 = vmatmul.mubr.bf16.gmra.mxu0 %v5107
    %v5671 = vpop.f32.mrf.mxu0
    %v5672 = vadd.f32 %v5511, %v5671
    %v5673 = vpop.f32.mrf.mxu0
    %v5674 = vpop.f32.mrf.mxu0
    %v5675 = vadd.f32 %v5514, %v5674
    %v5676 = vpop.f32.mrf.mxu0
    %5677 = vmatprep.mubr.bf16.mxu0 %v5112
    %5678 = vmatmul.mubr.bf16.gmra.mxu0 %v5111
    %v5679 = vpop.f32.mrf.mxu0
    %v5680 = vadd.f32 %v5519, %v5679
    %v5681 = vpop.f32.mrf.mxu0
    %v5682 = vpop.f32.mrf.mxu0
    %v5683 = vadd.f32 %v5522, %v5682
    %v5684 = vpop.f32.mrf.mxu0
    %5685 = vmatprep.mubr.bf16.mxu0 %v5116
    %5686 = vmatmul.mubr.bf16.gmra.mxu0 %v5115
    %v5687 = vpop.f32.mrf.mxu0
    %v5688 = vadd.f32 %v5527, %v5687
    %v5689 = vpop.f32.mrf.mxu0
    %v5690 = vpop.f32.mrf.mxu0
    %v5691 = vadd.f32 %v5530, %v5690
    %v5692 = vpop.f32.mrf.mxu0
    %5693 = vmatprep.mubr.bf16.mxu0 %v5120
    %5694 = vmatmul.mubr.bf16.gmra.mxu0 %v5119
    %v5695 = vpop.f32.mrf.mxu0
    %v5696 = vadd.f32 %v5535, %v5695
    %v5697 = vpop.f32.mrf.mxu0
    %v5698 = vpop.f32.mrf.mxu0
    %v5699 = vadd.f32 %v5538, %v5698
    %v5700 = vpop.f32.mrf.mxu0
    %5701 = vmatprep.mubr.bf16.mxu0 %v5124
    %5702 = vmatmul.mubr.bf16.gmra.mxu0 %v5123
    %v5703 = vpop.f32.mrf.mxu0
    %v5704 = vadd.f32 %v5543, %v5703
    %v5705 = vpop.f32.mrf.mxu0
    %v5706 = vpop.f32.mrf.mxu0
    %v5707 = vadd.f32 %v5546, %v5706
    %v5708 = vpop.f32.mrf.mxu0
    %5709 = vdwg.mxu0
    %5710 = vst [vmem:[#allocation14] sm:$0xff] %v5584
    %5711 = vst [vmem:[#allocation14 + $0x8] sm:$0xff] %v5587
    %5712 = vst [vmem:[#allocation14 + $0x10] sm:$0xff] %v5592
    %5713 = vst [vmem:[#allocation14 + $0x18] sm:$0xff] %v5595
    %5714 = vst [vmem:[#allocation14 + $0x20] sm:$0xff] %v5600
    %5715 = vst [vmem:[#allocation14 + $0x28] sm:$0xff] %v5603
    %5716 = vst [vmem:[#allocation14 + $0x30] sm:$0xff] %v5608
    %5717 = vst [vmem:[#allocation14 + $0x38] sm:$0xff] %v5611
    %5718 = vst [vmem:[#allocation14 + $0x40] sm:$0xff] %v5616
    %5719 = vst [vmem:[#allocation14 + $0x48] sm:$0xff] %v5619
    %5720 = vst [vmem:[#allocation14 + $0x50] sm:$0xff] %v5624
    %5721 = vst [vmem:[#allocation14 + $0x58] sm:$0xff] %v5627
    %5722 = vst [vmem:[#allocation14 + $0x60] sm:$0xff] %v5632
    %5723 = vst [vmem:[#allocation14 + $0x68] sm:$0xff] %v5635
    %5724 = vst [vmem:[#allocation14 + $0x70] sm:$0xff] %v5640
    %5725 = vst [vmem:[#allocation14 + $0x78] sm:$0xff] %v5643
    %5726 = vst [vmem:[#allocation14 + $0x80] sm:$0xff] %v5648
    %5727 = vst [vmem:[#allocation14 + $0x88] sm:$0xff] %v5651
    %5728 = vst [vmem:[#allocation14 + $0x90] sm:$0xff] %v5656
    %5729 = vst [vmem:[#allocation14 + $0x98] sm:$0xff] %v5659
    %5730 = vst [vmem:[#allocation14 + $0xa0] sm:$0xff] %v5664
    %5731 = vst [vmem:[#allocation14 + $0xa8] sm:$0xff] %v5667
    %5732 = vst [vmem:[#allocation14 + $0xb0] sm:$0xff] %v5672
    %5733 = vst [vmem:[#allocation14 + $0xb8] sm:$0xff] %v5675
    %5734 = vst [vmem:[#allocation14 + $0xc0] sm:$0xff] %v5680
    %5735 = vst [vmem:[#allocation14 + $0xc8] sm:$0xff] %v5683
    %5736 = vst [vmem:[#allocation14 + $0xd0] sm:$0xff] %v5688
    %5737 = vst [vmem:[#allocation14 + $0xd8] sm:$0xff] %v5691
    %5738 = vst [vmem:[#allocation14 + $0xe0] sm:$0xff] %v5696
    %5739 = vst [vmem:[#allocation14 + $0xe8] sm:$0xff] %v5699
    %5740 = vst [vmem:[#allocation14 + $0xf0] sm:$0xff] %v5704
    %5741 = vst [vmem:[#allocation14 + $0xf8] sm:$0xff] %v5707
    %5742 = vst [vmem:[#allocation15] sm:$0xff] %v3336
    %5743 = vst [vmem:[#allocation15 + $0x8] sm:$0xff] %v3337
    %5744 = vst [vmem:[#allocation15 + $0x10] sm:$0xff] %v3338
    %5745 = vst [vmem:[#allocation15 + $0x18] sm:$0xff] %v3339
    %5746 = vst [vmem:[#allocation15 + $0x20] sm:$0xff] %v3340
    %5747 = vst [vmem:[#allocation15 + $0x28] sm:$0xff] %v3341
    %5748 = vst [vmem:[#allocation15 + $0x30] sm:$0xff] %v3342
    %5749 = vst [vmem:[#allocation15 + $0x38] sm:$0xff] %v3343
    %5750 = vst [vmem:[#allocation15 + $0x40] sm:$0xff] %v3344
    %5751 = vst [vmem:[#allocation15 + $0x48] sm:$0xff] %v3345
    %5752 = vst [vmem:[#allocation15 + $0x50] sm:$0xff] %v3346
    %5753 = vst [vmem:[#allocation15 + $0x58] sm:$0xff] %v3347
    %5754 = vst [vmem:[#allocation15 + $0x60] sm:$0xff] %v3348
    %5755 = vst [vmem:[#allocation15 + $0x68] sm:$0xff] %v3349
    %5756 = vst [vmem:[#allocation15 + $0x70] sm:$0xff] %v3350
    %5757 = vst [vmem:[#allocation15 + $0x78] sm:$0xff] %v3351
    %5758 = vst [vmem:[#allocation15 + $0x80] sm:$0xff] %v3352
    %5759 = vst [vmem:[#allocation15 + $0x88] sm:$0xff] %v3353
    %5760 = vst [vmem:[#allocation15 + $0x90] sm:$0xff] %v3354
    %5761 = vst [vmem:[#allocation15 + $0x98] sm:$0xff] %v3355
    %5762 = vst [vmem:[#allocation15 + $0xa0] sm:$0xff] %v3356
    %5763 = vst [vmem:[#allocation15 + $0xa8] sm:$0xff] %v3357
    %5764 = vst [vmem:[#allocation15 + $0xb0] sm:$0xff] %v3358
    %5765 = vst [vmem:[#allocation15 + $0xb8] sm:$0xff] %v3359
    %5766 = vst [vmem:[#allocation15 + $0xc0] sm:$0xff] %v3360
    %5767 = vst [vmem:[#allocation15 + $0xc8] sm:$0xff] %v3361
    %5768 = vst [vmem:[#allocation15 + $0xd0] sm:$0xff] %v3362
    %5769 = vst [vmem:[#allocation15 + $0xd8] sm:$0xff] %v3363
    %5770 = vst [vmem:[#allocation15 + $0xe0] sm:$0xff] %v3364
    %5771 = vst [vmem:[#allocation15 + $0xe8] sm:$0xff] %v3365
    %5772 = vst [vmem:[#allocation15 + $0xf0] sm:$0xff] %v3366
    %5773 = vst [vmem:[#allocation15 + $0xf8] sm:$0xff] %v3367
    // Predicated region
    $region70: #{block_forward.1} parent=1 // pred_check
      _
    $region71: #{block_forward.1} parent=1 // pred_check_branch
      %5775 = sbr.rel (0) target = $region73
    $region72: #{block_forward.1} parent=1 // pred_region
      %s5777 = ssub.s32 4096, 4096
      %5778 = vsyncadd [#allocation8], %s5777
      %s5779 = sshll.u32 [#allocation14], 4
      %s5780 = int_to_ptr.vmem [resolvable:$true] %s5779
      %5785 = dma.vmem_to_hbm [thread:$0]  %s5780, 4096, %s13, [#allocation8], 128, 128, 8
    $region73: #{block_forward.1} parent=1 // pred_fallthru
      _
    // Predicated region
    $region74: #{block_forward.1} parent=1 // pred_check
      _
    $region75: #{block_forward.1} parent=1 // pred_check_branch
      %5787 = sbr.rel (0) target = $region77
    $region76: #{block_forward.1} parent=1 // pred_region
      %s5789 = ssub.s32 4096, 4096
      %5790 = vsyncadd [#allocation16], %s5789
      %s5791 = sshll.u32 [#allocation15], 4
      %s5792 = int_to_ptr.vmem [resolvable:$true] %s5791
      %5797 = dma.vmem_to_hbm [thread:$0]  %s5792, 4096, %s14, [#allocation16], 128, 128, 8
    $region77: #{block_forward.1} parent=1 // pred_fallthru
      _
    // Predicated region
    $region78: #{block_forward.1} parent=1 // pred_check
      _
    $region79: #{block_forward.1} parent=1 // pred_check_branch
      %5799 = sbr.rel (0) target = $region81
    $region80: #{block_forward.1} parent=1 // pred_region
      %5800 = dma.done [#allocation8], 4096
    $region81: #{block_forward.1} parent=1 // pred_fallthru
      _
    // Predicated region
    $region82: #{block_forward.1} parent=1 // pred_check
      _
    $region83: #{block_forward.1} parent=1 // pred_check_branch
      %5802 = sbr.rel (0) target = $region85
    $region84: #{block_forward.1} parent=1 // pred_region
      %5803 = dma.done [#allocation16], 4096
    $region85: #{block_forward.1} parent=1 // pred_fallthru
      _
    %5804 = vsyncpa [#allocation7], 1
    %5805 = vsyncpa [#allocation10], 1
    %5806 = vsyncpa [#allocation13], 1
    %5807 = vsyncpa [#allocation8], 1
    %5808 = vsyncpa [#allocation16], 1
  %5809 = vsyncmov [#allocation5]
  %s5810 = vpop.sfrf %5809
  %p5811 = scmp.eq.s32.totalorder %s5810, 0
  %p5812 = pneg %p5811
  %5814 = shalt.err (%p5812)
  %s5815 = scalar_lea.sflag [#allocation5], 1
  %5816 = vsyncmov %s5815
  %s5817 = vpop.sfrf %5816
  %p5818 = scmp.eq.s32.totalorder %s5817, 0
  %p5819 = pneg %p5818
  %5821 = shalt.err (%p5819)
  %s5822 = scalar_lea.sflag [#allocation5], 2
  %5823 = vsyncmov %s5822
  %s5824 = vpop.sfrf %5823
  %p5825 = scmp.eq.s32.totalorder %s5824, 0
  %p5826 = pneg %p5825
  %5828 = shalt.err (%p5826)

</llo_original>
